<compile_context>
chip_gen: v6e
topology: v6e:2x2x1
jax: 0.10.0
libtpu: 0.0.40
codegen_flags: <defaults>
</compile_context>

<pallas_src>
import math

import jax
import jax.numpy as jnp
from jax.experimental import pallas as pl
from jax.experimental.pallas import tpu as pltpu

EPS = 1e-15  # matches torch_geometric dense_mincut_pool

_LANE = 128
_SUBLANE = 8


def _round_up(v, m):
    return ((v + m - 1) // m) * m


def _mincut_pool_kernel(x_ref, adj_ref, w_ref, b_ref,
                        out_ref, oadj_ref, loss_ref,
                        s_full, sa_acc, out_acc, ss_acc, den_acc):
    # x_ref: (TB, TN, C) input dtype, adj_ref: (TB, TN, N) input dtype,
    # w_ref: (C, K) input dtype, b_ref: (1, 1, K) f32.
    TB, TN, C = x_ref.shape
    N = adj_ref.shape[-1]
    K = w_ref.shape[-1]
    n_tiles = N // TN                       # static Python int
    nt = pl.program_id(1)

    @pl.when(nt == 0)
    def _init():
        sa_acc[...] = jnp.zeros_like(sa_acc)
        out_acc[...] = jnp.zeros_like(out_acc)
        ss_acc[...] = jnp.zeros_like(ss_acc)
        den_acc[...] = jnp.zeros_like(den_acc)

    x_t = x_ref[...]                        # (TB, TN, C)
    a_t = adj_ref[...]                      # (TB, TN, N)

    # --- Linear + softmax: one 2-D MXU matmul, f32 accumulate, exact divide ---
    logits = jnp.dot(x_t.reshape(TB * TN, C), w_ref[...],
                     preferred_element_type=jnp.float32)
    logits = logits.reshape(TB, TN, K) + b_ref[...]
    m = jnp.max(logits, axis=-1, keepdims=True)
    e = jnp.exp(logits - m)
    s_t = e / jnp.sum(e, axis=-1, keepdims=True)         # (TB, TN, K) f32

    # Lane-dense S^T tile (K pads to 8 sublanes instead of 128 lanes).
    s_tT = jnp.swapaxes(s_t, 1, 2)                        # (TB, K, TN)
    s_full[nt] = s_tT

    # --- MXU contractions (operands in the inputs' native dtype, f32 acc). ---
    out_acc[...] += jnp.einsum('bkt,btc->bkc', s_tT.astype(x_t.dtype), x_t,
                               preferred_element_type=jnp.float32)   # (TB,K,C)
    sa_acc[...] += jnp.einsum('bkt,btn->bkn', s_tT.astype(a_t.dtype), a_t,
                              preferred_element_type=jnp.float32)    # (TB,K,N)
    ss_acc[...] += jnp.einsum('bkt,blt->bkl', s_tT, s_tT,
                              preferred_element_type=jnp.float32)    # (TB,K,K)

    # mincut denominator: trace(S^T D S) = sum_n (q^T A)_n with q_t = sum_k s^2.
    # q is cast to adj dtype so the MXU matvec stays single-dtype (exact for
    # f32 adj; with bf16 adj the error is within bf16 input noise); the
    # accumulation itself stays f32.
    q_row = jnp.sum(s_tT * s_tT, axis=1, keepdims=True)               # (TB,1,TN)
    dq = jnp.einsum('bot,btn->bon', q_row.astype(a_t.dtype), a_t,
                    preferred_element_type=jnp.float32)               # (TB,1,N)
    den_acc[...] += jnp.sum(dq, axis=-1, keepdims=True)               # (TB,1,1)

    @pl.when(nt == n_tiles - 1)
    def _finalize():
        # out_adj = (S^T A) S, accumulated over static lane-aligned tiles.
        out_adj = jnp.zeros((TB, K, K), jnp.float32)
        for t in range(n_tiles):
            sa_t = sa_acc[:, :, t * TN:(t + 1) * TN]                  # (TB,K,TN)
            out_adj = out_adj + jnp.einsum(
                'bkt,blt->bkl', sa_t, s_full[t],
                preferred_element_type=jnp.float32)

        row = jax.lax.broadcasted_iota(jnp.int32, (1, K, K), 1)
        col = jax.lax.broadcasted_iota(jnp.int32, (1, K, K), 2)
        diag = row == col

        # --- mincut loss (exact math; finalize is off the DMA critical path) ---
        num = jnp.sum(jnp.where(diag, out_adj, 0.0), axis=(1, 2), keepdims=True)
        mincut_b = -(num / den_acc[...])                              # (TB,1,1)

        # --- orthogonality loss ---
        ss = ss_acc[...]
        ss_norm = jnp.sqrt(jnp.sum(ss * ss, axis=(1, 2), keepdims=True))
        eye = jnp.where(diag, 1.0, 0.0).astype(jnp.float32)
        diff = ss / ss_norm - eye * (1.0 / math.sqrt(K))
        ortho_b = jnp.sqrt(jnp.sum(diff * diff, axis=(1, 2), keepdims=True))

        # pack both per-batch losses into one lane-packed (TB, 1, 2) output
        lane = jax.lax.broadcasted_iota(jnp.int32, (TB, 1, 2), 2)
        loss_ref[...] = jnp.where(lane == 0, mincut_b, ortho_b)

        # --- zero diagonal + symmetric degree normalization (row sums for
        #     BOTH factors, exactly like dense_mincut_pool). ---
        oadj_nd = jnp.where(diag, 0.0, out_adj)
        deg = jnp.sum(oadj_nd, axis=-1, keepdims=True)                # (TB,K,1)
        d_col = jnp.sqrt(deg) + EPS                                   # (TB,K,1)
        d_row = jnp.swapaxes(d_col, 1, 2)                             # (TB,1,K)

        out_ref[...] = out_acc[...].astype(out_ref.dtype)
        oadj_ref[...] = (oadj_nd / d_col / d_row).astype(oadj_ref.dtype)


def _vmem_estimate(TB, TN, N, C, K, x_item, adj_item):
    """Approx. VMEM footprint (bytes), counting (8,128) layout padding and the
    double-buffering Pallas applies to pipelined blocks."""
    Np = _round_up(N, _LANE)
    Cp = _round_up(C, _LANE)
    Kl = _round_up(K, _LANE)
    Ks = _round_up(K, _SUBLANE)
    TNs = _round_up(TN, _SUBLANE)
    TNl = _round_up(TN, _LANE)
    n_tiles = N // TN
    blocks = 0
    blocks += 2 * TB * TNs * Np * adj_item              # adj tile
    blocks += 2 * TB * TNs * Cp * x_item                # x tile
    blocks += 2 * _round_up(C, _SUBLANE) * Kl * x_item  # weight
    blocks += 2 * _SUBLANE * _LANE * 4                  # bias
    blocks += 2 * TB * Ks * Cp * x_item                 # out
    blocks += 2 * TB * Ks * Kl * x_item                 # out_adj
    blocks += 2 * TB * _SUBLANE * _LANE * 4             # losses
    scratch = 0
    scratch += n_tiles * TB * Ks * TNl * 4              # S^T tiles
    scratch += TB * Ks * Np * 4                         # S^T @ adj accumulator
    scratch += TB * Ks * Cp * 4                         # S^T @ x accumulator
    scratch += TB * Ks * Kl * 4                         # S^T @ S accumulator
    scratch += TB * _SUBLANE * _LANE * 4                # mincut denominator
    return blocks + scratch


def _choose_tiles(B, N, C, K, x_dtype, adj_dtype):
    """Pick (TB, TN, vmem_limit): dtype-aware adjacency tiling against a
    generation-aware VMEM budget, with grid[0] >= 2 when B >= 2 (v7x)."""
    x_item = jnp.dtype(x_dtype).itemsize
    adj_item = jnp.dtype(adj_dtype).itemsize

    try:
        vmem_cap = int(pltpu.get_tpu_info().vmem_capacity_bytes)
    except Exception:
        vmem_cap = 64 * 1024 * 1024      # conservative (v7x-sized) fallback
    budget = int(vmem_cap * 0.75)        # ~96 MiB on v5e/v6e, ~48 MiB on v7x
    # HBM-bound kernel: target a large adjacency block per grid step.
    adj_target = (12 if vmem_cap >= 96 * 1024 * 1024 else 5) * 1024 * 1024

    if N % _SUBLANE != 0:
        tn_cands = [N]                   # untileable node axis: whole rows
        tb_cands = [1]
    else:
        tn_cands = [d for d in range(_SUBLANE, N + 1, _SUBLANE) if N % d == 0]
        # Keep grid[0] >= 2 when B >= 2 so the "parallel" batch axis can be
        # sharded across v7x's two TensorCores (no-op on v5e/v6e).
        tb_max = B // 2 if B >= 2 else 1
        tb_cands = [d for d in range(1, tb_max + 1) if B % d == 0] or [1]

    feasible = []
    for TB in tb_cands:
        for TN in tn_cands:
            if _vmem_estimate(TB, TN, N, C, K, x_item, adj_item) <= budget:
                feasible.append((TB, TN, TB * TN * N * adj_item))
    if feasible:
        over = [c for c in feasible if c[2] >= adj_target]
        if over:      # smallest block that already hits the DMA target
            TB, TN, _ = min(over, key=lambda c: (c[2], c[0], -c[1]))
        else:         # otherwise the biggest block that fits the budget
            TB, TN, _ = max(feasible, key=lambda c: (c[2], c[1]))
    else:             # nothing fits the soft budget: smallest possible block
        TB, TN = 1, tn_cands[0]

    est = _vmem_estimate(TB, TN, N, C, K, x_item, adj_item)
    vmem_limit = min(int(vmem_cap * 0.95), max(budget, est + (8 << 20)))
    return TB, TN, vmem_limit


@jax.jit
def embedded_pool_forward(x, adj, weight, bias):
    """x: [B,N,C], adj: [B,N,N], weight: [K,C], bias: [K]."""
    B, N, C = x.shape
    K = weight.shape[0]
    TB, TN, vmem_limit = _choose_tiles(B, N, C, K, x.dtype, adj.dtype)
    n_tiles = N // TN

    w_t = weight.T.astype(x.dtype)                   # (C, K), MXU in input dtype
    b3 = bias.astype(jnp.float32).reshape(1, 1, K)   # (1, 1, K)
    out_dtype = x.dtype

    out, out_adj, losses = pl.pallas_call(
        _mincut_pool_kernel,
        out_shape=(
            jax.ShapeDtypeStruct((B, K, C), out_dtype),
            jax.ShapeDtypeStruct((B, K, K), out_dtype),
            jax.ShapeDtypeStruct((B, 1, 2), jnp.float32),
        ),
        grid_spec=pltpu.PrefetchScalarGridSpec(
            num_scalar_prefetch=0,
            grid=(B // TB, n_tiles),
            in_specs=[
                pl.BlockSpec((TB, TN, C), lambda b, n: (b, n, 0)),
                pl.BlockSpec((TB, TN, N), lambda b, n: (b, n, 0)),
                pl.BlockSpec((C, K), lambda b, n: (0, 0)),
                pl.BlockSpec((1, 1, K), lambda b, n: (0, 0, 0)),
            ],
            out_specs=[
                pl.BlockSpec((TB, K, C), lambda b, n: (b, 0, 0)),
                pl.BlockSpec((TB, K, K), lambda b, n: (b, 0, 0)),
                pl.BlockSpec((TB, 1, 2), lambda b, n: (b, 0, 0)),
            ],
            scratch_shapes=[
                pltpu.VMEM((n_tiles, TB, K, TN), jnp.float32),  # S^T tiles
                pltpu.VMEM((TB, K, N), jnp.float32),            # S^T @ adj
                pltpu.VMEM((TB, K, C), jnp.float32),            # S^T @ x
                pltpu.VMEM((TB, K, K), jnp.float32),            # S^T @ S
                pltpu.VMEM((TB, 1, 1), jnp.float32),            # mincut denom
            ],
        ),
        compiler_params=pltpu.CompilerParams(
            dimension_semantics=("parallel", "arbitrary"),
            vmem_limit_bytes=vmem_limit,
        ),
    )(x, adj, w_t, b3)

    mincut_loss = jnp.mean(losses[:, 0, 0])
    ortho_loss = jnp.mean(losses[:, 0, 1])
    # Matches torch module: (x_pooled, out_adj, None, loss_0, loss_1, 0.0)
    return out, out_adj, None, mincut_loss, ortho_loss, jnp.float32(0.0)


def _reference_forward(x, adj, weight, bias):
    """Pure-JAX reference (mirrors torch_geometric dense_mincut_pool)."""
    logits = jnp.einsum('bnc,kc->bnk', x, weight) + bias
    s = jax.nn.softmax(logits, axis=-1)
    out = jnp.einsum('bnk,bnc->bkc', s, x)
    out_adj = jnp.einsum('bnk,bnm,bml->bkl', s, adj, s)
    mincut_num = jnp.trace(out_adj, axis1=-2, axis2=-1)
    d_flat = adj.sum(-1)
    mincut_den = jnp.einsum('bn,bnk,bnk->b', d_flat, s, s)
    mincut_loss = jnp.mean(-(mincut_num / mincut_den))
    ss = jnp.einsum('bnk,bnl->bkl', s, s)
    k = s.shape[-1]
    eye = jnp.eye(k, dtype=jnp.float32)
    ss_norm = jnp.sqrt(jnp.sum(ss * ss, axis=(-1, -2), keepdims=True))
    ortho = jnp.sqrt(jnp.sum((ss / ss_norm - eye / jnp.sqrt(k)) ** 2,
                             axis=(-1, -2)))
    ortho_loss = jnp.mean(ortho)
    out_adj = out_adj * (1.0 - eye)
    d = jnp.sqrt(out_adj.sum(-1))[:, None, :] + EPS
    out_adj = out_adj / d / jnp.transpose(d, (0, 2, 1))
    return out, out_adj, mincut_loss, ortho_loss


if __name__ == "__main__":
    # Full-precision f32 matmuls everywhere (kernel math and the pure-JAX
    # reference) so the correctness check is numerically tight; if the config
    # knob is unavailable, fall back to a tolerance that covers default
    # (bf16-pass) matmul precision.
    try:
        jax.config.update("jax_default_matmul_precision", "highest")
        tol = 2e-3
    except Exception:
        tol = 2e-2

    # Small shapes consistent with the module's forward.
    B, N = 2, 16               # batch of dense graphs, N nodes each
    in_channels = 8            # node feature dim
    num_super_nodes = 4        # pooling clusters (K)

    key = jax.random.PRNGKey(0)
    kx, ka, kw, kb = jax.random.split(key, 4)

    x = jax.random.normal(kx, (B, N, in_channels), dtype=jnp.float32)
    a = jax.random.uniform(ka, (B, N, N), dtype=jnp.float32)
    adj = 0.5 * (a + jnp.transpose(a, (0, 2, 1)))      # symmetric dense adjacency

    # Deterministic Linear(in_channels -> num_super_nodes) params.
    bound = 1.0 / math.sqrt(in_channels)
    weight = jax.random.uniform(kw, (num_super_nodes, in_channels),
                                minval=-bound, maxval=bound, dtype=jnp.float32)
    bias = jax.random.uniform(kb, (num_super_nodes,),
                              minval=-bound, maxval=bound, dtype=jnp.float32)

    out, out_adj, _none, loss0, loss1, zero = embedded_pool_forward(
        x, adj, weight, bias)
    jax.block_until_ready((out, out_adj, loss0, loss1, zero))

    # Correctness check against the pure-JAX reference (all kernel math is
    # exact f32 now; no approximate reciprocals in the result path).
    r_out, r_adj, r_l0, r_l1 = _reference_forward(x, adj, weight, bias)
    assert jnp.allclose(out, r_out, atol=tol, rtol=tol), (
        float(jnp.max(jnp.abs(out - r_out))))
    assert jnp.allclose(out_adj, r_adj, atol=tol, rtol=tol), (
        float(jnp.max(jnp.abs(out_adj - r_adj))))
    assert jnp.allclose(loss0, r_l0, atol=tol), float(jnp.abs(loss0 - r_l0))
    assert jnp.allclose(loss1, r_l1, atol=tol), float(jnp.abs(loss1 - r_l1))

    print("KERNEL_OK")
</pallas_src>

<mosaic_0001>
module attributes {stable_mosaic.version = 11 : i64} {
  func.func @_mincut_pool_kernel(%arg0: i32, %arg1: i32, %arg2: memref<1x16x8xf32, #tpu.memory_space<vmem>>, %arg3: memref<1x16x16xf32, #tpu.memory_space<vmem>>, %arg4: memref<8x4xf32, #tpu.memory_space<vmem>>, %arg5: memref<1x1x4xf32, #tpu.memory_space<vmem>>, %arg6: memref<1x4x8xf32, #tpu.memory_space<vmem>>, %arg7: memref<1x4x4xf32, #tpu.memory_space<vmem>>, %arg8: memref<1x1x2xf32, #tpu.memory_space<vmem>>, %arg9: memref<1x1x4x16xf32, #tpu.memory_space<vmem>>, %arg10: memref<1x4x16xf32, #tpu.memory_space<vmem>>, %arg11: memref<1x4x8xf32, #tpu.memory_space<vmem>>, %arg12: memref<1x4x4xf32, #tpu.memory_space<vmem>>, %arg13: memref<1x1x1xf32, #tpu.memory_space<vmem>>) attributes {dimension_semantics = [#tpu.dimension_semantics<parallel>, #tpu.dimension_semantics<arbitrary>], iteration_bounds = array<i64: 2, 1>, scalar_prefetch = 0 : i64, scratch_operands = 5 : i64, tpu.core_type = #tpu.core_type<tc>, window_params = [{transform_indices = @transform_0, window_bounds = array<i64: 1, 16, 8>}, {transform_indices = @transform_1, window_bounds = array<i64: 1, 16, 16>}, {pipeline_mode = #tpu.pipeline_mode<synchronous>, transform_indices = @transform_2, window_bounds = array<i64: 8, 4>}, {pipeline_mode = #tpu.pipeline_mode<synchronous>, transform_indices = @transform_3, window_bounds = array<i64: 1, 1, 4>}, {transform_indices = @transform_4, window_bounds = array<i64: 1, 4, 8>}, {transform_indices = @transform_5, window_bounds = array<i64: 1, 4, 4>}, {transform_indices = @transform_6, window_bounds = array<i64: 1, 1, 2>}]} {
    %c0_i32 = arith.constant 0 : i32
    %0 = arith.cmpi eq, %arg1, %c0_i32 : i32
    %1 = arith.extui %0 : i1 to i32
    %c0_i32_0 = arith.constant 0 : i32
    %2 = arith.cmpi ne, %1, %c0_i32_0 : i32
    scf.if %2 {
      %cst_48 = arith.constant 0.000000e+00 : f32
      %50 = vector.broadcast %cst_48 : f32 to vector<1x4x16xf32>
      %c0_49 = arith.constant 0 : index
      %c0_50 = arith.constant 0 : index
      %c0_51 = arith.constant 0 : index
      %51 = vector.load %arg10[%c0_49, %c0_50, %c0_51] : memref<1x4x16xf32, #tpu.memory_space<vmem>>, vector<1x4x16xf32>
      tpu.vector_store %arg10[%c0_49, %c0_50, %c0_51], %50 {strides = array<i32>} : memref<1x4x16xf32, #tpu.memory_space<vmem>>, vector<1x4x16xf32>,
      %cst_52 = arith.constant 0.000000e+00 : f32
      %52 = vector.broadcast %cst_52 : f32 to vector<1x4x8xf32>
      %c0_53 = arith.constant 0 : index
      %c0_54 = arith.constant 0 : index
      %c0_55 = arith.constant 0 : index
      %53 = vector.load %arg11[%c0_53, %c0_54, %c0_55] : memref<1x4x8xf32, #tpu.memory_space<vmem>>, vector<1x4x8xf32>
      tpu.vector_store %arg11[%c0_53, %c0_54, %c0_55], %52 {strides = array<i32>} : memref<1x4x8xf32, #tpu.memory_space<vmem>>, vector<1x4x8xf32>,
      %cst_56 = arith.constant 0.000000e+00 : f32
      %54 = vector.broadcast %cst_56 : f32 to vector<1x4x4xf32>
      %c0_57 = arith.constant 0 : index
      %c0_58 = arith.constant 0 : index
      %c0_59 = arith.constant 0 : index
      %55 = vector.load %arg12[%c0_57, %c0_58, %c0_59] : memref<1x4x4xf32, #tpu.memory_space<vmem>>, vector<1x4x4xf32>
      tpu.vector_store %arg12[%c0_57, %c0_58, %c0_59], %54 {strides = array<i32>} : memref<1x4x4xf32, #tpu.memory_space<vmem>>, vector<1x4x4xf32>,
      %cst_60 = arith.constant 0.000000e+00 : f32
      %56 = vector.broadcast %cst_60 : f32 to vector<1x1x1xf32>
      %c0_61 = arith.constant 0 : index
      %c0_62 = arith.constant 0 : index
      %c0_63 = arith.constant 0 : index
      %57 = vector.load %arg13[%c0_61, %c0_62, %c0_63] : memref<1x1x1xf32, #tpu.memory_space<vmem>>, vector<1x1x1xf32>
      tpu.vector_store %arg13[%c0_61, %c0_62, %c0_63], %56 {strides = array<i32>} : memref<1x1x1xf32, #tpu.memory_space<vmem>>, vector<1x1x1xf32>,
    } else {
    }
    %c0 = arith.constant 0 : index
    %c0_1 = arith.constant 0 : index
    %c0_2 = arith.constant 0 : index
    %3 = vector.load %arg2[%c0, %c0_1, %c0_2] : memref<1x16x8xf32, #tpu.memory_space<vmem>>, vector<1x16x8xf32>
    %c0_3 = arith.constant 0 : index
    %c0_4 = arith.constant 0 : index
    %c0_5 = arith.constant 0 : index
    %4 = vector.load %arg3[%c0_3, %c0_4, %c0_5] : memref<1x16x16xf32, #tpu.memory_space<vmem>>, vector<1x16x16xf32>
    %5 = vector.shape_cast %3 : vector<1x16x8xf32> to vector<16x8xf32>
    %c0_6 = arith.constant 0 : index
    %c0_7 = arith.constant 0 : index
    %6 = vector.load %arg4[%c0_6, %c0_7] : memref<8x4xf32, #tpu.memory_space<vmem>>, vector<8x4xf32>
    %cst = arith.constant dense<0.000000e+00> : vector<16x4xf32>
    %7 = tpu.matmul %5, %6, %cst {dimension_numbers = #tpu.dot_dimension_numbers<[1], [0], [0], [1], [0, 0, 1, 1], [], []>, precision = #tpu.contract_precision<fp32>} : vector<16x8xf32>, vector<8x4xf32>, vector<16x4xf32> -> vector<16x4xf32>
    %8 = vector.shape_cast %7 : vector<16x4xf32> to vector<1x16x4xf32>
    %c0_8 = arith.constant 0 : index
    %c0_9 = arith.constant 0 : index
    %c0_10 = arith.constant 0 : index
    %9 = vector.load %arg5[%c0_8, %c0_9, %c0_10] : memref<1x1x4xf32, #tpu.memory_space<vmem>>, vector<1x1x4xf32>
    %10 = vector.broadcast %9 : vector<1x1x4xf32> to vector<1x16x4xf32>
    %11 = arith.addf %8, %10 : vector<1x16x4xf32>
    %cst_11 = arith.constant dense<0xFF800000> : vector<1x16xf32>
    %12 = vector.multi_reduction <maximumf>, %11, %cst_11 [2] : vector<1x16x4xf32> to vector<1x16xf32>
    %13 = vector.shape_cast %12 : vector<1x16xf32> to vector<1x16x1xf32>
    %14 = vector.broadcast %13 : vector<1x16x1xf32> to vector<1x16x4xf32>
    %15 = arith.subf %11, %14 : vector<1x16x4xf32>
    %16 = math.exp %15 : vector<1x16x4xf32>
    %cst_12 = arith.constant dense<0.000000e+00> : vector<1x16xf32>
    %17 = vector.multi_reduction <add>, %16, %cst_12 [2] : vector<1x16x4xf32> to vector<1x16xf32>
    %18 = vector.shape_cast %17 : vector<1x16xf32> to vector<1x16x1xf32>
    %19 = vector.broadcast %18 : vector<1x16x1xf32> to vector<1x16x4xf32>
    %20 = arith.divf %16, %19 : vector<1x16x4xf32>
    %21 = tpu.transpose %20, [0, 2, 1] : vector<1x16x4xf32> -> vector<1x4x16xf32>
    %22 = arith.index_cast %arg1 : i32 to index
    %c0_13 = arith.constant 0 : index
    %c0_14 = arith.constant 0 : index
    %c0_15 = arith.constant 0 : index
    %23 = vector.load %arg9[%22, %c0_13, %c0_14, %c0_15] : memref<1x1x4x16xf32, #tpu.memory_space<vmem>>, vector<1x1x4x16xf32>
    %24 = vector.shape_cast %23 : vector<1x1x4x16xf32> to vector<1x4x16xf32>
    %25 = vector.shape_cast %21 : vector<1x4x16xf32> to vector<1x1x4x16xf32>
    tpu.vector_store %arg9[%22, %c0_13, %c0_14, %c0_15], %25 {strides = array<i32>} : memref<1x1x4x16xf32, #tpu.memory_space<vmem>>, vector<1x1x4x16xf32>,
    %c0_16 = arith.constant 0 : index
    %c0_17 = arith.constant 0 : index
    %c0_18 = arith.constant 0 : index
    %26 = vector.load %arg11[%c0_16, %c0_17, %c0_18] : memref<1x4x8xf32, #tpu.memory_space<vmem>>, vector<1x4x8xf32>
    "tpu.trace_start"() <{level = 10 : i32, message = "bkt,btc->bkc"}> : () -> ()
    %cst_19 = arith.constant dense<0.000000e+00> : vector<1x4x8xf32>
    %27 = tpu.matmul %21, %3, %cst_19 {dimension_numbers = #tpu.dot_dimension_numbers<[2], [1], [1], [2], [0, 0, 0, 1, 1, 2], [0], [0]>, precision = #tpu.contract_precision<fp32>} : vector<1x4x16xf32>, vector<1x16x8xf32>, vector<1x4x8xf32> -> vector<1x4x8xf32>
    "tpu.trace_stop"() : () -> ()
    %28 = arith.addf %26, %27 : vector<1x4x8xf32>
    %c0_20 = arith.constant 0 : index
    %c0_21 = arith.constant 0 : index
    %c0_22 = arith.constant 0 : index
    %29 = vector.load %arg11[%c0_20, %c0_21, %c0_22] : memref<1x4x8xf32, #tpu.memory_space<vmem>>, vector<1x4x8xf32>
    tpu.vector_store %arg11[%c0_20, %c0_21, %c0_22], %28 {strides = array<i32>} : memref<1x4x8xf32, #tpu.memory_space<vmem>>, vector<1x4x8xf32>,
    %c0_23 = arith.constant 0 : index
    %c0_24 = arith.constant 0 : index
    %c0_25 = arith.constant 0 : index
    %30 = vector.load %arg10[%c0_23, %c0_24, %c0_25] : memref<1x4x16xf32, #tpu.memory_space<vmem>>, vector<1x4x16xf32>
    "tpu.trace_start"() <{level = 10 : i32, message = "bkt,btn->bkn"}> : () -> ()
    %cst_26 = arith.constant dense<0.000000e+00> : vector<1x4x16xf32>
    %31 = tpu.matmul %21, %4, %cst_26 {dimension_numbers = #tpu.dot_dimension_numbers<[2], [1], [1], [2], [0, 0, 0, 1, 1, 2], [0], [0]>, precision = #tpu.contract_precision<fp32>} : vector<1x4x16xf32>, vector<1x16x16xf32>, vector<1x4x16xf32> -> vector<1x4x16xf32>
    "tpu.trace_stop"() : () -> ()
    %32 = arith.addf %30, %31 : vector<1x4x16xf32>
    %c0_27 = arith.constant 0 : index
    %c0_28 = arith.constant 0 : index
    %c0_29 = arith.constant 0 : index
    %33 = vector.load %arg10[%c0_27, %c0_28, %c0_29] : memref<1x4x16xf32, #tpu.memory_space<vmem>>, vector<1x4x16xf32>
    tpu.vector_store %arg10[%c0_27, %c0_28, %c0_29], %32 {strides = array<i32>} : memref<1x4x16xf32, #tpu.memory_space<vmem>>, vector<1x4x16xf32>,
    %c0_30 = arith.constant 0 : index
    %c0_31 = arith.constant 0 : index
    %c0_32 = arith.constant 0 : index
    %34 = vector.load %arg12[%c0_30, %c0_31, %c0_32] : memref<1x4x4xf32, #tpu.memory_space<vmem>>, vector<1x4x4xf32>
    "tpu.trace_start"() <{level = 10 : i32, message = "bkt,blt->bkl"}> : () -> ()
    %cst_33 = arith.constant dense<0.000000e+00> : vector<1x4x4xf32>
    %35 = tpu.matmul %21, %21, %cst_33 {dimension_numbers = #tpu.dot_dimension_numbers<[2], [2], [1], [1], [0, 0, 0, 1, 1, 1], [0], [0]>, precision = #tpu.contract_precision<fp32>} : vector<1x4x16xf32>, vector<1x4x16xf32>, vector<1x4x4xf32> -> vector<1x4x4xf32>
    "tpu.trace_stop"() : () -> ()
    %36 = arith.addf %34, %35 : vector<1x4x4xf32>
    %c0_34 = arith.constant 0 : index
    %c0_35 = arith.constant 0 : index
    %c0_36 = arith.constant 0 : index
    %37 = vector.load %arg12[%c0_34, %c0_35, %c0_36] : memref<1x4x4xf32, #tpu.memory_space<vmem>>, vector<1x4x4xf32>
    tpu.vector_store %arg12[%c0_34, %c0_35, %c0_36], %36 {strides = array<i32>} : memref<1x4x4xf32, #tpu.memory_space<vmem>>, vector<1x4x4xf32>,
    %38 = arith.mulf %21, %21 : vector<1x4x16xf32>
    %cst_37 = arith.constant dense<0.000000e+00> : vector<1x16xf32>
    %39 = vector.multi_reduction <add>, %38, %cst_37 [1] : vector<1x4x16xf32> to vector<1x16xf32>
    %40 = vector.shape_cast %39 : vector<1x16xf32> to vector<1x1x16xf32>
    "tpu.trace_start"() <{level = 10 : i32, message = "bot,btn->bon"}> : () -> ()
    %cst_38 = arith.constant dense<0.000000e+00> : vector<1x1x16xf32>
    %41 = tpu.matmul %40, %4, %cst_38 {dimension_numbers = #tpu.dot_dimension_numbers<[2], [1], [1], [2], [0, 0, 0, 1, 1, 2], [0], [0]>, precision = #tpu.contract_precision<fp32>} : vector<1x1x16xf32>, vector<1x16x16xf32>, vector<1x1x16xf32> -> vector<1x1x16xf32>
    "tpu.trace_stop"() : () -> ()
    %c0_39 = arith.constant 0 : index
    %c0_40 = arith.constant 0 : index
    %c0_41 = arith.constant 0 : index
    %42 = vector.load %arg13[%c0_39, %c0_40, %c0_41] : memref<1x1x1xf32, #tpu.memory_space<vmem>>, vector<1x1x1xf32>
    %cst_42 = arith.constant dense<0.000000e+00> : vector<1x1xf32>
    %43 = vector.multi_reduction <add>, %41, %cst_42 [2] : vector<1x1x16xf32> to vector<1x1xf32>
    %44 = vector.shape_cast %43 : vector<1x1xf32> to vector<1x1x1xf32>
    %45 = arith.addf %42, %44 : vector<1x1x1xf32>
    %c0_43 = arith.constant 0 : index
    %c0_44 = arith.constant 0 : index
    %c0_45 = arith.constant 0 : index
    %46 = vector.load %arg13[%c0_43, %c0_44, %c0_45] : memref<1x1x1xf32, #tpu.memory_space<vmem>>, vector<1x1x1xf32>
    tpu.vector_store %arg13[%c0_43, %c0_44, %c0_45], %45 {strides = array<i32>} : memref<1x1x1xf32, #tpu.memory_space<vmem>>, vector<1x1x1xf32>,
    %c0_i32_46 = arith.constant 0 : i32
    %47 = arith.cmpi eq, %arg1, %c0_i32_46 : i32
    %48 = arith.extui %47 : i1 to i32
    %c0_i32_47 = arith.constant 0 : i32
    %49 = arith.cmpi ne, %48, %c0_i32_47 : i32
    scf.if %49 {
      %cst_48 = arith.constant 0.000000e+00 : f32
      %50 = vector.broadcast %cst_48 : f32 to vector<1x4x4xf32>
      %c0_49 = arith.constant 0 : index
      %c0_50 = arith.constant 0 : index
      %c0_51 = arith.constant 0 : index
      %51 = vector.load %arg10[%c0_49, %c0_50, %c0_51] : memref<1x4x16xf32, #tpu.memory_space<vmem>>, vector<1x4x16xf32>
      %c0_52 = arith.constant 0 : index
      %c0_53 = arith.constant 0 : index
      %c0_54 = arith.constant 0 : index
      %c0_55 = arith.constant 0 : index
      %52 = vector.load %arg9[%c0_52, %c0_53, %c0_54, %c0_55] : memref<1x1x4x16xf32, #tpu.memory_space<vmem>>, vector<1x1x4x16xf32>
      %53 = vector.shape_cast %52 : vector<1x1x4x16xf32> to vector<1x4x16xf32>
      "tpu.trace_start"() <{level = 10 : i32, message = "bkt,blt->bkl"}> : () -> ()
      %cst_56 = arith.constant dense<0.000000e+00> : vector<1x4x4xf32>
      %54 = tpu.matmul %51, %53, %cst_56 {dimension_numbers = #tpu.dot_dimension_numbers<[2], [2], [1], [1], [0, 0, 0, 1, 1, 1], [0], [0]>, precision = #tpu.contract_precision<fp32>} : vector<1x4x16xf32>, vector<1x4x16xf32>, vector<1x4x4xf32> -> vector<1x4x4xf32>
      "tpu.trace_stop"() : () -> ()
      %55 = arith.addf %50, %54 : vector<1x4x4xf32>
      %56 = tpu.iota {dimensions = array<i32: 1>} : vector<1x4x4xi32>
      %57 = tpu.iota {dimensions = array<i32: 2>} : vector<1x4x4xi32>
      %58 = arith.cmpi eq, %56, %57 : vector<1x4x4xi32>
      %cst_57 = arith.constant 0.000000e+00 : f32
      %59 = vector.broadcast %cst_57 : f32 to vector<1x4x4xf32>
      %60 = arith.select %58, %55, %59 : vector<1x4x4xi1>, vector<1x4x4xf32>
      %cst_58 = arith.constant dense<0.000000e+00> : vector<1xf32>
      %61 = vector.multi_reduction <add>, %60, %cst_58 [1, 2] : vector<1x4x4xf32> to vector<1xf32>
      %62 = vector.shape_cast %61 : vector<1xf32> to vector<1x1x1xf32>
      %c0_59 = arith.constant 0 : index
      %c0_60 = arith.constant 0 : index
      %c0_61 = arith.constant 0 : index
      %63 = vector.load %arg13[%c0_59, %c0_60, %c0_61] : memref<1x1x1xf32, #tpu.memory_space<vmem>>, vector<1x1x1xf32>
      %64 = arith.divf %62, %63 : vector<1x1x1xf32>
      %cst_62 = arith.constant 0.000000e+00 : f32
      %65 = vector.broadcast %cst_62 : f32 to vector<1x1x1xf32>
      %66 = arith.subf %65, %64 : vector<1x1x1xf32>
      %c0_63 = arith.constant 0 : index
      %c0_64 = arith.constant 0 : index
      %c0_65 = arith.constant 0 : index
      %67 = vector.load %arg12[%c0_63, %c0_64, %c0_65] : memref<1x4x4xf32, #tpu.memory_space<vmem>>, vector<1x4x4xf32>
      %68 = arith.mulf %67, %67 : vector<1x4x4xf32>
      %cst_66 = arith.constant dense<0.000000e+00> : vector<1xf32>
      %69 = vector.multi_reduction <add>, %68, %cst_66 [1, 2] : vector<1x4x4xf32> to vector<1xf32>
      %70 = vector.shape_cast %69 : vector<1xf32> to vector<1x1x1xf32>
      %71 = math.sqrt %70 : vector<1x1x1xf32>
      %cst_67 = arith.constant 1.000000e+00 : f32
      %cst_68 = arith.constant 0.000000e+00 : f32
      %72 = vector.broadcast %cst_67 : f32 to vector<1x4x4xf32>
      %73 = vector.broadcast %cst_68 : f32 to vector<1x4x4xf32>
      %74 = arith.select %58, %72, %73 : vector<1x4x4xi1>, vector<1x4x4xf32>
      %75 = vector.broadcast %71 : vector<1x1x1xf32> to vector<1x4x4xf32>
      %76 = arith.divf %67, %75 : vector<1x4x4xf32>
      %cst_69 = arith.constant 5.000000e-01 : f32
      %77 = vector.broadcast %cst_69 : f32 to vector<1x4x4xf32>
      %78 = arith.mulf %74, %77 : vector<1x4x4xf32>
      %79 = arith.subf %76, %78 : vector<1x4x4xf32>
      %80 = arith.mulf %79, %79 : vector<1x4x4xf32>
      %cst_70 = arith.constant dense<0.000000e+00> : vector<1xf32>
      %81 = vector.multi_reduction <add>, %80, %cst_70 [1, 2] : vector<1x4x4xf32> to vector<1xf32>
      %82 = vector.shape_cast %81 : vector<1xf32> to vector<1x1x1xf32>
      %83 = math.sqrt %82 : vector<1x1x1xf32>
      %84 = tpu.iota {dimensions = array<i32: 2>} : vector<1x1x2xi32>
      %c0_i32_71 = arith.constant 0 : i32
      %85 = vector.broadcast %c0_i32_71 : i32 to vector<1x1x2xi32>
      %86 = arith.cmpi eq, %84, %85 : vector<1x1x2xi32>
      %87 = vector.shape_cast %66 : vector<1x1x1xf32> to vector<1x1x1xf32>
      %88 = vector.broadcast %87 : vector<1x1x1xf32> to vector<1x1x2xf32>
      %89 = vector.shape_cast %83 : vector<1x1x1xf32> to vector<1x1x1xf32>
      %90 = vector.broadcast %89 : vector<1x1x1xf32> to vector<1x1x2xf32>
      %91 = arith.select %86, %88, %90 : vector<1x1x2xi1>, vector<1x1x2xf32>
      %c0_72 = arith.constant 0 : index
      %c0_73 = arith.constant 0 : index
      %c0_74 = arith.constant 0 : index
      %92 = vector.load %arg8[%c0_72, %c0_73, %c0_74] : memref<1x1x2xf32, #tpu.memory_space<vmem>>, vector<1x1x2xf32>
      tpu.vector_store %arg8[%c0_72, %c0_73, %c0_74], %91 {strides = array<i32>} : memref<1x1x2xf32, #tpu.memory_space<vmem>>, vector<1x1x2xf32>,
      %cst_75 = arith.constant 0.000000e+00 : f32
      %93 = vector.broadcast %cst_75 : f32 to vector<1x4x4xf32>
      %94 = arith.select %58, %93, %55 : vector<1x4x4xi1>, vector<1x4x4xf32>
      %cst_76 = arith.constant dense<0.000000e+00> : vector<1x4xf32>
      %95 = vector.multi_reduction <add>, %94, %cst_76 [2] : vector<1x4x4xf32> to vector<1x4xf32>
      %96 = vector.shape_cast %95 : vector<1x4xf32> to vector<1x4x1xf32>
      %97 = math.sqrt %96 : vector<1x4x1xf32>
      %cst_77 = arith.constant 1.000000e-15 : f32
      %98 = vector.broadcast %cst_77 : f32 to vector<1x4x1xf32>
      %99 = arith.addf %97, %98 : vector<1x4x1xf32>
      %100 = tpu.transpose %99, [0, 2, 1] : vector<1x4x1xf32> -> vector<1x1x4xf32>
      %c0_78 = arith.constant 0 : index
      %c0_79 = arith.constant 0 : index
      %c0_80 = arith.constant 0 : index
      %101 = vector.load %arg11[%c0_78, %c0_79, %c0_80] : memref<1x4x8xf32, #tpu.memory_space<vmem>>, vector<1x4x8xf32>
      %c0_81 = arith.constant 0 : index
      %c0_82 = arith.constant 0 : index
      %c0_83 = arith.constant 0 : index
      %102 = vector.load %arg6[%c0_81, %c0_82, %c0_83] : memref<1x4x8xf32, #tpu.memory_space<vmem>>, vector<1x4x8xf32>
      tpu.vector_store %arg6[%c0_81, %c0_82, %c0_83], %101 {strides = array<i32>} : memref<1x4x8xf32, #tpu.memory_space<vmem>>, vector<1x4x8xf32>,
      %103 = vector.broadcast %99 : vector<1x4x1xf32> to vector<1x4x4xf32>
      %104 = arith.divf %94, %103 : vector<1x4x4xf32>
      %105 = vector.broadcast %100 : vector<1x1x4xf32> to vector<1x4x4xf32>
      %106 = arith.divf %104, %105 : vector<1x4x4xf32>
      %c0_84 = arith.constant 0 : index
      %c0_85 = arith.constant 0 : index
      %c0_86 = arith.constant 0 : index
      %107 = vector.load %arg7[%c0_84, %c0_85, %c0_86] : memref<1x4x4xf32, #tpu.memory_space<vmem>>, vector<1x4x4xf32>
      tpu.vector_store %arg7[%c0_84, %c0_85, %c0_86], %106 {strides = array<i32>} : memref<1x4x4xf32, #tpu.memory_space<vmem>>, vector<1x4x4xf32>,
    } else {
    }
    return
  }
  func.func @transform_0(%arg0: i32, %arg1: i32) -> (i32, i32, i32) {
    %c0_i32 = arith.constant 0 : i32
    %c0_i32_0 = arith.constant 0 : i32
    return %arg0, %arg1, %c0_i32 : i32, i32, i32
  }
  func.func @transform_1(%arg0: i32, %arg1: i32) -> (i32, i32, i32) {
    %c0_i32 = arith.constant 0 : i32
    %c0_i32_0 = arith.constant 0 : i32
    return %arg0, %arg1, %c0_i32 : i32, i32, i32
  }
  func.func @transform_2(%arg0: i32, %arg1: i32) -> (i32, i32) {
    %c0_i32 = arith.constant 0 : i32
    %c0_i32_0 = arith.constant 0 : i32
    %c0_i32_1 = arith.constant 0 : i32
    return %c0_i32, %c0_i32_0 : i32, i32
  }
  func.func @transform_3(%arg0: i32, %arg1: i32) -> (i32, i32, i32) {
    %c0_i32 = arith.constant 0 : i32
    %c0_i32_0 = arith.constant 0 : i32
    %c0_i32_1 = arith.constant 0 : i32
    %c0_i32_2 = arith.constant 0 : i32
    return %c0_i32, %c0_i32_0, %c0_i32_1 : i32, i32, i32
  }
  func.func @transform_4(%arg0: i32, %arg1: i32) -> (i32, i32, i32) {
    %c0_i32 = arith.constant 0 : i32
    %c0_i32_0 = arith.constant 0 : i32
    %c0_i32_1 = arith.constant 0 : i32
    return %arg0, %c0_i32, %c0_i32_0 : i32, i32, i32
  }
  func.func @transform_5(%arg0: i32, %arg1: i32) -> (i32, i32, i32) {
    %c0_i32 = arith.constant 0 : i32
    %c0_i32_0 = arith.constant 0 : i32
    %c0_i32_1 = arith.constant 0 : i32
    return %arg0, %c0_i32, %c0_i32_0 : i32, i32, i32
  }
  func.func @transform_6(%arg0: i32, %arg1: i32) -> (i32, i32, i32) {
    %c0_i32 = arith.constant 0 : i32
    %c0_i32_0 = arith.constant 0 : i32
    %c0_i32_1 = arith.constant 0 : i32
    return %arg0, %c0_i32, %c0_i32_0 : i32, i32, i32
  }
}

</mosaic_0001>

<llo_original>
// kernel: embedded_pool_forward.1
$region0: #{embedded_pool_forward.1}
  #allocation0 [shape = 'u32[]', space=smem, size = 0x4, offset = 0x4, fixed_abs, tag = 'smem constant byte address 0x4 - core index']
  #allocation1 [shape = 'u32[144,128]{1,0:T(1,128)}', space=vmem, size = 0x12000, scoped, tag = 'internal scratch']
  #allocation2 [shape = 'f32[1,1,4,16]{3,2,1,0:T(4,128)}', space=vmem, size = 0x800, scoped, tag = 'scratch operand']
  #allocation3 [shape = 'f32[1,4,16]{2,1,0:T(4,128)}', space=vmem, size = 0x800, scoped, tag = 'scratch operand']
  #allocation4 [shape = 'f32[1,4,8]{2,1,0:T(4,128)}', space=vmem, size = 0x800, scoped, tag = 'scratch operand']
  #allocation5 [shape = 'f32[1,4,4]{2,1,0:T(4,128)}', space=vmem, size = 0x800, scoped, tag = 'scratch operand']
  #allocation6 [shape = 'f32[1,1,1]{2,1,0:T(1,128)}', space=vmem, size = 0x200, scoped, tag = 'scratch operand']
  %s0 = inlined_call_operand.vmem [shape: f32[2,16,8], index: 0, kind: input, shape index: {}]
  %s1 = inlined_call_operand.vmem [shape: f32[2,16,16], index: 1, kind: input, shape index: {}]
  %s2 = inlined_call_operand.vmem [shape: f32[8,4], index: 2, kind: input, shape index: {}]
  %s3 = inlined_call_operand.vmem [shape: f32[1,1,4], index: 3, kind: input, shape index: {}]
  %s4 = inlined_call_operand.hbm [shape: f32[2,4,8], index: 4, kind: output, shape index: {0}]
  %s5 = inlined_call_operand.hbm [shape: f32[2,4,4], index: 5, kind: output, shape index: {1}]
  %s6 = inlined_call_operand.vmem [shape: f32[2,1,2], index: 6, kind: output, shape index: {2}]
  %7 = xla_tuple %s4, %s5, %s6
  %s8 = sld [smem:[#allocation0]]
  $region73: #{embedded_pool_forward.1} parent=0
    _
  %s10 = ssub.s32 1, %s8
  %s11 = scalar_select 0, %s10, %s8
  $region1: #{embedded_pool_forward.1} parent=0
    #allocation7 [shape = 'u8[4096]{0}', space=vmem, size = 0x1000, scoped, tag = 'output window, operand 0']
    #allocation8 [shape = 's32[2]{0}', space=sflag, size = 0x8, scoped, tag = 'scoped memory for embedded_pool_forward.1']
    #allocation9 [shape = 'u8[4096]{0}', space=vmem, size = 0x1000, scoped, tag = 'output window, operand 1']
    #allocation10 [shape = 's32[2]{0}', space=sflag, size = 0x8, scoped, tag = 'scoped memory for embedded_pool_forward.1']
    %12 = vsyncpa [#allocation8], 0
    %s13 = scalar_lea.sflag [#allocation8], 1
    %14 = vsyncpa %s13, 0
    %15 = vsyncpa [#allocation10], 0
    %s16 = scalar_lea.sflag [#allocation10], 1
    %17 = vsyncpa %s16, 0
    loop: start=0, step=1, limit=4
    $region2: #{embedded_pool_forward.1} parent=1 // loop_pre_header
      _
    $region3: #{embedded_pool_forward.1} parent=1 // loop_header
      %s19 = sphi 0, %s23
      %p20 = scmp.ge.s32.totalorder %s19, 4
      %s26 = sphi 0, %s38
      %s27 = sphi 0, %s34
      %s28 = sphi 0, %s26
      %s29 = sphi 0, %s27
      %s30 = sphi 0, %s28
      %s31 = sphi 0, %s29
      %s43 = sphi 0, %s45
      %s46 = sphi 0, %s43
      %s47 = sphi 0, %s46
      %s63 = sphi 0, %s47
      %s71 = sphi 0, %s73
      %s74 = sphi 0, %s71
      %s75 = sphi 0, %s74
      %s91 = sphi 0, %s75
      %s95 = sphi 0, %s95
      %s97 = sphi 0, %s95
      %s98 = sphi 0, %s97
      %s112 = sphi 0, %s98
      %s116 = sphi 0, %s116
      %s118 = sphi 0, %s116
      %s119 = sphi 0, %s118
      %s133 = sphi 0, %s119
      %s139 = sphi 0, %s141
      %s142 = sphi 0, %s139
      %s143 = sphi 0, %s142
      %s159 = sphi 0, %s143
      %s165 = sphi 0, %s167
      %s168 = sphi 0, %s165
      %s169 = sphi 0, %s168
      %s185 = sphi 0, %s169
      %s191 = sphi 0, %s193
      %s194 = sphi 0, %s191
      %s195 = sphi 0, %s194
      %s211 = sphi 0, %s195
    $region4: #{embedded_pool_forward.1} parent=1 // loop_header_branch
      %22 = sbr.rel (%p20) target = $region8
    $region5: #{embedded_pool_forward.1} parent=1 // loop_body
      %s24 = ssub.s32 %s19, 1
      %s25 = ssub.s32 %s19, 2
      %s32 = sadd.s32 1, %s27
      %p33 = scmp.ge.s32.totalorder %s32, 1
      %s34 = scalar_select %p33, 0, %s32
      %s35 = sadd.s32 1, %s26
      %s36 = scalar_select %p33, %s35, %s26
      %p37 = scmp.ge.s32.totalorder %s36, 2
      %s38 = scalar_select %p37, 0, %s36
      %s39 = ssub.s32 %s26, %s38
      %s40 = ssub.s32 %s27, %s34
      %s41 = sor.u32 %s39, %s40
      %p42 = scmp.eq.s32.totalorder %s41, 0
      %s44 = sadd.s32 %s43, 1
      %s45 = scalar_select %p42, %s43, %s44
      %p48 = pneg %p42
      %p49 = scmp.eq.s32.totalorder %s19, 1
      %p50 = por %p48, %p49
      %p51 = scmp.ne.s32.totalorder %s43, %s46
      %p52 = scmp.eq.s32.totalorder %s19, 0
      %p53 = por %p51, %p52
      %p54 = scmp.ne.s32.totalorder %s43, %s46
      %p55 = scmp.eq.s32.totalorder %s24, 1
      %p56 = por %p54, %p55
      %p57 = scmp.ne.s32.totalorder %s46, %s47
      %p58 = scmp.eq.s32.totalorder %s24, 0
      %p59 = por %p57, %p58
      %p60 = scmp.ne.s32.totalorder %s46, %s47
      %p61 = scmp.eq.s32.totalorder %s25, 1
      %p62 = por %p60, %p61
      %p64 = scmp.ne.s32.totalorder %s47, %s63
      %p65 = scmp.eq.s32.totalorder %s25, 0
      %p66 = por %p64, %p65
      %s67 = ssub.s32 %s26, %s38
      %s68 = ssub.s32 %s27, %s34
      %s69 = sor.u32 %s67, %s68
      %p70 = scmp.eq.s32.totalorder %s69, 0
      %s72 = sadd.s32 %s71, 1
      %s73 = scalar_select %p70, %s71, %s72
      %p76 = pneg %p70
      %p77 = scmp.eq.s32.totalorder %s19, 1
      %p78 = por %p76, %p77
      %p79 = scmp.ne.s32.totalorder %s71, %s74
      %p80 = scmp.eq.s32.totalorder %s19, 0
      %p81 = por %p79, %p80
      %p82 = scmp.ne.s32.totalorder %s71, %s74
      %p83 = scmp.eq.s32.totalorder %s24, 1
      %p84 = por %p82, %p83
      %p85 = scmp.ne.s32.totalorder %s74, %s75
      %p86 = scmp.eq.s32.totalorder %s24, 0
      %p87 = por %p85, %p86
      %p88 = scmp.ne.s32.totalorder %s74, %s75
      %p89 = scmp.eq.s32.totalorder %s25, 1
      %p90 = por %p88, %p89
      %p92 = scmp.ne.s32.totalorder %s75, %s91
      %p93 = scmp.eq.s32.totalorder %s25, 0
      %p94 = por %p92, %p93
      %s96 = sadd.s32 %s95, 1
      %p99 = scmp.eq.s32.totalorder %s19, 1
      %p100 = scmp.ne.s32.totalorder %s95, %s97
      %p101 = scmp.eq.s32.totalorder %s19, 0
      %p102 = por %p100, %p101
      %p103 = scmp.ne.s32.totalorder %s95, %s97
      %p104 = scmp.eq.s32.totalorder %s24, 1
      %p105 = por %p103, %p104
      %p106 = scmp.ne.s32.totalorder %s97, %s98
      %p107 = scmp.eq.s32.totalorder %s24, 0
      %p108 = por %p106, %p107
      %p109 = scmp.ne.s32.totalorder %s97, %s98
      %p110 = scmp.eq.s32.totalorder %s25, 1
      %p111 = por %p109, %p110
      %p113 = scmp.ne.s32.totalorder %s98, %s112
      %p114 = scmp.eq.s32.totalorder %s25, 0
      %p115 = por %p113, %p114
      %s117 = sadd.s32 %s116, 1
      %p120 = scmp.eq.s32.totalorder %s19, 1
      %p121 = scmp.ne.s32.totalorder %s116, %s118
      %p122 = scmp.eq.s32.totalorder %s19, 0
      %p123 = por %p121, %p122
      %p124 = scmp.ne.s32.totalorder %s116, %s118
      %p125 = scmp.eq.s32.totalorder %s24, 1
      %p126 = por %p124, %p125
      %p127 = scmp.ne.s32.totalorder %s118, %s119
      %p128 = scmp.eq.s32.totalorder %s24, 0
      %p129 = por %p127, %p128
      %p130 = scmp.ne.s32.totalorder %s118, %s119
      %p131 = scmp.eq.s32.totalorder %s25, 1
      %p132 = por %p130, %p131
      %p134 = scmp.ne.s32.totalorder %s119, %s133
      %p135 = scmp.eq.s32.totalorder %s25, 0
      %p136 = por %p134, %p135
      %s137 = ssub.s32 %s26, %s38
      %p138 = scmp.eq.s32.totalorder %s137, 0
      %s140 = sadd.s32 %s139, 1
      %s141 = scalar_select %p138, %s139, %s140
      %p144 = pneg %p138
      %p145 = scmp.eq.s32.totalorder %s19, 1
      %p146 = por %p144, %p145
      %p147 = scmp.ne.s32.totalorder %s139, %s142
      %p148 = scmp.eq.s32.totalorder %s19, 0
      %p149 = por %p147, %p148
      %p150 = scmp.ne.s32.totalorder %s139, %s142
      %p151 = scmp.eq.s32.totalorder %s24, 1
      %p152 = por %p150, %p151
      %p153 = scmp.ne.s32.totalorder %s142, %s143
      %p154 = scmp.eq.s32.totalorder %s24, 0
      %p155 = por %p153, %p154
      %p156 = scmp.ne.s32.totalorder %s142, %s143
      %p157 = scmp.eq.s32.totalorder %s25, 1
      %p158 = por %p156, %p157
      %p160 = scmp.ne.s32.totalorder %s143, %s159
      %p161 = scmp.eq.s32.totalorder %s25, 0
      %p162 = por %p160, %p161
      %s163 = ssub.s32 %s26, %s38
      %p164 = scmp.eq.s32.totalorder %s163, 0
      %s166 = sadd.s32 %s165, 1
      %s167 = scalar_select %p164, %s165, %s166
      %p170 = pneg %p164
      %p171 = scmp.eq.s32.totalorder %s19, 1
      %p172 = por %p170, %p171
      %p173 = scmp.ne.s32.totalorder %s165, %s168
      %p174 = scmp.eq.s32.totalorder %s19, 0
      %p175 = por %p173, %p174
      %p176 = scmp.ne.s32.totalorder %s165, %s168
      %p177 = scmp.eq.s32.totalorder %s24, 1
      %p178 = por %p176, %p177
      %p179 = scmp.ne.s32.totalorder %s168, %s169
      %p180 = scmp.eq.s32.totalorder %s24, 0
      %p181 = por %p179, %p180
      %p182 = scmp.ne.s32.totalorder %s168, %s169
      %p183 = scmp.eq.s32.totalorder %s25, 1
      %p184 = por %p182, %p183
      %p186 = scmp.ne.s32.totalorder %s169, %s185
      %p187 = scmp.eq.s32.totalorder %s25, 0
      %p188 = por %p186, %p187
      %s189 = ssub.s32 %s26, %s38
      %p190 = scmp.eq.s32.totalorder %s189, 0
      %s192 = sadd.s32 %s191, 1
      %s193 = scalar_select %p190, %s191, %s192
      %p196 = pneg %p190
      %p197 = scmp.eq.s32.totalorder %s19, 1
      %p198 = por %p196, %p197
      %p199 = scmp.ne.s32.totalorder %s191, %s194
      %p200 = scmp.eq.s32.totalorder %s19, 0
      %p201 = por %p199, %p200
      %p202 = scmp.ne.s32.totalorder %s191, %s194
      %p203 = scmp.eq.s32.totalorder %s24, 1
      %p204 = por %p202, %p203
      %p205 = scmp.ne.s32.totalorder %s194, %s195
      %p206 = scmp.eq.s32.totalorder %s24, 0
      %p207 = por %p205, %p206
      %p208 = scmp.ne.s32.totalorder %s194, %s195
      %p209 = scmp.eq.s32.totalorder %s25, 1
      %p210 = por %p208, %p209
      %p212 = scmp.ne.s32.totalorder %s195, %s211
      %p213 = scmp.eq.s32.totalorder %s25, 0
      %p214 = por %p212, %p213
      %p215 = scmp.le.s32.totalorder 1, %s19
      %p216 = scmp.lt.s32.totalorder %s19, 3
      %p217 = pnand %p215, %p216
      %p218 = pneg %p217
      // Predicated region
      $region9: #{embedded_pool_forward.1} parent=5 // pred_check
        _
      $region10: #{embedded_pool_forward.1} parent=5 // pred_check_branch
        %220 = sbr.rel (%p217) target = $region12
      $region11: #{embedded_pool_forward.1} parent=5 // pred_region
        %s221 = ssub.s32 %s19, 1
        // Predicated region
        $region13: #{embedded_pool_forward.1} parent=11 // pred_check
          %p222 = pneg %p108
        $region14: #{embedded_pool_forward.1} parent=11 // pred_check_branch
          %224 = sbr.rel (%p222) target = $region16
        $region15: #{embedded_pool_forward.1} parent=11 // pred_region
          _
        $region16: #{embedded_pool_forward.1} parent=11 // pred_fallthru
          _
        // Predicated region
        $region17: #{embedded_pool_forward.1} parent=11 // pred_check
          %p225 = pneg %p129
        $region18: #{embedded_pool_forward.1} parent=11 // pred_check_branch
          %227 = sbr.rel (%p225) target = $region20
        $region19: #{embedded_pool_forward.1} parent=11 // pred_region
          _
        $region20: #{embedded_pool_forward.1} parent=11 // pred_fallthru
          _
      $region12: #{embedded_pool_forward.1} parent=5 // pred_fallthru
        _
      %p228 = scmp.lt.s32.totalorder %s19, 2
      // Predicated region
      $region21: #{embedded_pool_forward.1} parent=5 // pred_check
        %p229 = pneg %p228
      $region22: #{embedded_pool_forward.1} parent=5 // pred_check_branch
        %231 = sbr.rel (%p229) target = $region24
      $region23: #{embedded_pool_forward.1} parent=5 // pred_region
        // Predicated region
        $region25: #{embedded_pool_forward.1} parent=23 // pred_check
          %p232 = pneg %p53
        $region26: #{embedded_pool_forward.1} parent=23 // pred_check_branch
          %234 = sbr.rel (%p232) target = $region28
        $region27: #{embedded_pool_forward.1} parent=23 // pred_region
          %s235 = smul.u32 2, %s27
          %p236 = scmp.lt.s32.totalorder %s26, 1
          %s237 = scalar_select %p236, %s26, 1
          %p238 = scmp.lt.s32.totalorder %s235, 1
          %s239 = scalar_select %p238, %s235, 1
          %s240 = smul.addr %s237, 2
          %s241 = sadd.s32 %s239, %s240
          %s242 = smul.addr %s241, 8
          %s243 = scalar_lea.vmem %s0, %s242
          %s244 = smul.u32 2, %s27
        $region28: #{embedded_pool_forward.1} parent=23 // pred_fallthru
          _
        // Predicated region
        $region29: #{embedded_pool_forward.1} parent=23 // pred_check
          %p245 = pneg %p81
        $region30: #{embedded_pool_forward.1} parent=23 // pred_check_branch
          %247 = sbr.rel (%p245) target = $region32
        $region31: #{embedded_pool_forward.1} parent=23 // pred_region
          %s248 = smul.u32 2, %s27
          %p249 = scmp.lt.s32.totalorder %s26, 1
          %s250 = scalar_select %p249, %s26, 1
          %p251 = scmp.lt.s32.totalorder %s248, 1
          %s252 = scalar_select %p251, %s248, 1
          %s253 = smul.addr %s250, 2
          %s254 = sadd.s32 %s252, %s253
          %s255 = smul.addr %s254, 8
          %s256 = scalar_lea.vmem %s1, %s255
          %s257 = smul.u32 2, %s27
        $region32: #{embedded_pool_forward.1} parent=23 // pred_fallthru
          _
      $region24: #{embedded_pool_forward.1} parent=5 // pred_fallthru
        _
      %p258 = scmp.le.s32.totalorder 1, %s19
      %p259 = scmp.lt.s32.totalorder %s19, 3
      %p260 = pnand %p258, %p259
      %p261 = pneg %p260
      // Predicated region
      $region33: #{embedded_pool_forward.1} parent=5 // pred_check
        _
      $region34: #{embedded_pool_forward.1} parent=5 // pred_check_branch
        %263 = sbr.rel (%p260) target = $region36
      $region35: #{embedded_pool_forward.1} parent=5 // pred_region
        %s264 = ssub.s32 %s19, 1
        %s265 = smul.u32 2, %s29
        %p266 = scmp.lt.s32.totalorder %s28, 1
        %s267 = scalar_select %p266, %s28, 1
        %p268 = scmp.lt.s32.totalorder %s265, 1
        %s269 = scalar_select %p268, %s265, 1
        %s270 = smul.addr %s267, 2
        %s271 = sadd.s32 %s269, %s270
        %s272 = smul.addr %s271, 8
        %s273 = scalar_lea.vmem %s0, %s272
        %p274 = pneg %p59
        %p275 = pneg %p56
        %s276 = smul.u32 2, %s29
        %p277 = scmp.lt.s32.totalorder %s28, 1
        %s278 = scalar_select %p277, %s28, 1
        %p279 = scmp.lt.s32.totalorder %s276, 1
        %s280 = scalar_select %p279, %s276, 1
        %s281 = smul.addr %s278, 2
        %s282 = sadd.s32 %s280, %s281
        %s283 = smul.addr %s282, 8
        %s284 = scalar_lea.vmem %s1, %s283
        %p285 = pneg %p87
        %p286 = pneg %p84
        %p287 = pneg %p108
        %p288 = pneg %p105
        %p289 = pneg %p129
        %p290 = pneg %p126
        %p291 = pneg %p155
        %p292 = pneg %p152
        %s293 = sand.u32 %s142, 1
        %s294 = scalar_lea.sflag [#allocation8], %s293
        %s295 = sand.u32 %s142, 1
        %s296 = smul.addr %s295, 4
        %s297 = scalar_lea.vmem [#allocation7], %s296
        %p298 = pneg %p181
        %p299 = pneg %p178
        %s300 = sand.u32 %s168, 1
        %s301 = scalar_lea.sflag [#allocation10], %s300
        %s302 = sand.u32 %s168, 1
        %s303 = smul.addr %s302, 4
        %s304 = scalar_lea.vmem [#allocation9], %s303
        %p305 = pneg %p207
        %p306 = pneg %p204
        %p307 = scmp.lt.s32.totalorder %s28, 1
        %s308 = scalar_select %p307, %s28, 1
        %s309 = scalar_lea.vmem %s6, %s308
        %s310 = smul.u32 2, %s29
        %p311 = scmp.lt.s32.totalorder %s28, 1
        %s312 = scalar_select %p311, %s28, 1
        %p313 = scmp.lt.s32.totalorder %s310, 1
        %s314 = scalar_select %p313, %s310, 1
        %s315 = smul.addr %s312, 2
        %s316 = sadd.s32 %s314, %s315
        %s317 = smul.addr %s316, 8
        %s318 = scalar_lea.vmem %s0, %s317
        %s319 = smul.u32 2, %s29
        %s320 = smul.u32 2, %s29
        %p321 = scmp.lt.s32.totalorder %s28, 1
        %s322 = scalar_select %p321, %s28, 1
        %p323 = scmp.lt.s32.totalorder %s320, 1
        %s324 = scalar_select %p323, %s320, 1
        %s325 = smul.addr %s322, 2
        %s326 = sadd.s32 %s324, %s325
        %s327 = smul.addr %s326, 8
        %s328 = scalar_lea.vmem %s1, %s327
        %s329 = smul.u32 2, %s29
        %p330 = scmp.lt.s32.totalorder %s28, 1
        %s331 = scalar_select %p330, %s28, 1
        %s332 = scalar_lea.vmem %s6, %s331
        %p333 = scmp.eq.s32.totalorder %s29, 0
        // Predicated region
        $region37: #{embedded_pool_forward.1} parent=35 // pred_check
          %p334 = pneg %p333
        $region38: #{embedded_pool_forward.1} parent=35 // pred_check_branch
          %336 = sbr.rel (%p334) target = $region40
        $region39: #{embedded_pool_forward.1} parent=35 // pred_region
          %vm337 = vcmask 125952
          %338 = vst.msk [vmem:[#allocation3] sm:$0xf] %vm337, 0.0
          %vm339 = vcmask 60416
          %340 = vst.msk [vmem:[#allocation4] sm:$0xf] %vm339, 0.0
          %vm341 = vcmask 27648
          %342 = vst.msk [vmem:[#allocation5] sm:$0xf] %vm341, 0.0
          %vm343 = vcmask 0
          %344 = vst.msk [vmem:[#allocation6] sm:$0x1] %vm343, 0.0
        $region40: #{embedded_pool_forward.1} parent=35 // pred_fallthru
          _
        %v345 = vld [vmem:[%s318] sm:$0xff]
        %v346 = vld [vmem:[%s318 + $0x8] sm:$0xff]
        %v347 = vld [vmem:[%s328] sm:$0xff]
        %v348 = vld [vmem:[%s328 + $0x8] sm:$0xff]
        %v349 = vld [vmem:[%s2] sm:$0xff]
        %vm350 = vcmask 64512
        %v352 = vsel %vm350, %v345, 0
        %v355 = vsel %vm350, %v346, 0
        %357 = vmatprep.subr.mxu0 0.0
        %358 = vmatpush1.msra.mxu0 0.0
        %359 = vmatprep.subr.mxu0 0.0
        %360 = vmatpush1.msra.mxu0 0.0
        %361 = vmatprep.subr.mxu0 0.0
        %362 = vmatpush1.msra.mxu0 0.0
        %363 = vmatprep.subr.mxu0 0.0
        %364 = vmatpush1.msra.mxu0 0.0
        %365 = vmatprep.subr.mxu0 0.0
        %366 = vmatpush1.msra.mxu0 0.0
        %367 = vmatprep.subr.mxu0 0.0
        %368 = vmatpush1.msra.mxu0 0.0
        %369 = vmatprep.subr.mxu0 0.0
        %370 = vmatpush1.msra.mxu0 0.0
        %371 = vmatprep.subr.mxu0 0.0
        %372 = vmatpush1.msra.mxu0 0.0
        %373 = vmatprep.subr.mxu0 0.0
        %374 = vmatpush1.msra.mxu0 0.0
        %375 = vmatprep.subr.mxu0 0.0
        %376 = vmatpush1.msra.mxu0 0.0
        %377 = vmatprep.subr.mxu0 0.0
        %378 = vmatpush1.msra.mxu0 0.0
        %379 = vmatprep.subr.mxu0 0.0
        %380 = vmatpush1.msra.mxu0 0.0
        %381 = vmatprep.subr.mxu0 0.0
        %382 = vmatpush1.msra.mxu0 0.0
        %383 = vmatprep.subr.mxu0 0.0
        %384 = vmatpush1.msra.mxu0 0.0
        %385 = vmatprep.subr.mxu0 0.0
        %386 = vmatpush1.msra.mxu0 0.0
        %387 = vmatprep.subr.mxu0 0.0
        %v388 = vand.u32 %v349, 4294901760
        %389 = vmatpush1.msra.mxu0 %v388
        %390 = vmatprep.subr.mxu0 0.0
        %391 = vmatpush2.msra.mxu0 0.0
        %392 = vmatprep.subr.mxu0 0.0
        %393 = vmatpush2.msra.mxu0 0.0
        %394 = vmatprep.subr.mxu0 0.0
        %395 = vmatpush2.msra.mxu0 0.0
        %396 = vmatprep.subr.mxu0 0.0
        %397 = vmatpush2.msra.mxu0 0.0
        %398 = vmatprep.subr.mxu0 0.0
        %399 = vmatpush2.msra.mxu0 0.0
        %400 = vmatprep.subr.mxu0 0.0
        %401 = vmatpush2.msra.mxu0 0.0
        %402 = vmatprep.subr.mxu0 0.0
        %403 = vmatpush2.msra.mxu0 0.0
        %404 = vmatprep.subr.mxu0 0.0
        %405 = vmatpush2.msra.mxu0 0.0
        %406 = vmatprep.subr.mxu0 0.0
        %407 = vmatpush2.msra.mxu0 0.0
        %408 = vmatprep.subr.mxu0 0.0
        %409 = vmatpush2.msra.mxu0 0.0
        %410 = vmatprep.subr.mxu0 0.0
        %411 = vmatpush2.msra.mxu0 0.0
        %412 = vmatprep.subr.mxu0 0.0
        %413 = vmatpush2.msra.mxu0 0.0
        %414 = vmatprep.subr.mxu0 0.0
        %415 = vmatpush2.msra.mxu0 0.0
        %416 = vmatprep.subr.mxu0 0.0
        %417 = vmatpush2.msra.mxu0 0.0
        %418 = vmatprep.subr.mxu0 0.0
        %419 = vmatpush2.msra.mxu0 0.0
        %420 = vmatprep.subr.mxu0 0.0
        %421 = vmatpush2.msra.mxu0 0.0
        %422 = vmatprep.mubr.f32.mxu0 0.0
        %v423 = vand.u32 %v352, 4294901760
        %v424 = vsub.f32 %v352, %v423
        %v425 = vand.u32 %v424, 4294901760
        %v426 = vsub.f32 %v424, %v425
        %v427 = vand.u32 %v426, 4294901760
        %428 = vmatmul.mubr.f32.gmra.mxu0 %v427
        %v429 = vpop.f32.mrf.mxu0
        %v430 = vadd.f32 0.0, %v429
        %v431 = vpop.f32.mrf.mxu0
        %432 = vmatprep.mubr.f32.mxu0 0.0
        %v433 = vand.u32 %v355, 4294901760
        %v434 = vsub.f32 %v355, %v433
        %v435 = vand.u32 %v434, 4294901760
        %v436 = vsub.f32 %v434, %v435
        %v437 = vand.u32 %v436, 4294901760
        %438 = vmatmul.mubr.f32.gmra.mxu0 %v437
        %v439 = vpop.f32.mrf.mxu0
        %v440 = vadd.f32 0.0, %v439
        %v441 = vpop.f32.mrf.mxu0
        %442 = vdwg.mxu0
        %443 = vmatprep.subr.mxu0 0.0
        %444 = vmatpush1.msra.mxu0 0.0
        %445 = vmatprep.subr.mxu0 0.0
        %446 = vmatpush1.msra.mxu0 0.0
        %447 = vmatprep.subr.mxu0 0.0
        %448 = vmatpush1.msra.mxu0 0.0
        %449 = vmatprep.subr.mxu0 0.0
        %450 = vmatpush1.msra.mxu0 0.0
        %451 = vmatprep.subr.mxu0 0.0
        %452 = vmatpush1.msra.mxu0 0.0
        %453 = vmatprep.subr.mxu0 0.0
        %454 = vmatpush1.msra.mxu0 0.0
        %455 = vmatprep.subr.mxu0 0.0
        %456 = vmatpush1.msra.mxu0 0.0
        %457 = vmatprep.subr.mxu0 0.0
        %458 = vmatpush1.msra.mxu0 0.0
        %459 = vmatprep.subr.mxu0 0.0
        %460 = vmatpush1.msra.mxu0 0.0
        %461 = vmatprep.subr.mxu0 0.0
        %462 = vmatpush1.msra.mxu0 0.0
        %463 = vmatprep.subr.mxu0 0.0
        %464 = vmatpush1.msra.mxu0 0.0
        %465 = vmatprep.subr.mxu0 0.0
        %466 = vmatpush1.msra.mxu0 0.0
        %467 = vmatprep.subr.mxu0 0.0
        %468 = vmatpush1.msra.mxu0 0.0
        %469 = vmatprep.subr.mxu0 0.0
        %470 = vmatpush1.msra.mxu0 0.0
        %471 = vmatprep.subr.mxu0 0.0
        %472 = vmatpush1.msra.mxu0 0.0
        %473 = vmatprep.subr.mxu0 0.0
        %v474 = vand.u32 %v349, 4294901760
        %v475 = vsub.f32 %v349, %v474
        %v476 = vand.u32 %v475, 4294901760
        %v477 = vsub.f32 %v475, %v476
        %v478 = vand.u32 %v477, 4294901760
        %479 = vmatpush1.msra.mxu0 %v478
        %480 = vmatprep.subr.mxu0 0.0
        %481 = vmatpush2.msra.mxu0 0.0
        %482 = vmatprep.subr.mxu0 0.0
        %483 = vmatpush2.msra.mxu0 0.0
        %484 = vmatprep.subr.mxu0 0.0
        %485 = vmatpush2.msra.mxu0 0.0
        %486 = vmatprep.subr.mxu0 0.0
        %487 = vmatpush2.msra.mxu0 0.0
        %488 = vmatprep.subr.mxu0 0.0
        %489 = vmatpush2.msra.mxu0 0.0
        %490 = vmatprep.subr.mxu0 0.0
        %491 = vmatpush2.msra.mxu0 0.0
        %492 = vmatprep.subr.mxu0 0.0
        %493 = vmatpush2.msra.mxu0 0.0
        %494 = vmatprep.subr.mxu0 0.0
        %495 = vmatpush2.msra.mxu0 0.0
        %496 = vmatprep.subr.mxu0 0.0
        %497 = vmatpush2.msra.mxu0 0.0
        %498 = vmatprep.subr.mxu0 0.0
        %499 = vmatpush2.msra.mxu0 0.0
        %500 = vmatprep.subr.mxu0 0.0
        %501 = vmatpush2.msra.mxu0 0.0
        %502 = vmatprep.subr.mxu0 0.0
        %503 = vmatpush2.msra.mxu0 0.0
        %504 = vmatprep.subr.mxu0 0.0
        %505 = vmatpush2.msra.mxu0 0.0
        %506 = vmatprep.subr.mxu0 0.0
        %507 = vmatpush2.msra.mxu0 0.0
        %508 = vmatprep.subr.mxu0 0.0
        %509 = vmatpush2.msra.mxu0 0.0
        %510 = vmatprep.subr.mxu0 0.0
        %511 = vmatpush2.msra.mxu0 0.0
        %512 = vmatprep.mubr.f32.mxu0 0.0
        %v513 = vand.u32 %v352, 4294901760
        %514 = vmatmul.mubr.f32.gmra.mxu0 %v513
        %v515 = vpop.f32.mrf.mxu0
        %v516 = vadd.f32 %v430, %v515
        %v517 = vpop.f32.mrf.mxu0
        %518 = vmatprep.mubr.f32.mxu0 0.0
        %v519 = vand.u32 %v355, 4294901760
        %520 = vmatmul.mubr.f32.gmra.mxu0 %v519
        %v521 = vpop.f32.mrf.mxu0
        %v522 = vadd.f32 %v440, %v521
        %v523 = vpop.f32.mrf.mxu0
        %524 = vdwg.mxu0
        %525 = vmatprep.subr.mxu0 0.0
        %526 = vmatpush1.msra.mxu0 0.0
        %527 = vmatprep.subr.mxu0 0.0
        %528 = vmatpush1.msra.mxu0 0.0
        %529 = vmatprep.subr.mxu0 0.0
        %530 = vmatpush1.msra.mxu0 0.0
        %531 = vmatprep.subr.mxu0 0.0
        %532 = vmatpush1.msra.mxu0 0.0
        %533 = vmatprep.subr.mxu0 0.0
        %534 = vmatpush1.msra.mxu0 0.0
        %535 = vmatprep.subr.mxu0 0.0
        %536 = vmatpush1.msra.mxu0 0.0
        %537 = vmatprep.subr.mxu0 0.0
        %538 = vmatpush1.msra.mxu0 0.0
        %539 = vmatprep.subr.mxu0 0.0
        %540 = vmatpush1.msra.mxu0 0.0
        %541 = vmatprep.subr.mxu0 0.0
        %542 = vmatpush1.msra.mxu0 0.0
        %543 = vmatprep.subr.mxu0 0.0
        %544 = vmatpush1.msra.mxu0 0.0
        %545 = vmatprep.subr.mxu0 0.0
        %546 = vmatpush1.msra.mxu0 0.0
        %547 = vmatprep.subr.mxu0 0.0
        %548 = vmatpush1.msra.mxu0 0.0
        %549 = vmatprep.subr.mxu0 0.0
        %550 = vmatpush1.msra.mxu0 0.0
        %551 = vmatprep.subr.mxu0 0.0
        %552 = vmatpush1.msra.mxu0 0.0
        %553 = vmatprep.subr.mxu0 0.0
        %554 = vmatpush1.msra.mxu0 0.0
        %555 = vmatprep.subr.mxu0 0.0
        %v556 = vand.u32 %v349, 4294901760
        %v557 = vsub.f32 %v349, %v556
        %558 = vmatpush1.msra.mxu0 %v557
        %559 = vmatprep.subr.mxu0 0.0
        %560 = vmatpush2.msra.mxu0 0.0
        %561 = vmatprep.subr.mxu0 0.0
        %562 = vmatpush2.msra.mxu0 0.0
        %563 = vmatprep.subr.mxu0 0.0
        %564 = vmatpush2.msra.mxu0 0.0
        %565 = vmatprep.subr.mxu0 0.0
        %566 = vmatpush2.msra.mxu0 0.0
        %567 = vmatprep.subr.mxu0 0.0
        %568 = vmatpush2.msra.mxu0 0.0
        %569 = vmatprep.subr.mxu0 0.0
        %570 = vmatpush2.msra.mxu0 0.0
        %571 = vmatprep.subr.mxu0 0.0
        %572 = vmatpush2.msra.mxu0 0.0
        %573 = vmatprep.subr.mxu0 0.0
        %574 = vmatpush2.msra.mxu0 0.0
        %575 = vmatprep.subr.mxu0 0.0
        %576 = vmatpush2.msra.mxu0 0.0
        %577 = vmatprep.subr.mxu0 0.0
        %578 = vmatpush2.msra.mxu0 0.0
        %579 = vmatprep.subr.mxu0 0.0
        %580 = vmatpush2.msra.mxu0 0.0
        %581 = vmatprep.subr.mxu0 0.0
        %582 = vmatpush2.msra.mxu0 0.0
        %583 = vmatprep.subr.mxu0 0.0
        %584 = vmatpush2.msra.mxu0 0.0
        %585 = vmatprep.subr.mxu0 0.0
        %586 = vmatpush2.msra.mxu0 0.0
        %587 = vmatprep.subr.mxu0 0.0
        %588 = vmatpush2.msra.mxu0 0.0
        %589 = vmatprep.subr.mxu0 0.0
        %590 = vmatpush2.msra.mxu0 0.0
        %591 = vmatprep.mubr.f32.mxu0 0.0
        %v592 = vand.u32 %v352, 4294901760
        %v593 = vsub.f32 %v352, %v592
        %594 = vmatmul.mubr.f32.gmra.mxu0 %v593
        %v595 = vpop.f32.mrf.mxu0
        %v596 = vadd.f32 %v516, %v595
        %v597 = vpop.f32.mrf.mxu0
        %598 = vmatprep.mubr.f32.mxu0 0.0
        %v599 = vand.u32 %v355, 4294901760
        %v600 = vsub.f32 %v355, %v599
        %601 = vmatmul.mubr.f32.gmra.mxu0 %v600
        %v602 = vpop.f32.mrf.mxu0
        %v603 = vadd.f32 %v522, %v602
        %v604 = vpop.f32.mrf.mxu0
        %605 = vdwg.mxu0
        %606 = vmatprep.subr.mxu0 0.0
        %607 = vmatpush1.msra.mxu0 0.0
        %608 = vmatprep.subr.mxu0 0.0
        %609 = vmatpush1.msra.mxu0 0.0
        %610 = vmatprep.subr.mxu0 0.0
        %611 = vmatpush1.msra.mxu0 0.0
        %612 = vmatprep.subr.mxu0 0.0
        %613 = vmatpush1.msra.mxu0 0.0
        %614 = vmatprep.subr.mxu0 0.0
        %615 = vmatpush1.msra.mxu0 0.0
        %616 = vmatprep.subr.mxu0 0.0
        %617 = vmatpush1.msra.mxu0 0.0
        %618 = vmatprep.subr.mxu0 0.0
        %619 = vmatpush1.msra.mxu0 0.0
        %620 = vmatprep.subr.mxu0 0.0
        %621 = vmatpush1.msra.mxu0 0.0
        %622 = vmatprep.subr.mxu0 0.0
        %623 = vmatpush1.msra.mxu0 0.0
        %624 = vmatprep.subr.mxu0 0.0
        %625 = vmatpush1.msra.mxu0 0.0
        %626 = vmatprep.subr.mxu0 0.0
        %627 = vmatpush1.msra.mxu0 0.0
        %628 = vmatprep.subr.mxu0 0.0
        %629 = vmatpush1.msra.mxu0 0.0
        %630 = vmatprep.subr.mxu0 0.0
        %631 = vmatpush1.msra.mxu0 0.0
        %632 = vmatprep.subr.mxu0 0.0
        %633 = vmatpush1.msra.mxu0 0.0
        %634 = vmatprep.subr.mxu0 0.0
        %635 = vmatpush1.msra.mxu0 0.0
        %636 = vmatprep.subr.mxu0 0.0
        %v637 = vand.u32 %v349, 4294901760
        %638 = vmatpush1.msra.mxu0 %v637
        %639 = vmatprep.subr.mxu0 0.0
        %640 = vmatpush2.msra.mxu0 0.0
        %641 = vmatprep.subr.mxu0 0.0
        %642 = vmatpush2.msra.mxu0 0.0
        %643 = vmatprep.subr.mxu0 0.0
        %644 = vmatpush2.msra.mxu0 0.0
        %645 = vmatprep.subr.mxu0 0.0
        %646 = vmatpush2.msra.mxu0 0.0
        %647 = vmatprep.subr.mxu0 0.0
        %648 = vmatpush2.msra.mxu0 0.0
        %649 = vmatprep.subr.mxu0 0.0
        %650 = vmatpush2.msra.mxu0 0.0
        %651 = vmatprep.subr.mxu0 0.0
        %652 = vmatpush2.msra.mxu0 0.0
        %653 = vmatprep.subr.mxu0 0.0
        %654 = vmatpush2.msra.mxu0 0.0
        %655 = vmatprep.subr.mxu0 0.0
        %656 = vmatpush2.msra.mxu0 0.0
        %657 = vmatprep.subr.mxu0 0.0
        %658 = vmatpush2.msra.mxu0 0.0
        %659 = vmatprep.subr.mxu0 0.0
        %660 = vmatpush2.msra.mxu0 0.0
        %661 = vmatprep.subr.mxu0 0.0
        %662 = vmatpush2.msra.mxu0 0.0
        %663 = vmatprep.subr.mxu0 0.0
        %664 = vmatpush2.msra.mxu0 0.0
        %665 = vmatprep.subr.mxu0 0.0
        %666 = vmatpush2.msra.mxu0 0.0
        %667 = vmatprep.subr.mxu0 0.0
        %668 = vmatpush2.msra.mxu0 0.0
        %669 = vmatprep.subr.mxu0 0.0
        %670 = vmatpush2.msra.mxu0 0.0
        %671 = vmatprep.mubr.f32.mxu0 0.0
        %v672 = vand.u32 %v352, 4294901760
        %v673 = vsub.f32 %v352, %v672
        %v674 = vand.u32 %v673, 4294901760
        %675 = vmatmul.mubr.f32.gmra.mxu0 %v674
        %v676 = vpop.f32.mrf.mxu0
        %v677 = vadd.f32 %v596, %v676
        %v678 = vpop.f32.mrf.mxu0
        %679 = vmatprep.mubr.f32.mxu0 0.0
        %v680 = vand.u32 %v355, 4294901760
        %v681 = vsub.f32 %v355, %v680
        %v682 = vand.u32 %v681, 4294901760
        %683 = vmatmul.mubr.f32.gmra.mxu0 %v682
        %v684 = vpop.f32.mrf.mxu0
        %v685 = vadd.f32 %v603, %v684
        %v686 = vpop.f32.mrf.mxu0
        %687 = vdwg.mxu0
        %688 = vmatprep.subr.mxu0 0.0
        %689 = vmatpush1.msra.mxu0 0.0
        %690 = vmatprep.subr.mxu0 0.0
        %691 = vmatpush1.msra.mxu0 0.0
        %692 = vmatprep.subr.mxu0 0.0
        %693 = vmatpush1.msra.mxu0 0.0
        %694 = vmatprep.subr.mxu0 0.0
        %695 = vmatpush1.msra.mxu0 0.0
        %696 = vmatprep.subr.mxu0 0.0
        %697 = vmatpush1.msra.mxu0 0.0
        %698 = vmatprep.subr.mxu0 0.0
        %699 = vmatpush1.msra.mxu0 0.0
        %700 = vmatprep.subr.mxu0 0.0
        %701 = vmatpush1.msra.mxu0 0.0
        %702 = vmatprep.subr.mxu0 0.0
        %703 = vmatpush1.msra.mxu0 0.0
        %704 = vmatprep.subr.mxu0 0.0
        %705 = vmatpush1.msra.mxu0 0.0
        %706 = vmatprep.subr.mxu0 0.0
        %707 = vmatpush1.msra.mxu0 0.0
        %708 = vmatprep.subr.mxu0 0.0
        %709 = vmatpush1.msra.mxu0 0.0
        %710 = vmatprep.subr.mxu0 0.0
        %711 = vmatpush1.msra.mxu0 0.0
        %712 = vmatprep.subr.mxu0 0.0
        %713 = vmatpush1.msra.mxu0 0.0
        %714 = vmatprep.subr.mxu0 0.0
        %715 = vmatpush1.msra.mxu0 0.0
        %716 = vmatprep.subr.mxu0 0.0
        %717 = vmatpush1.msra.mxu0 0.0
        %718 = vmatprep.subr.mxu0 0.0
        %v719 = vand.u32 %v349, 4294901760
        %v720 = vsub.f32 %v349, %v719
        %v721 = vand.u32 %v720, 4294901760
        %722 = vmatpush1.msra.mxu0 %v721
        %723 = vmatprep.subr.mxu0 0.0
        %724 = vmatpush2.msra.mxu0 0.0
        %725 = vmatprep.subr.mxu0 0.0
        %726 = vmatpush2.msra.mxu0 0.0
        %727 = vmatprep.subr.mxu0 0.0
        %728 = vmatpush2.msra.mxu0 0.0
        %729 = vmatprep.subr.mxu0 0.0
        %730 = vmatpush2.msra.mxu0 0.0
        %731 = vmatprep.subr.mxu0 0.0
        %732 = vmatpush2.msra.mxu0 0.0
        %733 = vmatprep.subr.mxu0 0.0
        %734 = vmatpush2.msra.mxu0 0.0
        %735 = vmatprep.subr.mxu0 0.0
        %736 = vmatpush2.msra.mxu0 0.0
        %737 = vmatprep.subr.mxu0 0.0
        %738 = vmatpush2.msra.mxu0 0.0
        %739 = vmatprep.subr.mxu0 0.0
        %740 = vmatpush2.msra.mxu0 0.0
        %741 = vmatprep.subr.mxu0 0.0
        %742 = vmatpush2.msra.mxu0 0.0
        %743 = vmatprep.subr.mxu0 0.0
        %744 = vmatpush2.msra.mxu0 0.0
        %745 = vmatprep.subr.mxu0 0.0
        %746 = vmatpush2.msra.mxu0 0.0
        %747 = vmatprep.subr.mxu0 0.0
        %748 = vmatpush2.msra.mxu0 0.0
        %749 = vmatprep.subr.mxu0 0.0
        %750 = vmatpush2.msra.mxu0 0.0
        %751 = vmatprep.subr.mxu0 0.0
        %752 = vmatpush2.msra.mxu0 0.0
        %753 = vmatprep.subr.mxu0 0.0
        %754 = vmatpush2.msra.mxu0 0.0
        %755 = vmatprep.mubr.f32.mxu0 0.0
        %v756 = vand.u32 %v352, 4294901760
        %757 = vmatmul.mubr.f32.gmra.mxu0 %v756
        %v758 = vpop.f32.mrf.mxu0
        %v759 = vadd.f32 %v677, %v758
        %v760 = vpop.f32.mrf.mxu0
        %761 = vmatprep.mubr.f32.mxu0 0.0
        %v762 = vand.u32 %v355, 4294901760
        %763 = vmatmul.mubr.f32.gmra.mxu0 %v762
        %v764 = vpop.f32.mrf.mxu0
        %v765 = vadd.f32 %v685, %v764
        %v766 = vpop.f32.mrf.mxu0
        %767 = vdwg.mxu0
        %768 = vmatprep.subr.mxu0 0.0
        %769 = vmatpush1.msra.mxu0 0.0
        %770 = vmatprep.subr.mxu0 0.0
        %771 = vmatpush1.msra.mxu0 0.0
        %772 = vmatprep.subr.mxu0 0.0
        %773 = vmatpush1.msra.mxu0 0.0
        %774 = vmatprep.subr.mxu0 0.0
        %775 = vmatpush1.msra.mxu0 0.0
        %776 = vmatprep.subr.mxu0 0.0
        %777 = vmatpush1.msra.mxu0 0.0
        %778 = vmatprep.subr.mxu0 0.0
        %779 = vmatpush1.msra.mxu0 0.0
        %780 = vmatprep.subr.mxu0 0.0
        %781 = vmatpush1.msra.mxu0 0.0
        %782 = vmatprep.subr.mxu0 0.0
        %783 = vmatpush1.msra.mxu0 0.0
        %784 = vmatprep.subr.mxu0 0.0
        %785 = vmatpush1.msra.mxu0 0.0
        %786 = vmatprep.subr.mxu0 0.0
        %787 = vmatpush1.msra.mxu0 0.0
        %788 = vmatprep.subr.mxu0 0.0
        %789 = vmatpush1.msra.mxu0 0.0
        %790 = vmatprep.subr.mxu0 0.0
        %791 = vmatpush1.msra.mxu0 0.0
        %792 = vmatprep.subr.mxu0 0.0
        %793 = vmatpush1.msra.mxu0 0.0
        %794 = vmatprep.subr.mxu0 0.0
        %795 = vmatpush1.msra.mxu0 0.0
        %796 = vmatprep.subr.mxu0 0.0
        %797 = vmatpush1.msra.mxu0 0.0
        %798 = vmatprep.subr.mxu0 0.0
        %v799 = vand.u32 %v349, 4294901760
        %800 = vmatpush1.msra.mxu0 %v799
        %801 = vmatprep.subr.mxu0 0.0
        %802 = vmatpush2.msra.mxu0 0.0
        %803 = vmatprep.subr.mxu0 0.0
        %804 = vmatpush2.msra.mxu0 0.0
        %805 = vmatprep.subr.mxu0 0.0
        %806 = vmatpush2.msra.mxu0 0.0
        %807 = vmatprep.subr.mxu0 0.0
        %808 = vmatpush2.msra.mxu0 0.0
        %809 = vmatprep.subr.mxu0 0.0
        %810 = vmatpush2.msra.mxu0 0.0
        %811 = vmatprep.subr.mxu0 0.0
        %812 = vmatpush2.msra.mxu0 0.0
        %813 = vmatprep.subr.mxu0 0.0
        %814 = vmatpush2.msra.mxu0 0.0
        %815 = vmatprep.subr.mxu0 0.0
        %816 = vmatpush2.msra.mxu0 0.0
        %817 = vmatprep.subr.mxu0 0.0
        %818 = vmatpush2.msra.mxu0 0.0
        %819 = vmatprep.subr.mxu0 0.0
        %820 = vmatpush2.msra.mxu0 0.0
        %821 = vmatprep.subr.mxu0 0.0
        %822 = vmatpush2.msra.mxu0 0.0
        %823 = vmatprep.subr.mxu0 0.0
        %824 = vmatpush2.msra.mxu0 0.0
        %825 = vmatprep.subr.mxu0 0.0
        %826 = vmatpush2.msra.mxu0 0.0
        %827 = vmatprep.subr.mxu0 0.0
        %828 = vmatpush2.msra.mxu0 0.0
        %829 = vmatprep.subr.mxu0 0.0
        %830 = vmatpush2.msra.mxu0 0.0
        %831 = vmatprep.subr.mxu0 0.0
        %832 = vmatpush2.msra.mxu0 0.0
        %833 = vmatprep.mubr.f32.mxu0 0.0
        %v834 = vand.u32 %v352, 4294901760
        %835 = vmatmul.mubr.f32.gmra.mxu0 %v834
        %v836 = vpop.f32.mrf.mxu0
        %v837 = vadd.f32 %v759, %v836
        %v838 = vpop.f32.mrf.mxu0
        %839 = vmatprep.mubr.f32.mxu0 0.0
        %v840 = vand.u32 %v355, 4294901760
        %841 = vmatmul.mubr.f32.gmra.mxu0 %v840
        %v842 = vpop.f32.mrf.mxu0
        %v843 = vadd.f32 %v765, %v842
        %v844 = vpop.f32.mrf.mxu0
        %845 = vdwg.mxu0
        %v846 = vld [vmem:[%s3] sm:$0x1]
        %v848 = vlaneseq
        %v849 = vshrl.u32 %v848, 7
        %v850 = vsub.s32 0, %v849
        %v851 = vrot.slane %v846, %v850
        %v853 = vadd.f32 %v837, %v851
        %v854 = vadd.f32 %v843, %v851
        %vm855 = vcmask 31744
        %v856 = vsel %vm855, %v853, -inf
        %857 = vmax.xlane.f32.xlu0 %v856
        %v858 = vpop.xlane.xlu0 %857
        %v859 = vsel %vm855, %v854, -inf
        %860 = vmax.xlane.f32.xlu0 %v859
        %v861 = vpop.xlane.xlu0 %860
        %v862 = vsub.f32 %v853, %v858
        %v863 = vsub.f32 %v854, %v861
        %v864 = vmul.f32 %v862, 1.442695
        %v865 = vpow.pop %v864
        %v866 = vmul.f32 %v863, 1.442695
        %v867 = vpow.pop %v866
        %v868 = vsel %vm855, %v865, 0.0
        %869 = vadd.xlane.f32.xlu0 %v868
        %v870 = vpop.xlane.xlu0 %869
        %v871 = vsel %vm855, %v867, 0.0
        %872 = vadd.xlane.f32.xlu0 %v871
        %v873 = vpop.xlane.xlu0 %872
        %v874 = vrcp.pop %v870
        %v875 = vmul.f32 %v865, %v874
        %v876 = vrcp.pop %v873
        %v877 = vmul.f32 %v867, %v876
        %878 = vxpose.xlu0.b32.start [1/16] %v875, 128
        %879 = vxpose.xlu0.b32.cont [2/16] %v877, 128
        %880 = vxpose.xlu0.b32.cont [3/16] 0.0, 128
        %881 = vxpose.xlu0.b32.cont [4/16] 0.0, 128
        %882 = vxpose.xlu0.b32.cont [5/16] 0.0, 128
        %883 = vxpose.xlu0.b32.cont [6/16] 0.0, 128
        %884 = vxpose.xlu0.b32.cont [7/16] 0.0, 128
        %885 = vxpose.xlu0.b32.cont [8/16] 0.0, 128
        %886 = vxpose.xlu0.b32.cont [9/16] 0.0, 128
        %887 = vxpose.xlu0.b32.cont [10/16] 0.0, 128
        %888 = vxpose.xlu0.b32.cont [11/16] 0.0, 128
        %889 = vxpose.xlu0.b32.cont [12/16] 0.0, 128
        %890 = vxpose.xlu0.b32.cont [13/16] 0.0, 128
        %891 = vxpose.xlu0.b32.cont [14/16] 0.0, 128
        %892 = vxpose.xlu0.b32.cont [15/16] 0.0, 128
        %893 = vxpose.xlu0.b32.end [16/16] 0.0, 128
        %v894 = vpop.trf.xlu0
        %v895 = vpop.trf.xlu0
        %v896 = vpop.trf.xlu0
        %v897 = vpop.trf.xlu0
        %v898 = vpop.trf.xlu0
        %v899 = vpop.trf.xlu0
        %v900 = vpop.trf.xlu0
        %v901 = vpop.trf.xlu0
        %v902 = vpop.trf.xlu0
        %v903 = vpop.trf.xlu0
        %v904 = vpop.trf.xlu0
        %v905 = vpop.trf.xlu0
        %v906 = vpop.trf.xlu0
        %v907 = vpop.trf.xlu0
        %v908 = vpop.trf.xlu0
        %v909 = vpop.trf.xlu0
        %s910 = smul.u32 %s29, 4
        %s911 = scalar_lea.vmem [#allocation2], %s910
        %vm912 = vcmask 125952
        %913 = vst.msk [vmem:[%s911] sm:$0xf] %vm912, %v894
        %v914 = vld [vmem:[#allocation4] sm:$0xf]
        %vm915 = vcmask 130048
        %v917 = vsel %vm915, %v894, 0
        %919 = vmatprep.subr.mxu0 0.0
        %920 = vmatpush1.msra.mxu0 0.0
        %921 = vmatprep.subr.mxu0 0.0
        %922 = vmatpush1.msra.mxu0 0.0
        %923 = vmatprep.subr.mxu0 0.0
        %924 = vmatpush1.msra.mxu0 0.0
        %925 = vmatprep.subr.mxu0 0.0
        %926 = vmatpush1.msra.mxu0 0.0
        %927 = vmatprep.subr.mxu0 0.0
        %928 = vmatpush1.msra.mxu0 0.0
        %929 = vmatprep.subr.mxu0 0.0
        %930 = vmatpush1.msra.mxu0 0.0
        %931 = vmatprep.subr.mxu0 0.0
        %932 = vmatpush1.msra.mxu0 0.0
        %933 = vmatprep.subr.mxu0 0.0
        %934 = vmatpush1.msra.mxu0 0.0
        %935 = vmatprep.subr.mxu0 0.0
        %936 = vmatpush1.msra.mxu0 0.0
        %937 = vmatprep.subr.mxu0 0.0
        %938 = vmatpush1.msra.mxu0 0.0
        %939 = vmatprep.subr.mxu0 0.0
        %940 = vmatpush1.msra.mxu0 0.0
        %941 = vmatprep.subr.mxu0 0.0
        %942 = vmatpush1.msra.mxu0 0.0
        %943 = vmatprep.subr.mxu0 0.0
        %944 = vmatpush1.msra.mxu0 0.0
        %945 = vmatprep.subr.mxu0 0.0
        %946 = vmatpush1.msra.mxu0 0.0
        %947 = vmatprep.subr.mxu0 0.0
        %v948 = vand.u32 %v346, 4294901760
        %949 = vmatpush1.msra.mxu0 %v948
        %950 = vmatprep.subr.mxu0 0.0
        %v951 = vand.u32 %v345, 4294901760
        %952 = vmatpush1.msra.mxu0 %v951
        %953 = vmatprep.subr.mxu0 0.0
        %954 = vmatpush2.msra.mxu0 0.0
        %955 = vmatprep.subr.mxu0 0.0
        %956 = vmatpush2.msra.mxu0 0.0
        %957 = vmatprep.subr.mxu0 0.0
        %958 = vmatpush2.msra.mxu0 0.0
        %959 = vmatprep.subr.mxu0 0.0
        %960 = vmatpush2.msra.mxu0 0.0
        %961 = vmatprep.subr.mxu0 0.0
        %962 = vmatpush2.msra.mxu0 0.0
        %963 = vmatprep.subr.mxu0 0.0
        %964 = vmatpush2.msra.mxu0 0.0
        %965 = vmatprep.subr.mxu0 0.0
        %966 = vmatpush2.msra.mxu0 0.0
        %967 = vmatprep.subr.mxu0 0.0
        %968 = vmatpush2.msra.mxu0 0.0
        %969 = vmatprep.subr.mxu0 0.0
        %970 = vmatpush2.msra.mxu0 0.0
        %971 = vmatprep.subr.mxu0 0.0
        %972 = vmatpush2.msra.mxu0 0.0
        %973 = vmatprep.subr.mxu0 0.0
        %974 = vmatpush2.msra.mxu0 0.0
        %975 = vmatprep.subr.mxu0 0.0
        %976 = vmatpush2.msra.mxu0 0.0
        %977 = vmatprep.subr.mxu0 0.0
        %978 = vmatpush2.msra.mxu0 0.0
        %979 = vmatprep.subr.mxu0 0.0
        %980 = vmatpush2.msra.mxu0 0.0
        %981 = vmatprep.subr.mxu0 0.0
        %982 = vmatpush2.msra.mxu0 0.0
        %983 = vmatprep.subr.mxu0 0.0
        %984 = vmatpush2.msra.mxu0 0.0
        %985 = vmatprep.mubr.f32.mxu0 0.0
        %v986 = vand.u32 %v917, 4294901760
        %v987 = vsub.f32 %v917, %v986
        %v988 = vand.u32 %v987, 4294901760
        %v989 = vsub.f32 %v987, %v988
        %v990 = vand.u32 %v989, 4294901760
        %991 = vmatmul.mubr.f32.gmra.mxu0 %v990
        %v992 = vpop.f32.mrf.mxu0
        %v993 = vadd.f32 0.0, %v992
        %v994 = vpop.f32.mrf.mxu0
        %995 = vdwg.mxu0
        %996 = vmatprep.subr.mxu0 0.0
        %997 = vmatpush1.msra.mxu0 0.0
        %998 = vmatprep.subr.mxu0 0.0
        %999 = vmatpush1.msra.mxu0 0.0
        %1000 = vmatprep.subr.mxu0 0.0
        %1001 = vmatpush1.msra.mxu0 0.0
        %1002 = vmatprep.subr.mxu0 0.0
        %1003 = vmatpush1.msra.mxu0 0.0
        %1004 = vmatprep.subr.mxu0 0.0
        %1005 = vmatpush1.msra.mxu0 0.0
        %1006 = vmatprep.subr.mxu0 0.0
        %1007 = vmatpush1.msra.mxu0 0.0
        %1008 = vmatprep.subr.mxu0 0.0
        %1009 = vmatpush1.msra.mxu0 0.0
        %1010 = vmatprep.subr.mxu0 0.0
        %1011 = vmatpush1.msra.mxu0 0.0
        %1012 = vmatprep.subr.mxu0 0.0
        %1013 = vmatpush1.msra.mxu0 0.0
        %1014 = vmatprep.subr.mxu0 0.0
        %1015 = vmatpush1.msra.mxu0 0.0
        %1016 = vmatprep.subr.mxu0 0.0
        %1017 = vmatpush1.msra.mxu0 0.0
        %1018 = vmatprep.subr.mxu0 0.0
        %1019 = vmatpush1.msra.mxu0 0.0
        %1020 = vmatprep.subr.mxu0 0.0
        %1021 = vmatpush1.msra.mxu0 0.0
        %1022 = vmatprep.subr.mxu0 0.0
        %1023 = vmatpush1.msra.mxu0 0.0
        %1024 = vmatprep.subr.mxu0 0.0
        %v1025 = vand.u32 %v346, 4294901760
        %v1026 = vsub.f32 %v346, %v1025
        %v1027 = vand.u32 %v1026, 4294901760
        %v1028 = vsub.f32 %v1026, %v1027
        %v1029 = vand.u32 %v1028, 4294901760
        %1030 = vmatpush1.msra.mxu0 %v1029
        %1031 = vmatprep.subr.mxu0 0.0
        %v1032 = vand.u32 %v345, 4294901760
        %v1033 = vsub.f32 %v345, %v1032
        %v1034 = vand.u32 %v1033, 4294901760
        %v1035 = vsub.f32 %v1033, %v1034
        %v1036 = vand.u32 %v1035, 4294901760
        %1037 = vmatpush1.msra.mxu0 %v1036
        %1038 = vmatprep.subr.mxu0 0.0
        %1039 = vmatpush2.msra.mxu0 0.0
        %1040 = vmatprep.subr.mxu0 0.0
        %1041 = vmatpush2.msra.mxu0 0.0
        %1042 = vmatprep.subr.mxu0 0.0
        %1043 = vmatpush2.msra.mxu0 0.0
        %1044 = vmatprep.subr.mxu0 0.0
        %1045 = vmatpush2.msra.mxu0 0.0
        %1046 = vmatprep.subr.mxu0 0.0
        %1047 = vmatpush2.msra.mxu0 0.0
        %1048 = vmatprep.subr.mxu0 0.0
        %1049 = vmatpush2.msra.mxu0 0.0
        %1050 = vmatprep.subr.mxu0 0.0
        %1051 = vmatpush2.msra.mxu0 0.0
        %1052 = vmatprep.subr.mxu0 0.0
        %1053 = vmatpush2.msra.mxu0 0.0
        %1054 = vmatprep.subr.mxu0 0.0
        %1055 = vmatpush2.msra.mxu0 0.0
        %1056 = vmatprep.subr.mxu0 0.0
        %1057 = vmatpush2.msra.mxu0 0.0
        %1058 = vmatprep.subr.mxu0 0.0
        %1059 = vmatpush2.msra.mxu0 0.0
        %1060 = vmatprep.subr.mxu0 0.0
        %1061 = vmatpush2.msra.mxu0 0.0
        %1062 = vmatprep.subr.mxu0 0.0
        %1063 = vmatpush2.msra.mxu0 0.0
        %1064 = vmatprep.subr.mxu0 0.0
        %1065 = vmatpush2.msra.mxu0 0.0
        %1066 = vmatprep.subr.mxu0 0.0
        %1067 = vmatpush2.msra.mxu0 0.0
        %1068 = vmatprep.subr.mxu0 0.0
        %1069 = vmatpush2.msra.mxu0 0.0
        %1070 = vmatprep.mubr.f32.mxu0 0.0
        %v1071 = vand.u32 %v917, 4294901760
        %1072 = vmatmul.mubr.f32.gmra.mxu0 %v1071
        %v1073 = vpop.f32.mrf.mxu0
        %v1074 = vadd.f32 %v993, %v1073
        %v1075 = vpop.f32.mrf.mxu0
        %1076 = vdwg.mxu0
        %1077 = vmatprep.subr.mxu0 0.0
        %1078 = vmatpush1.msra.mxu0 0.0
        %1079 = vmatprep.subr.mxu0 0.0
        %1080 = vmatpush1.msra.mxu0 0.0
        %1081 = vmatprep.subr.mxu0 0.0
        %1082 = vmatpush1.msra.mxu0 0.0
        %1083 = vmatprep.subr.mxu0 0.0
        %1084 = vmatpush1.msra.mxu0 0.0
        %1085 = vmatprep.subr.mxu0 0.0
        %1086 = vmatpush1.msra.mxu0 0.0
        %1087 = vmatprep.subr.mxu0 0.0
        %1088 = vmatpush1.msra.mxu0 0.0
        %1089 = vmatprep.subr.mxu0 0.0
        %1090 = vmatpush1.msra.mxu0 0.0
        %1091 = vmatprep.subr.mxu0 0.0
        %1092 = vmatpush1.msra.mxu0 0.0
        %1093 = vmatprep.subr.mxu0 0.0
        %1094 = vmatpush1.msra.mxu0 0.0
        %1095 = vmatprep.subr.mxu0 0.0
        %1096 = vmatpush1.msra.mxu0 0.0
        %1097 = vmatprep.subr.mxu0 0.0
        %1098 = vmatpush1.msra.mxu0 0.0
        %1099 = vmatprep.subr.mxu0 0.0
        %1100 = vmatpush1.msra.mxu0 0.0
        %1101 = vmatprep.subr.mxu0 0.0
        %1102 = vmatpush1.msra.mxu0 0.0
        %1103 = vmatprep.subr.mxu0 0.0
        %1104 = vmatpush1.msra.mxu0 0.0
        %1105 = vmatprep.subr.mxu0 0.0
        %v1106 = vand.u32 %v346, 4294901760
        %v1107 = vsub.f32 %v346, %v1106
        %1108 = vmatpush1.msra.mxu0 %v1107
        %1109 = vmatprep.subr.mxu0 0.0
        %v1110 = vand.u32 %v345, 4294901760
        %v1111 = vsub.f32 %v345, %v1110
        %1112 = vmatpush1.msra.mxu0 %v1111
        %1113 = vmatprep.subr.mxu0 0.0
        %1114 = vmatpush2.msra.mxu0 0.0
        %1115 = vmatprep.subr.mxu0 0.0
        %1116 = vmatpush2.msra.mxu0 0.0
        %1117 = vmatprep.subr.mxu0 0.0
        %1118 = vmatpush2.msra.mxu0 0.0
        %1119 = vmatprep.subr.mxu0 0.0
        %1120 = vmatpush2.msra.mxu0 0.0
        %1121 = vmatprep.subr.mxu0 0.0
        %1122 = vmatpush2.msra.mxu0 0.0
        %1123 = vmatprep.subr.mxu0 0.0
        %1124 = vmatpush2.msra.mxu0 0.0
        %1125 = vmatprep.subr.mxu0 0.0
        %1126 = vmatpush2.msra.mxu0 0.0
        %1127 = vmatprep.subr.mxu0 0.0
        %1128 = vmatpush2.msra.mxu0 0.0
        %1129 = vmatprep.subr.mxu0 0.0
        %1130 = vmatpush2.msra.mxu0 0.0
        %1131 = vmatprep.subr.mxu0 0.0
        %1132 = vmatpush2.msra.mxu0 0.0
        %1133 = vmatprep.subr.mxu0 0.0
        %1134 = vmatpush2.msra.mxu0 0.0
        %1135 = vmatprep.subr.mxu0 0.0
        %1136 = vmatpush2.msra.mxu0 0.0
        %1137 = vmatprep.subr.mxu0 0.0
        %1138 = vmatpush2.msra.mxu0 0.0
        %1139 = vmatprep.subr.mxu0 0.0
        %1140 = vmatpush2.msra.mxu0 0.0
        %1141 = vmatprep.subr.mxu0 0.0
        %1142 = vmatpush2.msra.mxu0 0.0
        %1143 = vmatprep.subr.mxu0 0.0
        %1144 = vmatpush2.msra.mxu0 0.0
        %1145 = vmatprep.mubr.f32.mxu0 0.0
        %v1146 = vand.u32 %v917, 4294901760
        %v1147 = vsub.f32 %v917, %v1146
        %1148 = vmatmul.mubr.f32.gmra.mxu0 %v1147
        %v1149 = vpop.f32.mrf.mxu0
        %v1150 = vadd.f32 %v1074, %v1149
        %v1151 = vpop.f32.mrf.mxu0
        %1152 = vdwg.mxu0
        %1153 = vmatprep.subr.mxu0 0.0
        %1154 = vmatpush1.msra.mxu0 0.0
        %1155 = vmatprep.subr.mxu0 0.0
        %1156 = vmatpush1.msra.mxu0 0.0
        %1157 = vmatprep.subr.mxu0 0.0
        %1158 = vmatpush1.msra.mxu0 0.0
        %1159 = vmatprep.subr.mxu0 0.0
        %1160 = vmatpush1.msra.mxu0 0.0
        %1161 = vmatprep.subr.mxu0 0.0
        %1162 = vmatpush1.msra.mxu0 0.0
        %1163 = vmatprep.subr.mxu0 0.0
        %1164 = vmatpush1.msra.mxu0 0.0
        %1165 = vmatprep.subr.mxu0 0.0
        %1166 = vmatpush1.msra.mxu0 0.0
        %1167 = vmatprep.subr.mxu0 0.0
        %1168 = vmatpush1.msra.mxu0 0.0
        %1169 = vmatprep.subr.mxu0 0.0
        %1170 = vmatpush1.msra.mxu0 0.0
        %1171 = vmatprep.subr.mxu0 0.0
        %1172 = vmatpush1.msra.mxu0 0.0
        %1173 = vmatprep.subr.mxu0 0.0
        %1174 = vmatpush1.msra.mxu0 0.0
        %1175 = vmatprep.subr.mxu0 0.0
        %1176 = vmatpush1.msra.mxu0 0.0
        %1177 = vmatprep.subr.mxu0 0.0
        %1178 = vmatpush1.msra.mxu0 0.0
        %1179 = vmatprep.subr.mxu0 0.0
        %1180 = vmatpush1.msra.mxu0 0.0
        %1181 = vmatprep.subr.mxu0 0.0
        %v1182 = vand.u32 %v346, 4294901760
        %1183 = vmatpush1.msra.mxu0 %v1182
        %1184 = vmatprep.subr.mxu0 0.0
        %v1185 = vand.u32 %v345, 4294901760
        %1186 = vmatpush1.msra.mxu0 %v1185
        %1187 = vmatprep.subr.mxu0 0.0
        %1188 = vmatpush2.msra.mxu0 0.0
        %1189 = vmatprep.subr.mxu0 0.0
        %1190 = vmatpush2.msra.mxu0 0.0
        %1191 = vmatprep.subr.mxu0 0.0
        %1192 = vmatpush2.msra.mxu0 0.0
        %1193 = vmatprep.subr.mxu0 0.0
        %1194 = vmatpush2.msra.mxu0 0.0
        %1195 = vmatprep.subr.mxu0 0.0
        %1196 = vmatpush2.msra.mxu0 0.0
        %1197 = vmatprep.subr.mxu0 0.0
        %1198 = vmatpush2.msra.mxu0 0.0
        %1199 = vmatprep.subr.mxu0 0.0
        %1200 = vmatpush2.msra.mxu0 0.0
        %1201 = vmatprep.subr.mxu0 0.0
        %1202 = vmatpush2.msra.mxu0 0.0
        %1203 = vmatprep.subr.mxu0 0.0
        %1204 = vmatpush2.msra.mxu0 0.0
        %1205 = vmatprep.subr.mxu0 0.0
        %1206 = vmatpush2.msra.mxu0 0.0
        %1207 = vmatprep.subr.mxu0 0.0
        %1208 = vmatpush2.msra.mxu0 0.0
        %1209 = vmatprep.subr.mxu0 0.0
        %1210 = vmatpush2.msra.mxu0 0.0
        %1211 = vmatprep.subr.mxu0 0.0
        %1212 = vmatpush2.msra.mxu0 0.0
        %1213 = vmatprep.subr.mxu0 0.0
        %1214 = vmatpush2.msra.mxu0 0.0
        %1215 = vmatprep.subr.mxu0 0.0
        %1216 = vmatpush2.msra.mxu0 0.0
        %1217 = vmatprep.subr.mxu0 0.0
        %1218 = vmatpush2.msra.mxu0 0.0
        %1219 = vmatprep.mubr.f32.mxu0 0.0
        %v1220 = vand.u32 %v917, 4294901760
        %v1221 = vsub.f32 %v917, %v1220
        %v1222 = vand.u32 %v1221, 4294901760
        %1223 = vmatmul.mubr.f32.gmra.mxu0 %v1222
        %v1224 = vpop.f32.mrf.mxu0
        %v1225 = vadd.f32 %v1150, %v1224
        %v1226 = vpop.f32.mrf.mxu0
        %1227 = vdwg.mxu0
        %1228 = vmatprep.subr.mxu0 0.0
        %1229 = vmatpush1.msra.mxu0 0.0
        %1230 = vmatprep.subr.mxu0 0.0
        %1231 = vmatpush1.msra.mxu0 0.0
        %1232 = vmatprep.subr.mxu0 0.0
        %1233 = vmatpush1.msra.mxu0 0.0
        %1234 = vmatprep.subr.mxu0 0.0
        %1235 = vmatpush1.msra.mxu0 0.0
        %1236 = vmatprep.subr.mxu0 0.0
        %1237 = vmatpush1.msra.mxu0 0.0
        %1238 = vmatprep.subr.mxu0 0.0
        %1239 = vmatpush1.msra.mxu0 0.0
        %1240 = vmatprep.subr.mxu0 0.0
        %1241 = vmatpush1.msra.mxu0 0.0
        %1242 = vmatprep.subr.mxu0 0.0
        %1243 = vmatpush1.msra.mxu0 0.0
        %1244 = vmatprep.subr.mxu0 0.0
        %1245 = vmatpush1.msra.mxu0 0.0
        %1246 = vmatprep.subr.mxu0 0.0
        %1247 = vmatpush1.msra.mxu0 0.0
        %1248 = vmatprep.subr.mxu0 0.0
        %1249 = vmatpush1.msra.mxu0 0.0
        %1250 = vmatprep.subr.mxu0 0.0
        %1251 = vmatpush1.msra.mxu0 0.0
        %1252 = vmatprep.subr.mxu0 0.0
        %1253 = vmatpush1.msra.mxu0 0.0
        %1254 = vmatprep.subr.mxu0 0.0
        %1255 = vmatpush1.msra.mxu0 0.0
        %1256 = vmatprep.subr.mxu0 0.0
        %v1257 = vand.u32 %v346, 4294901760
        %v1258 = vsub.f32 %v346, %v1257
        %v1259 = vand.u32 %v1258, 4294901760
        %1260 = vmatpush1.msra.mxu0 %v1259
        %1261 = vmatprep.subr.mxu0 0.0
        %v1262 = vand.u32 %v345, 4294901760
        %v1263 = vsub.f32 %v345, %v1262
        %v1264 = vand.u32 %v1263, 4294901760
        %1265 = vmatpush1.msra.mxu0 %v1264
        %1266 = vmatprep.subr.mxu0 0.0
        %1267 = vmatpush2.msra.mxu0 0.0
        %1268 = vmatprep.subr.mxu0 0.0
        %1269 = vmatpush2.msra.mxu0 0.0
        %1270 = vmatprep.subr.mxu0 0.0
        %1271 = vmatpush2.msra.mxu0 0.0
        %1272 = vmatprep.subr.mxu0 0.0
        %1273 = vmatpush2.msra.mxu0 0.0
        %1274 = vmatprep.subr.mxu0 0.0
        %1275 = vmatpush2.msra.mxu0 0.0
        %1276 = vmatprep.subr.mxu0 0.0
        %1277 = vmatpush2.msra.mxu0 0.0
        %1278 = vmatprep.subr.mxu0 0.0
        %1279 = vmatpush2.msra.mxu0 0.0
        %1280 = vmatprep.subr.mxu0 0.0
        %1281 = vmatpush2.msra.mxu0 0.0
        %1282 = vmatprep.subr.mxu0 0.0
        %1283 = vmatpush2.msra.mxu0 0.0
        %1284 = vmatprep.subr.mxu0 0.0
        %1285 = vmatpush2.msra.mxu0 0.0
        %1286 = vmatprep.subr.mxu0 0.0
        %1287 = vmatpush2.msra.mxu0 0.0
        %1288 = vmatprep.subr.mxu0 0.0
        %1289 = vmatpush2.msra.mxu0 0.0
        %1290 = vmatprep.subr.mxu0 0.0
        %1291 = vmatpush2.msra.mxu0 0.0
        %1292 = vmatprep.subr.mxu0 0.0
        %1293 = vmatpush2.msra.mxu0 0.0
        %1294 = vmatprep.subr.mxu0 0.0
        %1295 = vmatpush2.msra.mxu0 0.0
        %1296 = vmatprep.subr.mxu0 0.0
        %1297 = vmatpush2.msra.mxu0 0.0
        %1298 = vmatprep.mubr.f32.mxu0 0.0
        %v1299 = vand.u32 %v917, 4294901760
        %1300 = vmatmul.mubr.f32.gmra.mxu0 %v1299
        %v1301 = vpop.f32.mrf.mxu0
        %v1302 = vadd.f32 %v1225, %v1301
        %v1303 = vpop.f32.mrf.mxu0
        %1304 = vdwg.mxu0
        %1305 = vmatprep.subr.mxu0 0.0
        %1306 = vmatpush1.msra.mxu0 0.0
        %1307 = vmatprep.subr.mxu0 0.0
        %1308 = vmatpush1.msra.mxu0 0.0
        %1309 = vmatprep.subr.mxu0 0.0
        %1310 = vmatpush1.msra.mxu0 0.0
        %1311 = vmatprep.subr.mxu0 0.0
        %1312 = vmatpush1.msra.mxu0 0.0
        %1313 = vmatprep.subr.mxu0 0.0
        %1314 = vmatpush1.msra.mxu0 0.0
        %1315 = vmatprep.subr.mxu0 0.0
        %1316 = vmatpush1.msra.mxu0 0.0
        %1317 = vmatprep.subr.mxu0 0.0
        %1318 = vmatpush1.msra.mxu0 0.0
        %1319 = vmatprep.subr.mxu0 0.0
        %1320 = vmatpush1.msra.mxu0 0.0
        %1321 = vmatprep.subr.mxu0 0.0
        %1322 = vmatpush1.msra.mxu0 0.0
        %1323 = vmatprep.subr.mxu0 0.0
        %1324 = vmatpush1.msra.mxu0 0.0
        %1325 = vmatprep.subr.mxu0 0.0
        %1326 = vmatpush1.msra.mxu0 0.0
        %1327 = vmatprep.subr.mxu0 0.0
        %1328 = vmatpush1.msra.mxu0 0.0
        %1329 = vmatprep.subr.mxu0 0.0
        %1330 = vmatpush1.msra.mxu0 0.0
        %1331 = vmatprep.subr.mxu0 0.0
        %1332 = vmatpush1.msra.mxu0 0.0
        %1333 = vmatprep.subr.mxu0 0.0
        %v1334 = vand.u32 %v346, 4294901760
        %1335 = vmatpush1.msra.mxu0 %v1334
        %1336 = vmatprep.subr.mxu0 0.0
        %v1337 = vand.u32 %v345, 4294901760
        %1338 = vmatpush1.msra.mxu0 %v1337
        %1339 = vmatprep.subr.mxu0 0.0
        %1340 = vmatpush2.msra.mxu0 0.0
        %1341 = vmatprep.subr.mxu0 0.0
        %1342 = vmatpush2.msra.mxu0 0.0
        %1343 = vmatprep.subr.mxu0 0.0
        %1344 = vmatpush2.msra.mxu0 0.0
        %1345 = vmatprep.subr.mxu0 0.0
        %1346 = vmatpush2.msra.mxu0 0.0
        %1347 = vmatprep.subr.mxu0 0.0
        %1348 = vmatpush2.msra.mxu0 0.0
        %1349 = vmatprep.subr.mxu0 0.0
        %1350 = vmatpush2.msra.mxu0 0.0
        %1351 = vmatprep.subr.mxu0 0.0
        %1352 = vmatpush2.msra.mxu0 0.0
        %1353 = vmatprep.subr.mxu0 0.0
        %1354 = vmatpush2.msra.mxu0 0.0
        %1355 = vmatprep.subr.mxu0 0.0
        %1356 = vmatpush2.msra.mxu0 0.0
        %1357 = vmatprep.subr.mxu0 0.0
        %1358 = vmatpush2.msra.mxu0 0.0
        %1359 = vmatprep.subr.mxu0 0.0
        %1360 = vmatpush2.msra.mxu0 0.0
        %1361 = vmatprep.subr.mxu0 0.0
        %1362 = vmatpush2.msra.mxu0 0.0
        %1363 = vmatprep.subr.mxu0 0.0
        %1364 = vmatpush2.msra.mxu0 0.0
        %1365 = vmatprep.subr.mxu0 0.0
        %1366 = vmatpush2.msra.mxu0 0.0
        %1367 = vmatprep.subr.mxu0 0.0
        %1368 = vmatpush2.msra.mxu0 0.0
        %1369 = vmatprep.subr.mxu0 0.0
        %1370 = vmatpush2.msra.mxu0 0.0
        %1371 = vmatprep.mubr.f32.mxu0 0.0
        %v1372 = vand.u32 %v917, 4294901760
        %1373 = vmatmul.mubr.f32.gmra.mxu0 %v1372
        %v1374 = vpop.f32.mrf.mxu0
        %v1375 = vadd.f32 %v1302, %v1374
        %v1376 = vpop.f32.mrf.mxu0
        %1377 = vdwg.mxu0
        %v1378 = vadd.f32 %v914, %v1375
        %vm1379 = vcmask 60416
        %1380 = vst.msk [vmem:[#allocation4] sm:$0xf] %vm1379, %v1378
        %v1381 = vld [vmem:[#allocation3] sm:$0xf]
        %1382 = vmatprep.subr.mxu0 0.0
        %1383 = vmatpush1.msra.mxu0 0.0
        %1384 = vmatprep.subr.mxu0 0.0
        %1385 = vmatpush1.msra.mxu0 0.0
        %1386 = vmatprep.subr.mxu0 0.0
        %1387 = vmatpush1.msra.mxu0 0.0
        %1388 = vmatprep.subr.mxu0 0.0
        %1389 = vmatpush1.msra.mxu0 0.0
        %1390 = vmatprep.subr.mxu0 0.0
        %1391 = vmatpush1.msra.mxu0 0.0
        %1392 = vmatprep.subr.mxu0 0.0
        %1393 = vmatpush1.msra.mxu0 0.0
        %1394 = vmatprep.subr.mxu0 0.0
        %1395 = vmatpush1.msra.mxu0 0.0
        %1396 = vmatprep.subr.mxu0 0.0
        %1397 = vmatpush1.msra.mxu0 0.0
        %1398 = vmatprep.subr.mxu0 0.0
        %1399 = vmatpush1.msra.mxu0 0.0
        %1400 = vmatprep.subr.mxu0 0.0
        %1401 = vmatpush1.msra.mxu0 0.0
        %1402 = vmatprep.subr.mxu0 0.0
        %1403 = vmatpush1.msra.mxu0 0.0
        %1404 = vmatprep.subr.mxu0 0.0
        %1405 = vmatpush1.msra.mxu0 0.0
        %1406 = vmatprep.subr.mxu0 0.0
        %1407 = vmatpush1.msra.mxu0 0.0
        %1408 = vmatprep.subr.mxu0 0.0
        %1409 = vmatpush1.msra.mxu0 0.0
        %1410 = vmatprep.subr.mxu0 0.0
        %v1411 = vand.u32 %v348, 4294901760
        %1412 = vmatpush1.msra.mxu0 %v1411
        %1413 = vmatprep.subr.mxu0 0.0
        %v1414 = vand.u32 %v347, 4294901760
        %1415 = vmatpush1.msra.mxu0 %v1414
        %1416 = vmatprep.subr.mxu0 0.0
        %1417 = vmatpush2.msra.mxu0 0.0
        %1418 = vmatprep.subr.mxu0 0.0
        %1419 = vmatpush2.msra.mxu0 0.0
        %1420 = vmatprep.subr.mxu0 0.0
        %1421 = vmatpush2.msra.mxu0 0.0
        %1422 = vmatprep.subr.mxu0 0.0
        %1423 = vmatpush2.msra.mxu0 0.0
        %1424 = vmatprep.subr.mxu0 0.0
        %1425 = vmatpush2.msra.mxu0 0.0
        %1426 = vmatprep.subr.mxu0 0.0
        %1427 = vmatpush2.msra.mxu0 0.0
        %1428 = vmatprep.subr.mxu0 0.0
        %1429 = vmatpush2.msra.mxu0 0.0
        %1430 = vmatprep.subr.mxu0 0.0
        %1431 = vmatpush2.msra.mxu0 0.0
        %1432 = vmatprep.subr.mxu0 0.0
        %1433 = vmatpush2.msra.mxu0 0.0
        %1434 = vmatprep.subr.mxu0 0.0
        %1435 = vmatpush2.msra.mxu0 0.0
        %1436 = vmatprep.subr.mxu0 0.0
        %1437 = vmatpush2.msra.mxu0 0.0
        %1438 = vmatprep.subr.mxu0 0.0
        %1439 = vmatpush2.msra.mxu0 0.0
        %1440 = vmatprep.subr.mxu0 0.0
        %1441 = vmatpush2.msra.mxu0 0.0
        %1442 = vmatprep.subr.mxu0 0.0
        %1443 = vmatpush2.msra.mxu0 0.0
        %1444 = vmatprep.subr.mxu0 0.0
        %1445 = vmatpush2.msra.mxu0 0.0
        %1446 = vmatprep.subr.mxu0 0.0
        %1447 = vmatpush2.msra.mxu0 0.0
        %1448 = vmatprep.mubr.f32.mxu0 0.0
        %v1449 = vand.u32 %v917, 4294901760
        %v1450 = vsub.f32 %v917, %v1449
        %v1451 = vand.u32 %v1450, 4294901760
        %v1452 = vsub.f32 %v1450, %v1451
        %v1453 = vand.u32 %v1452, 4294901760
        %1454 = vmatmul.mubr.f32.gmra.mxu0 %v1453
        %v1455 = vpop.f32.mrf.mxu0
        %v1456 = vadd.f32 0.0, %v1455
        %v1457 = vpop.f32.mrf.mxu0
        %1458 = vdwg.mxu0
        %1459 = vmatprep.subr.mxu0 0.0
        %1460 = vmatpush1.msra.mxu0 0.0
        %1461 = vmatprep.subr.mxu0 0.0
        %1462 = vmatpush1.msra.mxu0 0.0
        %1463 = vmatprep.subr.mxu0 0.0
        %1464 = vmatpush1.msra.mxu0 0.0
        %1465 = vmatprep.subr.mxu0 0.0
        %1466 = vmatpush1.msra.mxu0 0.0
        %1467 = vmatprep.subr.mxu0 0.0
        %1468 = vmatpush1.msra.mxu0 0.0
        %1469 = vmatprep.subr.mxu0 0.0
        %1470 = vmatpush1.msra.mxu0 0.0
        %1471 = vmatprep.subr.mxu0 0.0
        %1472 = vmatpush1.msra.mxu0 0.0
        %1473 = vmatprep.subr.mxu0 0.0
        %1474 = vmatpush1.msra.mxu0 0.0
        %1475 = vmatprep.subr.mxu0 0.0
        %1476 = vmatpush1.msra.mxu0 0.0
        %1477 = vmatprep.subr.mxu0 0.0
        %1478 = vmatpush1.msra.mxu0 0.0
        %1479 = vmatprep.subr.mxu0 0.0
        %1480 = vmatpush1.msra.mxu0 0.0
        %1481 = vmatprep.subr.mxu0 0.0
        %1482 = vmatpush1.msra.mxu0 0.0
        %1483 = vmatprep.subr.mxu0 0.0
        %1484 = vmatpush1.msra.mxu0 0.0
        %1485 = vmatprep.subr.mxu0 0.0
        %1486 = vmatpush1.msra.mxu0 0.0
        %1487 = vmatprep.subr.mxu0 0.0
        %v1488 = vand.u32 %v348, 4294901760
        %v1489 = vsub.f32 %v348, %v1488
        %v1490 = vand.u32 %v1489, 4294901760
        %v1491 = vsub.f32 %v1489, %v1490
        %v1492 = vand.u32 %v1491, 4294901760
        %1493 = vmatpush1.msra.mxu0 %v1492
        %1494 = vmatprep.subr.mxu0 0.0
        %v1495 = vand.u32 %v347, 4294901760
        %v1496 = vsub.f32 %v347, %v1495
        %v1497 = vand.u32 %v1496, 4294901760
        %v1498 = vsub.f32 %v1496, %v1497
        %v1499 = vand.u32 %v1498, 4294901760
        %1500 = vmatpush1.msra.mxu0 %v1499
        %1501 = vmatprep.subr.mxu0 0.0
        %1502 = vmatpush2.msra.mxu0 0.0
        %1503 = vmatprep.subr.mxu0 0.0
        %1504 = vmatpush2.msra.mxu0 0.0
        %1505 = vmatprep.subr.mxu0 0.0
        %1506 = vmatpush2.msra.mxu0 0.0
        %1507 = vmatprep.subr.mxu0 0.0
        %1508 = vmatpush2.msra.mxu0 0.0
        %1509 = vmatprep.subr.mxu0 0.0
        %1510 = vmatpush2.msra.mxu0 0.0
        %1511 = vmatprep.subr.mxu0 0.0
        %1512 = vmatpush2.msra.mxu0 0.0
        %1513 = vmatprep.subr.mxu0 0.0
        %1514 = vmatpush2.msra.mxu0 0.0
        %1515 = vmatprep.subr.mxu0 0.0
        %1516 = vmatpush2.msra.mxu0 0.0
        %1517 = vmatprep.subr.mxu0 0.0
        %1518 = vmatpush2.msra.mxu0 0.0
        %1519 = vmatprep.subr.mxu0 0.0
        %1520 = vmatpush2.msra.mxu0 0.0
        %1521 = vmatprep.subr.mxu0 0.0
        %1522 = vmatpush2.msra.mxu0 0.0
        %1523 = vmatprep.subr.mxu0 0.0
        %1524 = vmatpush2.msra.mxu0 0.0
        %1525 = vmatprep.subr.mxu0 0.0
        %1526 = vmatpush2.msra.mxu0 0.0
        %1527 = vmatprep.subr.mxu0 0.0
        %1528 = vmatpush2.msra.mxu0 0.0
        %1529 = vmatprep.subr.mxu0 0.0
        %1530 = vmatpush2.msra.mxu0 0.0
        %1531 = vmatprep.subr.mxu0 0.0
        %1532 = vmatpush2.msra.mxu0 0.0
        %1533 = vmatprep.mubr.f32.mxu0 0.0
        %v1534 = vand.u32 %v917, 4294901760
        %1535 = vmatmul.mubr.f32.gmra.mxu0 %v1534
        %v1536 = vpop.f32.mrf.mxu0
        %v1537 = vadd.f32 %v1456, %v1536
        %v1538 = vpop.f32.mrf.mxu0
        %1539 = vdwg.mxu0
        %1540 = vmatprep.subr.mxu0 0.0
        %1541 = vmatpush1.msra.mxu0 0.0
        %1542 = vmatprep.subr.mxu0 0.0
        %1543 = vmatpush1.msra.mxu0 0.0
        %1544 = vmatprep.subr.mxu0 0.0
        %1545 = vmatpush1.msra.mxu0 0.0
        %1546 = vmatprep.subr.mxu0 0.0
        %1547 = vmatpush1.msra.mxu0 0.0
        %1548 = vmatprep.subr.mxu0 0.0
        %1549 = vmatpush1.msra.mxu0 0.0
        %1550 = vmatprep.subr.mxu0 0.0
        %1551 = vmatpush1.msra.mxu0 0.0
        %1552 = vmatprep.subr.mxu0 0.0
        %1553 = vmatpush1.msra.mxu0 0.0
        %1554 = vmatprep.subr.mxu0 0.0
        %1555 = vmatpush1.msra.mxu0 0.0
        %1556 = vmatprep.subr.mxu0 0.0
        %1557 = vmatpush1.msra.mxu0 0.0
        %1558 = vmatprep.subr.mxu0 0.0
        %1559 = vmatpush1.msra.mxu0 0.0
        %1560 = vmatprep.subr.mxu0 0.0
        %1561 = vmatpush1.msra.mxu0 0.0
        %1562 = vmatprep.subr.mxu0 0.0
        %1563 = vmatpush1.msra.mxu0 0.0
        %1564 = vmatprep.subr.mxu0 0.0
        %1565 = vmatpush1.msra.mxu0 0.0
        %1566 = vmatprep.subr.mxu0 0.0
        %1567 = vmatpush1.msra.mxu0 0.0
        %1568 = vmatprep.subr.mxu0 0.0
        %v1569 = vand.u32 %v348, 4294901760
        %v1570 = vsub.f32 %v348, %v1569
        %1571 = vmatpush1.msra.mxu0 %v1570
        %1572 = vmatprep.subr.mxu0 0.0
        %v1573 = vand.u32 %v347, 4294901760
        %v1574 = vsub.f32 %v347, %v1573
        %1575 = vmatpush1.msra.mxu0 %v1574
        %1576 = vmatprep.subr.mxu0 0.0
        %1577 = vmatpush2.msra.mxu0 0.0
        %1578 = vmatprep.subr.mxu0 0.0
        %1579 = vmatpush2.msra.mxu0 0.0
        %1580 = vmatprep.subr.mxu0 0.0
        %1581 = vmatpush2.msra.mxu0 0.0
        %1582 = vmatprep.subr.mxu0 0.0
        %1583 = vmatpush2.msra.mxu0 0.0
        %1584 = vmatprep.subr.mxu0 0.0
        %1585 = vmatpush2.msra.mxu0 0.0
        %1586 = vmatprep.subr.mxu0 0.0
        %1587 = vmatpush2.msra.mxu0 0.0
        %1588 = vmatprep.subr.mxu0 0.0
        %1589 = vmatpush2.msra.mxu0 0.0
        %1590 = vmatprep.subr.mxu0 0.0
        %1591 = vmatpush2.msra.mxu0 0.0
        %1592 = vmatprep.subr.mxu0 0.0
        %1593 = vmatpush2.msra.mxu0 0.0
        %1594 = vmatprep.subr.mxu0 0.0
        %1595 = vmatpush2.msra.mxu0 0.0
        %1596 = vmatprep.subr.mxu0 0.0
        %1597 = vmatpush2.msra.mxu0 0.0
        %1598 = vmatprep.subr.mxu0 0.0
        %1599 = vmatpush2.msra.mxu0 0.0
        %1600 = vmatprep.subr.mxu0 0.0
        %1601 = vmatpush2.msra.mxu0 0.0
        %1602 = vmatprep.subr.mxu0 0.0
        %1603 = vmatpush2.msra.mxu0 0.0
        %1604 = vmatprep.subr.mxu0 0.0
        %1605 = vmatpush2.msra.mxu0 0.0
        %1606 = vmatprep.subr.mxu0 0.0
        %1607 = vmatpush2.msra.mxu0 0.0
        %1608 = vmatprep.mubr.f32.mxu0 0.0
        %v1609 = vand.u32 %v917, 4294901760
        %v1610 = vsub.f32 %v917, %v1609
        %1611 = vmatmul.mubr.f32.gmra.mxu0 %v1610
        %v1612 = vpop.f32.mrf.mxu0
        %v1613 = vadd.f32 %v1537, %v1612
        %v1614 = vpop.f32.mrf.mxu0
        %1615 = vdwg.mxu0
        %1616 = vmatprep.subr.mxu0 0.0
        %1617 = vmatpush1.msra.mxu0 0.0
        %1618 = vmatprep.subr.mxu0 0.0
        %1619 = vmatpush1.msra.mxu0 0.0
        %1620 = vmatprep.subr.mxu0 0.0
        %1621 = vmatpush1.msra.mxu0 0.0
        %1622 = vmatprep.subr.mxu0 0.0
        %1623 = vmatpush1.msra.mxu0 0.0
        %1624 = vmatprep.subr.mxu0 0.0
        %1625 = vmatpush1.msra.mxu0 0.0
        %1626 = vmatprep.subr.mxu0 0.0
        %1627 = vmatpush1.msra.mxu0 0.0
        %1628 = vmatprep.subr.mxu0 0.0
        %1629 = vmatpush1.msra.mxu0 0.0
        %1630 = vmatprep.subr.mxu0 0.0
        %1631 = vmatpush1.msra.mxu0 0.0
        %1632 = vmatprep.subr.mxu0 0.0
        %1633 = vmatpush1.msra.mxu0 0.0
        %1634 = vmatprep.subr.mxu0 0.0
        %1635 = vmatpush1.msra.mxu0 0.0
        %1636 = vmatprep.subr.mxu0 0.0
        %1637 = vmatpush1.msra.mxu0 0.0
        %1638 = vmatprep.subr.mxu0 0.0
        %1639 = vmatpush1.msra.mxu0 0.0
        %1640 = vmatprep.subr.mxu0 0.0
        %1641 = vmatpush1.msra.mxu0 0.0
        %1642 = vmatprep.subr.mxu0 0.0
        %1643 = vmatpush1.msra.mxu0 0.0
        %1644 = vmatprep.subr.mxu0 0.0
        %v1645 = vand.u32 %v348, 4294901760
        %1646 = vmatpush1.msra.mxu0 %v1645
        %1647 = vmatprep.subr.mxu0 0.0
        %v1648 = vand.u32 %v347, 4294901760
        %1649 = vmatpush1.msra.mxu0 %v1648
        %1650 = vmatprep.subr.mxu0 0.0
        %1651 = vmatpush2.msra.mxu0 0.0
        %1652 = vmatprep.subr.mxu0 0.0
        %1653 = vmatpush2.msra.mxu0 0.0
        %1654 = vmatprep.subr.mxu0 0.0
        %1655 = vmatpush2.msra.mxu0 0.0
        %1656 = vmatprep.subr.mxu0 0.0
        %1657 = vmatpush2.msra.mxu0 0.0
        %1658 = vmatprep.subr.mxu0 0.0
        %1659 = vmatpush2.msra.mxu0 0.0
        %1660 = vmatprep.subr.mxu0 0.0
        %1661 = vmatpush2.msra.mxu0 0.0
        %1662 = vmatprep.subr.mxu0 0.0
        %1663 = vmatpush2.msra.mxu0 0.0
        %1664 = vmatprep.subr.mxu0 0.0
        %1665 = vmatpush2.msra.mxu0 0.0
        %1666 = vmatprep.subr.mxu0 0.0
        %1667 = vmatpush2.msra.mxu0 0.0
        %1668 = vmatprep.subr.mxu0 0.0
        %1669 = vmatpush2.msra.mxu0 0.0
        %1670 = vmatprep.subr.mxu0 0.0
        %1671 = vmatpush2.msra.mxu0 0.0
        %1672 = vmatprep.subr.mxu0 0.0
        %1673 = vmatpush2.msra.mxu0 0.0
        %1674 = vmatprep.subr.mxu0 0.0
        %1675 = vmatpush2.msra.mxu0 0.0
        %1676 = vmatprep.subr.mxu0 0.0
        %1677 = vmatpush2.msra.mxu0 0.0
        %1678 = vmatprep.subr.mxu0 0.0
        %1679 = vmatpush2.msra.mxu0 0.0
        %1680 = vmatprep.subr.mxu0 0.0
        %1681 = vmatpush2.msra.mxu0 0.0
        %1682 = vmatprep.mubr.f32.mxu0 0.0
        %v1683 = vand.u32 %v917, 4294901760
        %v1684 = vsub.f32 %v917, %v1683
        %v1685 = vand.u32 %v1684, 4294901760
        %1686 = vmatmul.mubr.f32.gmra.mxu0 %v1685
        %v1687 = vpop.f32.mrf.mxu0
        %v1688 = vadd.f32 %v1613, %v1687
        %v1689 = vpop.f32.mrf.mxu0
        %1690 = vdwg.mxu0
        %1691 = vmatprep.subr.mxu0 0.0
        %1692 = vmatpush1.msra.mxu0 0.0
        %1693 = vmatprep.subr.mxu0 0.0
        %1694 = vmatpush1.msra.mxu0 0.0
        %1695 = vmatprep.subr.mxu0 0.0
        %1696 = vmatpush1.msra.mxu0 0.0
        %1697 = vmatprep.subr.mxu0 0.0
        %1698 = vmatpush1.msra.mxu0 0.0
        %1699 = vmatprep.subr.mxu0 0.0
        %1700 = vmatpush1.msra.mxu0 0.0
        %1701 = vmatprep.subr.mxu0 0.0
        %1702 = vmatpush1.msra.mxu0 0.0
        %1703 = vmatprep.subr.mxu0 0.0
        %1704 = vmatpush1.msra.mxu0 0.0
        %1705 = vmatprep.subr.mxu0 0.0
        %1706 = vmatpush1.msra.mxu0 0.0
        %1707 = vmatprep.subr.mxu0 0.0
        %1708 = vmatpush1.msra.mxu0 0.0
        %1709 = vmatprep.subr.mxu0 0.0
        %1710 = vmatpush1.msra.mxu0 0.0
        %1711 = vmatprep.subr.mxu0 0.0
        %1712 = vmatpush1.msra.mxu0 0.0
        %1713 = vmatprep.subr.mxu0 0.0
        %1714 = vmatpush1.msra.mxu0 0.0
        %1715 = vmatprep.subr.mxu0 0.0
        %1716 = vmatpush1.msra.mxu0 0.0
        %1717 = vmatprep.subr.mxu0 0.0
        %1718 = vmatpush1.msra.mxu0 0.0
        %1719 = vmatprep.subr.mxu0 0.0
        %v1720 = vand.u32 %v348, 4294901760
        %v1721 = vsub.f32 %v348, %v1720
        %v1722 = vand.u32 %v1721, 4294901760
        %1723 = vmatpush1.msra.mxu0 %v1722
        %1724 = vmatprep.subr.mxu0 0.0
        %v1725 = vand.u32 %v347, 4294901760
        %v1726 = vsub.f32 %v347, %v1725
        %v1727 = vand.u32 %v1726, 4294901760
        %1728 = vmatpush1.msra.mxu0 %v1727
        %1729 = vmatprep.subr.mxu0 0.0
        %1730 = vmatpush2.msra.mxu0 0.0
        %1731 = vmatprep.subr.mxu0 0.0
        %1732 = vmatpush2.msra.mxu0 0.0
        %1733 = vmatprep.subr.mxu0 0.0
        %1734 = vmatpush2.msra.mxu0 0.0
        %1735 = vmatprep.subr.mxu0 0.0
        %1736 = vmatpush2.msra.mxu0 0.0
        %1737 = vmatprep.subr.mxu0 0.0
        %1738 = vmatpush2.msra.mxu0 0.0
        %1739 = vmatprep.subr.mxu0 0.0
        %1740 = vmatpush2.msra.mxu0 0.0
        %1741 = vmatprep.subr.mxu0 0.0
        %1742 = vmatpush2.msra.mxu0 0.0
        %1743 = vmatprep.subr.mxu0 0.0
        %1744 = vmatpush2.msra.mxu0 0.0
        %1745 = vmatprep.subr.mxu0 0.0
        %1746 = vmatpush2.msra.mxu0 0.0
        %1747 = vmatprep.subr.mxu0 0.0
        %1748 = vmatpush2.msra.mxu0 0.0
        %1749 = vmatprep.subr.mxu0 0.0
        %1750 = vmatpush2.msra.mxu0 0.0
        %1751 = vmatprep.subr.mxu0 0.0
        %1752 = vmatpush2.msra.mxu0 0.0
        %1753 = vmatprep.subr.mxu0 0.0
        %1754 = vmatpush2.msra.mxu0 0.0
        %1755 = vmatprep.subr.mxu0 0.0
        %1756 = vmatpush2.msra.mxu0 0.0
        %1757 = vmatprep.subr.mxu0 0.0
        %1758 = vmatpush2.msra.mxu0 0.0
        %1759 = vmatprep.subr.mxu0 0.0
        %1760 = vmatpush2.msra.mxu0 0.0
        %1761 = vmatprep.mubr.f32.mxu0 0.0
        %v1762 = vand.u32 %v917, 4294901760
        %1763 = vmatmul.mubr.f32.gmra.mxu0 %v1762
        %v1764 = vpop.f32.mrf.mxu0
        %v1765 = vadd.f32 %v1688, %v1764
        %v1766 = vpop.f32.mrf.mxu0
        %1767 = vdwg.mxu0
        %1768 = vmatprep.subr.mxu0 0.0
        %1769 = vmatpush1.msra.mxu0 0.0
        %1770 = vmatprep.subr.mxu0 0.0
        %1771 = vmatpush1.msra.mxu0 0.0
        %1772 = vmatprep.subr.mxu0 0.0
        %1773 = vmatpush1.msra.mxu0 0.0
        %1774 = vmatprep.subr.mxu0 0.0
        %1775 = vmatpush1.msra.mxu0 0.0
        %1776 = vmatprep.subr.mxu0 0.0
        %1777 = vmatpush1.msra.mxu0 0.0
        %1778 = vmatprep.subr.mxu0 0.0
        %1779 = vmatpush1.msra.mxu0 0.0
        %1780 = vmatprep.subr.mxu0 0.0
        %1781 = vmatpush1.msra.mxu0 0.0
        %1782 = vmatprep.subr.mxu0 0.0
        %1783 = vmatpush1.msra.mxu0 0.0
        %1784 = vmatprep.subr.mxu0 0.0
        %1785 = vmatpush1.msra.mxu0 0.0
        %1786 = vmatprep.subr.mxu0 0.0
        %1787 = vmatpush1.msra.mxu0 0.0
        %1788 = vmatprep.subr.mxu0 0.0
        %1789 = vmatpush1.msra.mxu0 0.0
        %1790 = vmatprep.subr.mxu0 0.0
        %1791 = vmatpush1.msra.mxu0 0.0
        %1792 = vmatprep.subr.mxu0 0.0
        %1793 = vmatpush1.msra.mxu0 0.0
        %1794 = vmatprep.subr.mxu0 0.0
        %1795 = vmatpush1.msra.mxu0 0.0
        %1796 = vmatprep.subr.mxu0 0.0
        %v1797 = vand.u32 %v348, 4294901760
        %1798 = vmatpush1.msra.mxu0 %v1797
        %1799 = vmatprep.subr.mxu0 0.0
        %v1800 = vand.u32 %v347, 4294901760
        %1801 = vmatpush1.msra.mxu0 %v1800
        %1802 = vmatprep.subr.mxu0 0.0
        %1803 = vmatpush2.msra.mxu0 0.0
        %1804 = vmatprep.subr.mxu0 0.0
        %1805 = vmatpush2.msra.mxu0 0.0
        %1806 = vmatprep.subr.mxu0 0.0
        %1807 = vmatpush2.msra.mxu0 0.0
        %1808 = vmatprep.subr.mxu0 0.0
        %1809 = vmatpush2.msra.mxu0 0.0
        %1810 = vmatprep.subr.mxu0 0.0
        %1811 = vmatpush2.msra.mxu0 0.0
        %1812 = vmatprep.subr.mxu0 0.0
        %1813 = vmatpush2.msra.mxu0 0.0
        %1814 = vmatprep.subr.mxu0 0.0
        %1815 = vmatpush2.msra.mxu0 0.0
        %1816 = vmatprep.subr.mxu0 0.0
        %1817 = vmatpush2.msra.mxu0 0.0
        %1818 = vmatprep.subr.mxu0 0.0
        %1819 = vmatpush2.msra.mxu0 0.0
        %1820 = vmatprep.subr.mxu0 0.0
        %1821 = vmatpush2.msra.mxu0 0.0
        %1822 = vmatprep.subr.mxu0 0.0
        %1823 = vmatpush2.msra.mxu0 0.0
        %1824 = vmatprep.subr.mxu0 0.0
        %1825 = vmatpush2.msra.mxu0 0.0
        %1826 = vmatprep.subr.mxu0 0.0
        %1827 = vmatpush2.msra.mxu0 0.0
        %1828 = vmatprep.subr.mxu0 0.0
        %1829 = vmatpush2.msra.mxu0 0.0
        %1830 = vmatprep.subr.mxu0 0.0
        %1831 = vmatpush2.msra.mxu0 0.0
        %1832 = vmatprep.subr.mxu0 0.0
        %1833 = vmatpush2.msra.mxu0 0.0
        %1834 = vmatprep.mubr.f32.mxu0 0.0
        %v1835 = vand.u32 %v917, 4294901760
        %1836 = vmatmul.mubr.f32.gmra.mxu0 %v1835
        %v1837 = vpop.f32.mrf.mxu0
        %v1838 = vadd.f32 %v1765, %v1837
        %v1839 = vpop.f32.mrf.mxu0
        %1840 = vdwg.mxu0
        %v1841 = vadd.f32 %v1381, %v1838
        %1842 = vst.msk [vmem:[#allocation3] sm:$0xf] %vm912, %v1841
        %v1843 = vld [vmem:[#allocation5] sm:$0xf]
        %1844 = vmatprep.subr.mxu0 0.0
        %1845 = vmatpush1.xpose.msra.mxu0 0.0
        %1846 = vmatprep.subr.mxu0 0.0
        %1847 = vmatpush1.xpose.msra.mxu0 0.0
        %1848 = vmatprep.subr.mxu0 0.0
        %1849 = vmatpush1.xpose.msra.mxu0 0.0
        %1850 = vmatprep.subr.mxu0 0.0
        %1851 = vmatpush1.xpose.msra.mxu0 0.0
        %1852 = vmatprep.subr.mxu0 0.0
        %1853 = vmatpush1.xpose.msra.mxu0 0.0
        %1854 = vmatprep.subr.mxu0 0.0
        %1855 = vmatpush1.xpose.msra.mxu0 0.0
        %1856 = vmatprep.subr.mxu0 0.0
        %1857 = vmatpush1.xpose.msra.mxu0 0.0
        %1858 = vmatprep.subr.mxu0 0.0
        %1859 = vmatpush1.xpose.msra.mxu0 0.0
        %1860 = vmatprep.subr.mxu0 0.0
        %1861 = vmatpush1.xpose.msra.mxu0 0.0
        %1862 = vmatprep.subr.mxu0 0.0
        %1863 = vmatpush1.xpose.msra.mxu0 0.0
        %1864 = vmatprep.subr.mxu0 0.0
        %1865 = vmatpush1.xpose.msra.mxu0 0.0
        %1866 = vmatprep.subr.mxu0 0.0
        %1867 = vmatpush1.xpose.msra.mxu0 0.0
        %1868 = vmatprep.subr.mxu0 0.0
        %1869 = vmatpush1.xpose.msra.mxu0 0.0
        %1870 = vmatprep.subr.mxu0 0.0
        %1871 = vmatpush1.xpose.msra.mxu0 0.0
        %1872 = vmatprep.subr.mxu0 0.0
        %1873 = vmatpush1.xpose.msra.mxu0 0.0
        %1874 = vmatprep.subr.mxu0 0.0
        %v1875 = vand.u32 %v917, 4294901760
        %1876 = vmatpush1.xpose.msra.mxu0 %v1875
        %1877 = vmatprep.subr.mxu0 0.0
        %1878 = vmatpush2.xpose.msra.mxu0 0.0
        %1879 = vmatprep.subr.mxu0 0.0
        %1880 = vmatpush2.xpose.msra.mxu0 0.0
        %1881 = vmatprep.subr.mxu0 0.0
        %1882 = vmatpush2.xpose.msra.mxu0 0.0
        %1883 = vmatprep.subr.mxu0 0.0
        %1884 = vmatpush2.xpose.msra.mxu0 0.0
        %1885 = vmatprep.subr.mxu0 0.0
        %1886 = vmatpush2.xpose.msra.mxu0 0.0
        %1887 = vmatprep.subr.mxu0 0.0
        %1888 = vmatpush2.xpose.msra.mxu0 0.0
        %1889 = vmatprep.subr.mxu0 0.0
        %1890 = vmatpush2.xpose.msra.mxu0 0.0
        %1891 = vmatprep.subr.mxu0 0.0
        %1892 = vmatpush2.xpose.msra.mxu0 0.0
        %1893 = vmatprep.subr.mxu0 0.0
        %1894 = vmatpush2.xpose.msra.mxu0 0.0
        %1895 = vmatprep.subr.mxu0 0.0
        %1896 = vmatpush2.xpose.msra.mxu0 0.0
        %1897 = vmatprep.subr.mxu0 0.0
        %1898 = vmatpush2.xpose.msra.mxu0 0.0
        %1899 = vmatprep.subr.mxu0 0.0
        %1900 = vmatpush2.xpose.msra.mxu0 0.0
        %1901 = vmatprep.subr.mxu0 0.0
        %1902 = vmatpush2.xpose.msra.mxu0 0.0
        %1903 = vmatprep.subr.mxu0 0.0
        %1904 = vmatpush2.xpose.msra.mxu0 0.0
        %1905 = vmatprep.subr.mxu0 0.0
        %1906 = vmatpush2.xpose.msra.mxu0 0.0
        %1907 = vmatprep.subr.mxu0 0.0
        %1908 = vmatpush2.xpose.msra.mxu0 0.0
        %1909 = vmatprep.mubr.f32.mxu0 0.0
        %v1910 = vand.u32 %v917, 4294901760
        %v1911 = vsub.f32 %v917, %v1910
        %v1912 = vand.u32 %v1911, 4294901760
        %v1913 = vsub.f32 %v1911, %v1912
        %v1914 = vand.u32 %v1913, 4294901760
        %1915 = vmatmul.mubr.f32.gmra.mxu0 %v1914
        %v1916 = vpop.f32.mrf.mxu0
        %v1917 = vadd.f32 0.0, %v1916
        %v1918 = vpop.f32.mrf.mxu0
        %1919 = vdwg.mxu0
        %1920 = vmatprep.subr.mxu0 0.0
        %1921 = vmatpush1.xpose.msra.mxu0 0.0
        %1922 = vmatprep.subr.mxu0 0.0
        %1923 = vmatpush1.xpose.msra.mxu0 0.0
        %1924 = vmatprep.subr.mxu0 0.0
        %1925 = vmatpush1.xpose.msra.mxu0 0.0
        %1926 = vmatprep.subr.mxu0 0.0
        %1927 = vmatpush1.xpose.msra.mxu0 0.0
        %1928 = vmatprep.subr.mxu0 0.0
        %1929 = vmatpush1.xpose.msra.mxu0 0.0
        %1930 = vmatprep.subr.mxu0 0.0
        %1931 = vmatpush1.xpose.msra.mxu0 0.0
        %1932 = vmatprep.subr.mxu0 0.0
        %1933 = vmatpush1.xpose.msra.mxu0 0.0
        %1934 = vmatprep.subr.mxu0 0.0
        %1935 = vmatpush1.xpose.msra.mxu0 0.0
        %1936 = vmatprep.subr.mxu0 0.0
        %1937 = vmatpush1.xpose.msra.mxu0 0.0
        %1938 = vmatprep.subr.mxu0 0.0
        %1939 = vmatpush1.xpose.msra.mxu0 0.0
        %1940 = vmatprep.subr.mxu0 0.0
        %1941 = vmatpush1.xpose.msra.mxu0 0.0
        %1942 = vmatprep.subr.mxu0 0.0
        %1943 = vmatpush1.xpose.msra.mxu0 0.0
        %1944 = vmatprep.subr.mxu0 0.0
        %1945 = vmatpush1.xpose.msra.mxu0 0.0
        %1946 = vmatprep.subr.mxu0 0.0
        %1947 = vmatpush1.xpose.msra.mxu0 0.0
        %1948 = vmatprep.subr.mxu0 0.0
        %1949 = vmatpush1.xpose.msra.mxu0 0.0
        %1950 = vmatprep.subr.mxu0 0.0
        %v1951 = vand.u32 %v917, 4294901760
        %v1952 = vsub.f32 %v917, %v1951
        %v1953 = vand.u32 %v1952, 4294901760
        %v1954 = vsub.f32 %v1952, %v1953
        %v1955 = vand.u32 %v1954, 4294901760
        %1956 = vmatpush1.xpose.msra.mxu0 %v1955
        %1957 = vmatprep.subr.mxu0 0.0
        %1958 = vmatpush2.xpose.msra.mxu0 0.0
        %1959 = vmatprep.subr.mxu0 0.0
        %1960 = vmatpush2.xpose.msra.mxu0 0.0
        %1961 = vmatprep.subr.mxu0 0.0
        %1962 = vmatpush2.xpose.msra.mxu0 0.0
        %1963 = vmatprep.subr.mxu0 0.0
        %1964 = vmatpush2.xpose.msra.mxu0 0.0
        %1965 = vmatprep.subr.mxu0 0.0
        %1966 = vmatpush2.xpose.msra.mxu0 0.0
        %1967 = vmatprep.subr.mxu0 0.0
        %1968 = vmatpush2.xpose.msra.mxu0 0.0
        %1969 = vmatprep.subr.mxu0 0.0
        %1970 = vmatpush2.xpose.msra.mxu0 0.0
        %1971 = vmatprep.subr.mxu0 0.0
        %1972 = vmatpush2.xpose.msra.mxu0 0.0
        %1973 = vmatprep.subr.mxu0 0.0
        %1974 = vmatpush2.xpose.msra.mxu0 0.0
        %1975 = vmatprep.subr.mxu0 0.0
        %1976 = vmatpush2.xpose.msra.mxu0 0.0
        %1977 = vmatprep.subr.mxu0 0.0
        %1978 = vmatpush2.xpose.msra.mxu0 0.0
        %1979 = vmatprep.subr.mxu0 0.0
        %1980 = vmatpush2.xpose.msra.mxu0 0.0
        %1981 = vmatprep.subr.mxu0 0.0
        %1982 = vmatpush2.xpose.msra.mxu0 0.0
        %1983 = vmatprep.subr.mxu0 0.0
        %1984 = vmatpush2.xpose.msra.mxu0 0.0
        %1985 = vmatprep.subr.mxu0 0.0
        %1986 = vmatpush2.xpose.msra.mxu0 0.0
        %1987 = vmatprep.subr.mxu0 0.0
        %1988 = vmatpush2.xpose.msra.mxu0 0.0
        %1989 = vmatprep.mubr.f32.mxu0 0.0
        %v1990 = vand.u32 %v917, 4294901760
        %1991 = vmatmul.mubr.f32.gmra.mxu0 %v1990
        %v1992 = vpop.f32.mrf.mxu0
        %v1993 = vadd.f32 %v1917, %v1992
        %v1994 = vpop.f32.mrf.mxu0
        %1995 = vdwg.mxu0
        %1996 = vmatprep.subr.mxu0 0.0
        %1997 = vmatpush1.xpose.msra.mxu0 0.0
        %1998 = vmatprep.subr.mxu0 0.0
        %1999 = vmatpush1.xpose.msra.mxu0 0.0
        %2000 = vmatprep.subr.mxu0 0.0
        %2001 = vmatpush1.xpose.msra.mxu0 0.0
        %2002 = vmatprep.subr.mxu0 0.0
        %2003 = vmatpush1.xpose.msra.mxu0 0.0
        %2004 = vmatprep.subr.mxu0 0.0
        %2005 = vmatpush1.xpose.msra.mxu0 0.0
        %2006 = vmatprep.subr.mxu0 0.0
        %2007 = vmatpush1.xpose.msra.mxu0 0.0
        %2008 = vmatprep.subr.mxu0 0.0
        %2009 = vmatpush1.xpose.msra.mxu0 0.0
        %2010 = vmatprep.subr.mxu0 0.0
        %2011 = vmatpush1.xpose.msra.mxu0 0.0
        %2012 = vmatprep.subr.mxu0 0.0
        %2013 = vmatpush1.xpose.msra.mxu0 0.0
        %2014 = vmatprep.subr.mxu0 0.0
        %2015 = vmatpush1.xpose.msra.mxu0 0.0
        %2016 = vmatprep.subr.mxu0 0.0
        %2017 = vmatpush1.xpose.msra.mxu0 0.0
        %2018 = vmatprep.subr.mxu0 0.0
        %2019 = vmatpush1.xpose.msra.mxu0 0.0
        %2020 = vmatprep.subr.mxu0 0.0
        %2021 = vmatpush1.xpose.msra.mxu0 0.0
        %2022 = vmatprep.subr.mxu0 0.0
        %2023 = vmatpush1.xpose.msra.mxu0 0.0
        %2024 = vmatprep.subr.mxu0 0.0
        %2025 = vmatpush1.xpose.msra.mxu0 0.0
        %2026 = vmatprep.subr.mxu0 0.0
        %v2027 = vand.u32 %v917, 4294901760
        %v2028 = vsub.f32 %v917, %v2027
        %2029 = vmatpush1.xpose.msra.mxu0 %v2028
        %2030 = vmatprep.subr.mxu0 0.0
        %2031 = vmatpush2.xpose.msra.mxu0 0.0
        %2032 = vmatprep.subr.mxu0 0.0
        %2033 = vmatpush2.xpose.msra.mxu0 0.0
        %2034 = vmatprep.subr.mxu0 0.0
        %2035 = vmatpush2.xpose.msra.mxu0 0.0
        %2036 = vmatprep.subr.mxu0 0.0
        %2037 = vmatpush2.xpose.msra.mxu0 0.0
        %2038 = vmatprep.subr.mxu0 0.0
        %2039 = vmatpush2.xpose.msra.mxu0 0.0
        %2040 = vmatprep.subr.mxu0 0.0
        %2041 = vmatpush2.xpose.msra.mxu0 0.0
        %2042 = vmatprep.subr.mxu0 0.0
        %2043 = vmatpush2.xpose.msra.mxu0 0.0
        %2044 = vmatprep.subr.mxu0 0.0
        %2045 = vmatpush2.xpose.msra.mxu0 0.0
        %2046 = vmatprep.subr.mxu0 0.0
        %2047 = vmatpush2.xpose.msra.mxu0 0.0
        %2048 = vmatprep.subr.mxu0 0.0
        %2049 = vmatpush2.xpose.msra.mxu0 0.0
        %2050 = vmatprep.subr.mxu0 0.0
        %2051 = vmatpush2.xpose.msra.mxu0 0.0
        %2052 = vmatprep.subr.mxu0 0.0
        %2053 = vmatpush2.xpose.msra.mxu0 0.0
        %2054 = vmatprep.subr.mxu0 0.0
        %2055 = vmatpush2.xpose.msra.mxu0 0.0
        %2056 = vmatprep.subr.mxu0 0.0
        %2057 = vmatpush2.xpose.msra.mxu0 0.0
        %2058 = vmatprep.subr.mxu0 0.0
        %2059 = vmatpush2.xpose.msra.mxu0 0.0
        %2060 = vmatprep.subr.mxu0 0.0
        %2061 = vmatpush2.xpose.msra.mxu0 0.0
        %2062 = vmatprep.mubr.f32.mxu0 0.0
        %v2063 = vand.u32 %v917, 4294901760
        %v2064 = vsub.f32 %v917, %v2063
        %2065 = vmatmul.mubr.f32.gmra.mxu0 %v2064
        %v2066 = vpop.f32.mrf.mxu0
        %v2067 = vadd.f32 %v1993, %v2066
        %v2068 = vpop.f32.mrf.mxu0
        %2069 = vdwg.mxu0
        %2070 = vmatprep.subr.mxu0 0.0
        %2071 = vmatpush1.xpose.msra.mxu0 0.0
        %2072 = vmatprep.subr.mxu0 0.0
        %2073 = vmatpush1.xpose.msra.mxu0 0.0
        %2074 = vmatprep.subr.mxu0 0.0
        %2075 = vmatpush1.xpose.msra.mxu0 0.0
        %2076 = vmatprep.subr.mxu0 0.0
        %2077 = vmatpush1.xpose.msra.mxu0 0.0
        %2078 = vmatprep.subr.mxu0 0.0
        %2079 = vmatpush1.xpose.msra.mxu0 0.0
        %2080 = vmatprep.subr.mxu0 0.0
        %2081 = vmatpush1.xpose.msra.mxu0 0.0
        %2082 = vmatprep.subr.mxu0 0.0
        %2083 = vmatpush1.xpose.msra.mxu0 0.0
        %2084 = vmatprep.subr.mxu0 0.0
        %2085 = vmatpush1.xpose.msra.mxu0 0.0
        %2086 = vmatprep.subr.mxu0 0.0
        %2087 = vmatpush1.xpose.msra.mxu0 0.0
        %2088 = vmatprep.subr.mxu0 0.0
        %2089 = vmatpush1.xpose.msra.mxu0 0.0
        %2090 = vmatprep.subr.mxu0 0.0
        %2091 = vmatpush1.xpose.msra.mxu0 0.0
        %2092 = vmatprep.subr.mxu0 0.0
        %2093 = vmatpush1.xpose.msra.mxu0 0.0
        %2094 = vmatprep.subr.mxu0 0.0
        %2095 = vmatpush1.xpose.msra.mxu0 0.0
        %2096 = vmatprep.subr.mxu0 0.0
        %2097 = vmatpush1.xpose.msra.mxu0 0.0
        %2098 = vmatprep.subr.mxu0 0.0
        %2099 = vmatpush1.xpose.msra.mxu0 0.0
        %2100 = vmatprep.subr.mxu0 0.0
        %v2101 = vand.u32 %v917, 4294901760
        %2102 = vmatpush1.xpose.msra.mxu0 %v2101
        %2103 = vmatprep.subr.mxu0 0.0
        %2104 = vmatpush2.xpose.msra.mxu0 0.0
        %2105 = vmatprep.subr.mxu0 0.0
        %2106 = vmatpush2.xpose.msra.mxu0 0.0
        %2107 = vmatprep.subr.mxu0 0.0
        %2108 = vmatpush2.xpose.msra.mxu0 0.0
        %2109 = vmatprep.subr.mxu0 0.0
        %2110 = vmatpush2.xpose.msra.mxu0 0.0
        %2111 = vmatprep.subr.mxu0 0.0
        %2112 = vmatpush2.xpose.msra.mxu0 0.0
        %2113 = vmatprep.subr.mxu0 0.0
        %2114 = vmatpush2.xpose.msra.mxu0 0.0
        %2115 = vmatprep.subr.mxu0 0.0
        %2116 = vmatpush2.xpose.msra.mxu0 0.0
        %2117 = vmatprep.subr.mxu0 0.0
        %2118 = vmatpush2.xpose.msra.mxu0 0.0
        %2119 = vmatprep.subr.mxu0 0.0
        %2120 = vmatpush2.xpose.msra.mxu0 0.0
        %2121 = vmatprep.subr.mxu0 0.0
        %2122 = vmatpush2.xpose.msra.mxu0 0.0
        %2123 = vmatprep.subr.mxu0 0.0
        %2124 = vmatpush2.xpose.msra.mxu0 0.0
        %2125 = vmatprep.subr.mxu0 0.0
        %2126 = vmatpush2.xpose.msra.mxu0 0.0
        %2127 = vmatprep.subr.mxu0 0.0
        %2128 = vmatpush2.xpose.msra.mxu0 0.0
        %2129 = vmatprep.subr.mxu0 0.0
        %2130 = vmatpush2.xpose.msra.mxu0 0.0
        %2131 = vmatprep.subr.mxu0 0.0
        %2132 = vmatpush2.xpose.msra.mxu0 0.0
        %2133 = vmatprep.subr.mxu0 0.0
        %2134 = vmatpush2.xpose.msra.mxu0 0.0
        %2135 = vmatprep.mubr.f32.mxu0 0.0
        %v2136 = vand.u32 %v917, 4294901760
        %v2137 = vsub.f32 %v917, %v2136
        %v2138 = vand.u32 %v2137, 4294901760
        %2139 = vmatmul.mubr.f32.gmra.mxu0 %v2138
        %v2140 = vpop.f32.mrf.mxu0
        %v2141 = vadd.f32 %v2067, %v2140
        %v2142 = vpop.f32.mrf.mxu0
        %2143 = vdwg.mxu0
        %2144 = vmatprep.subr.mxu0 0.0
        %2145 = vmatpush1.xpose.msra.mxu0 0.0
        %2146 = vmatprep.subr.mxu0 0.0
        %2147 = vmatpush1.xpose.msra.mxu0 0.0
        %2148 = vmatprep.subr.mxu0 0.0
        %2149 = vmatpush1.xpose.msra.mxu0 0.0
        %2150 = vmatprep.subr.mxu0 0.0
        %2151 = vmatpush1.xpose.msra.mxu0 0.0
        %2152 = vmatprep.subr.mxu0 0.0
        %2153 = vmatpush1.xpose.msra.mxu0 0.0
        %2154 = vmatprep.subr.mxu0 0.0
        %2155 = vmatpush1.xpose.msra.mxu0 0.0
        %2156 = vmatprep.subr.mxu0 0.0
        %2157 = vmatpush1.xpose.msra.mxu0 0.0
        %2158 = vmatprep.subr.mxu0 0.0
        %2159 = vmatpush1.xpose.msra.mxu0 0.0
        %2160 = vmatprep.subr.mxu0 0.0
        %2161 = vmatpush1.xpose.msra.mxu0 0.0
        %2162 = vmatprep.subr.mxu0 0.0
        %2163 = vmatpush1.xpose.msra.mxu0 0.0
        %2164 = vmatprep.subr.mxu0 0.0
        %2165 = vmatpush1.xpose.msra.mxu0 0.0
        %2166 = vmatprep.subr.mxu0 0.0
        %2167 = vmatpush1.xpose.msra.mxu0 0.0
        %2168 = vmatprep.subr.mxu0 0.0
        %2169 = vmatpush1.xpose.msra.mxu0 0.0
        %2170 = vmatprep.subr.mxu0 0.0
        %2171 = vmatpush1.xpose.msra.mxu0 0.0
        %2172 = vmatprep.subr.mxu0 0.0
        %2173 = vmatpush1.xpose.msra.mxu0 0.0
        %2174 = vmatprep.subr.mxu0 0.0
        %v2175 = vand.u32 %v917, 4294901760
        %v2176 = vsub.f32 %v917, %v2175
        %v2177 = vand.u32 %v2176, 4294901760
        %2178 = vmatpush1.xpose.msra.mxu0 %v2177
        %2179 = vmatprep.subr.mxu0 0.0
        %2180 = vmatpush2.xpose.msra.mxu0 0.0
        %2181 = vmatprep.subr.mxu0 0.0
        %2182 = vmatpush2.xpose.msra.mxu0 0.0
        %2183 = vmatprep.subr.mxu0 0.0
        %2184 = vmatpush2.xpose.msra.mxu0 0.0
        %2185 = vmatprep.subr.mxu0 0.0
        %2186 = vmatpush2.xpose.msra.mxu0 0.0
        %2187 = vmatprep.subr.mxu0 0.0
        %2188 = vmatpush2.xpose.msra.mxu0 0.0
        %2189 = vmatprep.subr.mxu0 0.0
        %2190 = vmatpush2.xpose.msra.mxu0 0.0
        %2191 = vmatprep.subr.mxu0 0.0
        %2192 = vmatpush2.xpose.msra.mxu0 0.0
        %2193 = vmatprep.subr.mxu0 0.0
        %2194 = vmatpush2.xpose.msra.mxu0 0.0
        %2195 = vmatprep.subr.mxu0 0.0
        %2196 = vmatpush2.xpose.msra.mxu0 0.0
        %2197 = vmatprep.subr.mxu0 0.0
        %2198 = vmatpush2.xpose.msra.mxu0 0.0
        %2199 = vmatprep.subr.mxu0 0.0
        %2200 = vmatpush2.xpose.msra.mxu0 0.0
        %2201 = vmatprep.subr.mxu0 0.0
        %2202 = vmatpush2.xpose.msra.mxu0 0.0
        %2203 = vmatprep.subr.mxu0 0.0
        %2204 = vmatpush2.xpose.msra.mxu0 0.0
        %2205 = vmatprep.subr.mxu0 0.0
        %2206 = vmatpush2.xpose.msra.mxu0 0.0
        %2207 = vmatprep.subr.mxu0 0.0
        %2208 = vmatpush2.xpose.msra.mxu0 0.0
        %2209 = vmatprep.subr.mxu0 0.0
        %2210 = vmatpush2.xpose.msra.mxu0 0.0
        %2211 = vmatprep.mubr.f32.mxu0 0.0
        %v2212 = vand.u32 %v917, 4294901760
        %2213 = vmatmul.mubr.f32.gmra.mxu0 %v2212
        %v2214 = vpop.f32.mrf.mxu0
        %v2215 = vadd.f32 %v2141, %v2214
        %v2216 = vpop.f32.mrf.mxu0
        %2217 = vdwg.mxu0
        %2218 = vmatprep.subr.mxu0 0.0
        %2219 = vmatpush1.xpose.msra.mxu0 0.0
        %2220 = vmatprep.subr.mxu0 0.0
        %2221 = vmatpush1.xpose.msra.mxu0 0.0
        %2222 = vmatprep.subr.mxu0 0.0
        %2223 = vmatpush1.xpose.msra.mxu0 0.0
        %2224 = vmatprep.subr.mxu0 0.0
        %2225 = vmatpush1.xpose.msra.mxu0 0.0
        %2226 = vmatprep.subr.mxu0 0.0
        %2227 = vmatpush1.xpose.msra.mxu0 0.0
        %2228 = vmatprep.subr.mxu0 0.0
        %2229 = vmatpush1.xpose.msra.mxu0 0.0
        %2230 = vmatprep.subr.mxu0 0.0
        %2231 = vmatpush1.xpose.msra.mxu0 0.0
        %2232 = vmatprep.subr.mxu0 0.0
        %2233 = vmatpush1.xpose.msra.mxu0 0.0
        %2234 = vmatprep.subr.mxu0 0.0
        %2235 = vmatpush1.xpose.msra.mxu0 0.0
        %2236 = vmatprep.subr.mxu0 0.0
        %2237 = vmatpush1.xpose.msra.mxu0 0.0
        %2238 = vmatprep.subr.mxu0 0.0
        %2239 = vmatpush1.xpose.msra.mxu0 0.0
        %2240 = vmatprep.subr.mxu0 0.0
        %2241 = vmatpush1.xpose.msra.mxu0 0.0
        %2242 = vmatprep.subr.mxu0 0.0
        %2243 = vmatpush1.xpose.msra.mxu0 0.0
        %2244 = vmatprep.subr.mxu0 0.0
        %2245 = vmatpush1.xpose.msra.mxu0 0.0
        %2246 = vmatprep.subr.mxu0 0.0
        %2247 = vmatpush1.xpose.msra.mxu0 0.0
        %2248 = vmatprep.subr.mxu0 0.0
        %v2249 = vand.u32 %v917, 4294901760
        %2250 = vmatpush1.xpose.msra.mxu0 %v2249
        %2251 = vmatprep.subr.mxu0 0.0
        %2252 = vmatpush2.xpose.msra.mxu0 0.0
        %2253 = vmatprep.subr.mxu0 0.0
        %2254 = vmatpush2.xpose.msra.mxu0 0.0
        %2255 = vmatprep.subr.mxu0 0.0
        %2256 = vmatpush2.xpose.msra.mxu0 0.0
        %2257 = vmatprep.subr.mxu0 0.0
        %2258 = vmatpush2.xpose.msra.mxu0 0.0
        %2259 = vmatprep.subr.mxu0 0.0
        %2260 = vmatpush2.xpose.msra.mxu0 0.0
        %2261 = vmatprep.subr.mxu0 0.0
        %2262 = vmatpush2.xpose.msra.mxu0 0.0
        %2263 = vmatprep.subr.mxu0 0.0
        %2264 = vmatpush2.xpose.msra.mxu0 0.0
        %2265 = vmatprep.subr.mxu0 0.0
        %2266 = vmatpush2.xpose.msra.mxu0 0.0
        %2267 = vmatprep.subr.mxu0 0.0
        %2268 = vmatpush2.xpose.msra.mxu0 0.0
        %2269 = vmatprep.subr.mxu0 0.0
        %2270 = vmatpush2.xpose.msra.mxu0 0.0
        %2271 = vmatprep.subr.mxu0 0.0
        %2272 = vmatpush2.xpose.msra.mxu0 0.0
        %2273 = vmatprep.subr.mxu0 0.0
        %2274 = vmatpush2.xpose.msra.mxu0 0.0
        %2275 = vmatprep.subr.mxu0 0.0
        %2276 = vmatpush2.xpose.msra.mxu0 0.0
        %2277 = vmatprep.subr.mxu0 0.0
        %2278 = vmatpush2.xpose.msra.mxu0 0.0
        %2279 = vmatprep.subr.mxu0 0.0
        %2280 = vmatpush2.xpose.msra.mxu0 0.0
        %2281 = vmatprep.subr.mxu0 0.0
        %2282 = vmatpush2.xpose.msra.mxu0 0.0
        %2283 = vmatprep.mubr.f32.mxu0 0.0
        %v2284 = vand.u32 %v917, 4294901760
        %2285 = vmatmul.mubr.f32.gmra.mxu0 %v2284
        %v2286 = vpop.f32.mrf.mxu0
        %v2287 = vadd.f32 %v2215, %v2286
        %v2288 = vpop.f32.mrf.mxu0
        %2289 = vdwg.mxu0
        %v2290 = vadd.f32 %v1843, %v2287
        %vm2291 = vcmask 27648
        %2292 = vst.msk [vmem:[#allocation5] sm:$0xf] %vm2291, %v2290
        %v2293 = vmul.f32 %v894, %v894
        %v2294 = vsel %vm912, %v2293, 0.0
        %v2295 = vrot.slane %v2294, 4
        %v2296 = vadd.f32 %v2294, %v2295
        %v2297 = vrot.slane %v2296, 2
        %v2298 = vadd.f32 %v2296, %v2297
        %v2299 = vrot.slane %v2298, 1
        %v2300 = vadd.f32 %v2298, %v2299
        %v2302 = vsel %vm915, %v2300, 0
        %2304 = vmatprep.subr.mxu0 0.0
        %2305 = vmatpush1.msra.mxu0 0.0
        %2306 = vmatprep.subr.mxu0 0.0
        %2307 = vmatpush1.msra.mxu0 0.0
        %2308 = vmatprep.subr.mxu0 0.0
        %2309 = vmatpush1.msra.mxu0 0.0
        %2310 = vmatprep.subr.mxu0 0.0
        %2311 = vmatpush1.msra.mxu0 0.0
        %2312 = vmatprep.subr.mxu0 0.0
        %2313 = vmatpush1.msra.mxu0 0.0
        %2314 = vmatprep.subr.mxu0 0.0
        %2315 = vmatpush1.msra.mxu0 0.0
        %2316 = vmatprep.subr.mxu0 0.0
        %2317 = vmatpush1.msra.mxu0 0.0
        %2318 = vmatprep.subr.mxu0 0.0
        %2319 = vmatpush1.msra.mxu0 0.0
        %2320 = vmatprep.subr.mxu0 0.0
        %2321 = vmatpush1.msra.mxu0 0.0
        %2322 = vmatprep.subr.mxu0 0.0
        %2323 = vmatpush1.msra.mxu0 0.0
        %2324 = vmatprep.subr.mxu0 0.0
        %2325 = vmatpush1.msra.mxu0 0.0
        %2326 = vmatprep.subr.mxu0 0.0
        %2327 = vmatpush1.msra.mxu0 0.0
        %2328 = vmatprep.subr.mxu0 0.0
        %2329 = vmatpush1.msra.mxu0 0.0
        %2330 = vmatprep.subr.mxu0 0.0
        %2331 = vmatpush1.msra.mxu0 0.0
        %2332 = vmatprep.subr.mxu0 0.0
        %v2333 = vand.u32 %v348, 4294901760
        %2334 = vmatpush1.msra.mxu0 %v2333
        %2335 = vmatprep.subr.mxu0 0.0
        %v2336 = vand.u32 %v347, 4294901760
        %2337 = vmatpush1.msra.mxu0 %v2336
        %2338 = vmatprep.subr.mxu0 0.0
        %2339 = vmatpush2.msra.mxu0 0.0
        %2340 = vmatprep.subr.mxu0 0.0
        %2341 = vmatpush2.msra.mxu0 0.0
        %2342 = vmatprep.subr.mxu0 0.0
        %2343 = vmatpush2.msra.mxu0 0.0
        %2344 = vmatprep.subr.mxu0 0.0
        %2345 = vmatpush2.msra.mxu0 0.0
        %2346 = vmatprep.subr.mxu0 0.0
        %2347 = vmatpush2.msra.mxu0 0.0
        %2348 = vmatprep.subr.mxu0 0.0
        %2349 = vmatpush2.msra.mxu0 0.0
        %2350 = vmatprep.subr.mxu0 0.0
        %2351 = vmatpush2.msra.mxu0 0.0
        %2352 = vmatprep.subr.mxu0 0.0
        %2353 = vmatpush2.msra.mxu0 0.0
        %2354 = vmatprep.subr.mxu0 0.0
        %2355 = vmatpush2.msra.mxu0 0.0
        %2356 = vmatprep.subr.mxu0 0.0
        %2357 = vmatpush2.msra.mxu0 0.0
        %2358 = vmatprep.subr.mxu0 0.0
        %2359 = vmatpush2.msra.mxu0 0.0
        %2360 = vmatprep.subr.mxu0 0.0
        %2361 = vmatpush2.msra.mxu0 0.0
        %2362 = vmatprep.subr.mxu0 0.0
        %2363 = vmatpush2.msra.mxu0 0.0
        %2364 = vmatprep.subr.mxu0 0.0
        %2365 = vmatpush2.msra.mxu0 0.0
        %2366 = vmatprep.subr.mxu0 0.0
        %2367 = vmatpush2.msra.mxu0 0.0
        %2368 = vmatprep.subr.mxu0 0.0
        %2369 = vmatpush2.msra.mxu0 0.0
        %2370 = vmatprep.mubr.f32.mxu0 0.0
        %v2371 = vand.u32 %v2302, 4294901760
        %v2372 = vsub.f32 %v2302, %v2371
        %v2373 = vand.u32 %v2372, 4294901760
        %v2374 = vsub.f32 %v2372, %v2373
        %v2375 = vand.u32 %v2374, 4294901760
        %2376 = vmatmul.mubr.f32.gmra.mxu0 %v2375
        %v2377 = vpop.f32.mrf.mxu0
        %v2378 = vadd.f32 0.0, %v2377
        %v2379 = vpop.f32.mrf.mxu0
        %2380 = vdwg.mxu0
        %2381 = vmatprep.subr.mxu0 0.0
        %2382 = vmatpush1.msra.mxu0 0.0
        %2383 = vmatprep.subr.mxu0 0.0
        %2384 = vmatpush1.msra.mxu0 0.0
        %2385 = vmatprep.subr.mxu0 0.0
        %2386 = vmatpush1.msra.mxu0 0.0
        %2387 = vmatprep.subr.mxu0 0.0
        %2388 = vmatpush1.msra.mxu0 0.0
        %2389 = vmatprep.subr.mxu0 0.0
        %2390 = vmatpush1.msra.mxu0 0.0
        %2391 = vmatprep.subr.mxu0 0.0
        %2392 = vmatpush1.msra.mxu0 0.0
        %2393 = vmatprep.subr.mxu0 0.0
        %2394 = vmatpush1.msra.mxu0 0.0
        %2395 = vmatprep.subr.mxu0 0.0
        %2396 = vmatpush1.msra.mxu0 0.0
        %2397 = vmatprep.subr.mxu0 0.0
        %2398 = vmatpush1.msra.mxu0 0.0
        %2399 = vmatprep.subr.mxu0 0.0
        %2400 = vmatpush1.msra.mxu0 0.0
        %2401 = vmatprep.subr.mxu0 0.0
        %2402 = vmatpush1.msra.mxu0 0.0
        %2403 = vmatprep.subr.mxu0 0.0
        %2404 = vmatpush1.msra.mxu0 0.0
        %2405 = vmatprep.subr.mxu0 0.0
        %2406 = vmatpush1.msra.mxu0 0.0
        %2407 = vmatprep.subr.mxu0 0.0
        %2408 = vmatpush1.msra.mxu0 0.0
        %2409 = vmatprep.subr.mxu0 0.0
        %v2410 = vand.u32 %v348, 4294901760
        %v2411 = vsub.f32 %v348, %v2410
        %v2412 = vand.u32 %v2411, 4294901760
        %v2413 = vsub.f32 %v2411, %v2412
        %v2414 = vand.u32 %v2413, 4294901760
        %2415 = vmatpush1.msra.mxu0 %v2414
        %2416 = vmatprep.subr.mxu0 0.0
        %v2417 = vand.u32 %v347, 4294901760
        %v2418 = vsub.f32 %v347, %v2417
        %v2419 = vand.u32 %v2418, 4294901760
        %v2420 = vsub.f32 %v2418, %v2419
        %v2421 = vand.u32 %v2420, 4294901760
        %2422 = vmatpush1.msra.mxu0 %v2421
        %2423 = vmatprep.subr.mxu0 0.0
        %2424 = vmatpush2.msra.mxu0 0.0
        %2425 = vmatprep.subr.mxu0 0.0
        %2426 = vmatpush2.msra.mxu0 0.0
        %2427 = vmatprep.subr.mxu0 0.0
        %2428 = vmatpush2.msra.mxu0 0.0
        %2429 = vmatprep.subr.mxu0 0.0
        %2430 = vmatpush2.msra.mxu0 0.0
        %2431 = vmatprep.subr.mxu0 0.0
        %2432 = vmatpush2.msra.mxu0 0.0
        %2433 = vmatprep.subr.mxu0 0.0
        %2434 = vmatpush2.msra.mxu0 0.0
        %2435 = vmatprep.subr.mxu0 0.0
        %2436 = vmatpush2.msra.mxu0 0.0
        %2437 = vmatprep.subr.mxu0 0.0
        %2438 = vmatpush2.msra.mxu0 0.0
        %2439 = vmatprep.subr.mxu0 0.0
        %2440 = vmatpush2.msra.mxu0 0.0
        %2441 = vmatprep.subr.mxu0 0.0
        %2442 = vmatpush2.msra.mxu0 0.0
        %2443 = vmatprep.subr.mxu0 0.0
        %2444 = vmatpush2.msra.mxu0 0.0
        %2445 = vmatprep.subr.mxu0 0.0
        %2446 = vmatpush2.msra.mxu0 0.0
        %2447 = vmatprep.subr.mxu0 0.0
        %2448 = vmatpush2.msra.mxu0 0.0
        %2449 = vmatprep.subr.mxu0 0.0
        %2450 = vmatpush2.msra.mxu0 0.0
        %2451 = vmatprep.subr.mxu0 0.0
        %2452 = vmatpush2.msra.mxu0 0.0
        %2453 = vmatprep.subr.mxu0 0.0
        %2454 = vmatpush2.msra.mxu0 0.0
        %2455 = vmatprep.mubr.f32.mxu0 0.0
        %v2456 = vand.u32 %v2302, 4294901760
        %2457 = vmatmul.mubr.f32.gmra.mxu0 %v2456
        %v2458 = vpop.f32.mrf.mxu0
        %v2459 = vadd.f32 %v2378, %v2458
        %v2460 = vpop.f32.mrf.mxu0
        %2461 = vdwg.mxu0
        %2462 = vmatprep.subr.mxu0 0.0
        %2463 = vmatpush1.msra.mxu0 0.0
        %2464 = vmatprep.subr.mxu0 0.0
        %2465 = vmatpush1.msra.mxu0 0.0
        %2466 = vmatprep.subr.mxu0 0.0
        %2467 = vmatpush1.msra.mxu0 0.0
        %2468 = vmatprep.subr.mxu0 0.0
        %2469 = vmatpush1.msra.mxu0 0.0
        %2470 = vmatprep.subr.mxu0 0.0
        %2471 = vmatpush1.msra.mxu0 0.0
        %2472 = vmatprep.subr.mxu0 0.0
        %2473 = vmatpush1.msra.mxu0 0.0
        %2474 = vmatprep.subr.mxu0 0.0
        %2475 = vmatpush1.msra.mxu0 0.0
        %2476 = vmatprep.subr.mxu0 0.0
        %2477 = vmatpush1.msra.mxu0 0.0
        %2478 = vmatprep.subr.mxu0 0.0
        %2479 = vmatpush1.msra.mxu0 0.0
        %2480 = vmatprep.subr.mxu0 0.0
        %2481 = vmatpush1.msra.mxu0 0.0
        %2482 = vmatprep.subr.mxu0 0.0
        %2483 = vmatpush1.msra.mxu0 0.0
        %2484 = vmatprep.subr.mxu0 0.0
        %2485 = vmatpush1.msra.mxu0 0.0
        %2486 = vmatprep.subr.mxu0 0.0
        %2487 = vmatpush1.msra.mxu0 0.0
        %2488 = vmatprep.subr.mxu0 0.0
        %2489 = vmatpush1.msra.mxu0 0.0
        %2490 = vmatprep.subr.mxu0 0.0
        %v2491 = vand.u32 %v348, 4294901760
        %v2492 = vsub.f32 %v348, %v2491
        %2493 = vmatpush1.msra.mxu0 %v2492
        %2494 = vmatprep.subr.mxu0 0.0
        %v2495 = vand.u32 %v347, 4294901760
        %v2496 = vsub.f32 %v347, %v2495
        %2497 = vmatpush1.msra.mxu0 %v2496
        %2498 = vmatprep.subr.mxu0 0.0
        %2499 = vmatpush2.msra.mxu0 0.0
        %2500 = vmatprep.subr.mxu0 0.0
        %2501 = vmatpush2.msra.mxu0 0.0
        %2502 = vmatprep.subr.mxu0 0.0
        %2503 = vmatpush2.msra.mxu0 0.0
        %2504 = vmatprep.subr.mxu0 0.0
        %2505 = vmatpush2.msra.mxu0 0.0
        %2506 = vmatprep.subr.mxu0 0.0
        %2507 = vmatpush2.msra.mxu0 0.0
        %2508 = vmatprep.subr.mxu0 0.0
        %2509 = vmatpush2.msra.mxu0 0.0
        %2510 = vmatprep.subr.mxu0 0.0
        %2511 = vmatpush2.msra.mxu0 0.0
        %2512 = vmatprep.subr.mxu0 0.0
        %2513 = vmatpush2.msra.mxu0 0.0
        %2514 = vmatprep.subr.mxu0 0.0
        %2515 = vmatpush2.msra.mxu0 0.0
        %2516 = vmatprep.subr.mxu0 0.0
        %2517 = vmatpush2.msra.mxu0 0.0
        %2518 = vmatprep.subr.mxu0 0.0
        %2519 = vmatpush2.msra.mxu0 0.0
        %2520 = vmatprep.subr.mxu0 0.0
        %2521 = vmatpush2.msra.mxu0 0.0
        %2522 = vmatprep.subr.mxu0 0.0
        %2523 = vmatpush2.msra.mxu0 0.0
        %2524 = vmatprep.subr.mxu0 0.0
        %2525 = vmatpush2.msra.mxu0 0.0
        %2526 = vmatprep.subr.mxu0 0.0
        %2527 = vmatpush2.msra.mxu0 0.0
        %2528 = vmatprep.subr.mxu0 0.0
        %2529 = vmatpush2.msra.mxu0 0.0
        %2530 = vmatprep.mubr.f32.mxu0 0.0
        %v2531 = vand.u32 %v2302, 4294901760
        %v2532 = vsub.f32 %v2302, %v2531
        %2533 = vmatmul.mubr.f32.gmra.mxu0 %v2532
        %v2534 = vpop.f32.mrf.mxu0
        %v2535 = vadd.f32 %v2459, %v2534
        %v2536 = vpop.f32.mrf.mxu0
        %2537 = vdwg.mxu0
        %2538 = vmatprep.subr.mxu0 0.0
        %2539 = vmatpush1.msra.mxu0 0.0
        %2540 = vmatprep.subr.mxu0 0.0
        %2541 = vmatpush1.msra.mxu0 0.0
        %2542 = vmatprep.subr.mxu0 0.0
        %2543 = vmatpush1.msra.mxu0 0.0
        %2544 = vmatprep.subr.mxu0 0.0
        %2545 = vmatpush1.msra.mxu0 0.0
        %2546 = vmatprep.subr.mxu0 0.0
        %2547 = vmatpush1.msra.mxu0 0.0
        %2548 = vmatprep.subr.mxu0 0.0
        %2549 = vmatpush1.msra.mxu0 0.0
        %2550 = vmatprep.subr.mxu0 0.0
        %2551 = vmatpush1.msra.mxu0 0.0
        %2552 = vmatprep.subr.mxu0 0.0
        %2553 = vmatpush1.msra.mxu0 0.0
        %2554 = vmatprep.subr.mxu0 0.0
        %2555 = vmatpush1.msra.mxu0 0.0
        %2556 = vmatprep.subr.mxu0 0.0
        %2557 = vmatpush1.msra.mxu0 0.0
        %2558 = vmatprep.subr.mxu0 0.0
        %2559 = vmatpush1.msra.mxu0 0.0
        %2560 = vmatprep.subr.mxu0 0.0
        %2561 = vmatpush1.msra.mxu0 0.0
        %2562 = vmatprep.subr.mxu0 0.0
        %2563 = vmatpush1.msra.mxu0 0.0
        %2564 = vmatprep.subr.mxu0 0.0
        %2565 = vmatpush1.msra.mxu0 0.0
        %2566 = vmatprep.subr.mxu0 0.0
        %v2567 = vand.u32 %v348, 4294901760
        %2568 = vmatpush1.msra.mxu0 %v2567
        %2569 = vmatprep.subr.mxu0 0.0
        %v2570 = vand.u32 %v347, 4294901760
        %2571 = vmatpush1.msra.mxu0 %v2570
        %2572 = vmatprep.subr.mxu0 0.0
        %2573 = vmatpush2.msra.mxu0 0.0
        %2574 = vmatprep.subr.mxu0 0.0
        %2575 = vmatpush2.msra.mxu0 0.0
        %2576 = vmatprep.subr.mxu0 0.0
        %2577 = vmatpush2.msra.mxu0 0.0
        %2578 = vmatprep.subr.mxu0 0.0
        %2579 = vmatpush2.msra.mxu0 0.0
        %2580 = vmatprep.subr.mxu0 0.0
        %2581 = vmatpush2.msra.mxu0 0.0
        %2582 = vmatprep.subr.mxu0 0.0
        %2583 = vmatpush2.msra.mxu0 0.0
        %2584 = vmatprep.subr.mxu0 0.0
        %2585 = vmatpush2.msra.mxu0 0.0
        %2586 = vmatprep.subr.mxu0 0.0
        %2587 = vmatpush2.msra.mxu0 0.0
        %2588 = vmatprep.subr.mxu0 0.0
        %2589 = vmatpush2.msra.mxu0 0.0
        %2590 = vmatprep.subr.mxu0 0.0
        %2591 = vmatpush2.msra.mxu0 0.0
        %2592 = vmatprep.subr.mxu0 0.0
        %2593 = vmatpush2.msra.mxu0 0.0
        %2594 = vmatprep.subr.mxu0 0.0
        %2595 = vmatpush2.msra.mxu0 0.0
        %2596 = vmatprep.subr.mxu0 0.0
        %2597 = vmatpush2.msra.mxu0 0.0
        %2598 = vmatprep.subr.mxu0 0.0
        %2599 = vmatpush2.msra.mxu0 0.0
        %2600 = vmatprep.subr.mxu0 0.0
        %2601 = vmatpush2.msra.mxu0 0.0
        %2602 = vmatprep.subr.mxu0 0.0
        %2603 = vmatpush2.msra.mxu0 0.0
        %2604 = vmatprep.mubr.f32.mxu0 0.0
        %v2605 = vand.u32 %v2302, 4294901760
        %v2606 = vsub.f32 %v2302, %v2605
        %v2607 = vand.u32 %v2606, 4294901760
        %2608 = vmatmul.mubr.f32.gmra.mxu0 %v2607
        %v2609 = vpop.f32.mrf.mxu0
        %v2610 = vadd.f32 %v2535, %v2609
        %v2611 = vpop.f32.mrf.mxu0
        %2612 = vdwg.mxu0
        %2613 = vmatprep.subr.mxu0 0.0
        %2614 = vmatpush1.msra.mxu0 0.0
        %2615 = vmatprep.subr.mxu0 0.0
        %2616 = vmatpush1.msra.mxu0 0.0
        %2617 = vmatprep.subr.mxu0 0.0
        %2618 = vmatpush1.msra.mxu0 0.0
        %2619 = vmatprep.subr.mxu0 0.0
        %2620 = vmatpush1.msra.mxu0 0.0
        %2621 = vmatprep.subr.mxu0 0.0
        %2622 = vmatpush1.msra.mxu0 0.0
        %2623 = vmatprep.subr.mxu0 0.0
        %2624 = vmatpush1.msra.mxu0 0.0
        %2625 = vmatprep.subr.mxu0 0.0
        %2626 = vmatpush1.msra.mxu0 0.0
        %2627 = vmatprep.subr.mxu0 0.0
        %2628 = vmatpush1.msra.mxu0 0.0
        %2629 = vmatprep.subr.mxu0 0.0
        %2630 = vmatpush1.msra.mxu0 0.0
        %2631 = vmatprep.subr.mxu0 0.0
        %2632 = vmatpush1.msra.mxu0 0.0
        %2633 = vmatprep.subr.mxu0 0.0
        %2634 = vmatpush1.msra.mxu0 0.0
        %2635 = vmatprep.subr.mxu0 0.0
        %2636 = vmatpush1.msra.mxu0 0.0
        %2637 = vmatprep.subr.mxu0 0.0
        %2638 = vmatpush1.msra.mxu0 0.0
        %2639 = vmatprep.subr.mxu0 0.0
        %2640 = vmatpush1.msra.mxu0 0.0
        %2641 = vmatprep.subr.mxu0 0.0
        %v2642 = vand.u32 %v348, 4294901760
        %v2643 = vsub.f32 %v348, %v2642
        %v2644 = vand.u32 %v2643, 4294901760
        %2645 = vmatpush1.msra.mxu0 %v2644
        %2646 = vmatprep.subr.mxu0 0.0
        %v2647 = vand.u32 %v347, 4294901760
        %v2648 = vsub.f32 %v347, %v2647
        %v2649 = vand.u32 %v2648, 4294901760
        %2650 = vmatpush1.msra.mxu0 %v2649
        %2651 = vmatprep.subr.mxu0 0.0
        %2652 = vmatpush2.msra.mxu0 0.0
        %2653 = vmatprep.subr.mxu0 0.0
        %2654 = vmatpush2.msra.mxu0 0.0
        %2655 = vmatprep.subr.mxu0 0.0
        %2656 = vmatpush2.msra.mxu0 0.0
        %2657 = vmatprep.subr.mxu0 0.0
        %2658 = vmatpush2.msra.mxu0 0.0
        %2659 = vmatprep.subr.mxu0 0.0
        %2660 = vmatpush2.msra.mxu0 0.0
        %2661 = vmatprep.subr.mxu0 0.0
        %2662 = vmatpush2.msra.mxu0 0.0
        %2663 = vmatprep.subr.mxu0 0.0
        %2664 = vmatpush2.msra.mxu0 0.0
        %2665 = vmatprep.subr.mxu0 0.0
        %2666 = vmatpush2.msra.mxu0 0.0
        %2667 = vmatprep.subr.mxu0 0.0
        %2668 = vmatpush2.msra.mxu0 0.0
        %2669 = vmatprep.subr.mxu0 0.0
        %2670 = vmatpush2.msra.mxu0 0.0
        %2671 = vmatprep.subr.mxu0 0.0
        %2672 = vmatpush2.msra.mxu0 0.0
        %2673 = vmatprep.subr.mxu0 0.0
        %2674 = vmatpush2.msra.mxu0 0.0
        %2675 = vmatprep.subr.mxu0 0.0
        %2676 = vmatpush2.msra.mxu0 0.0
        %2677 = vmatprep.subr.mxu0 0.0
        %2678 = vmatpush2.msra.mxu0 0.0
        %2679 = vmatprep.subr.mxu0 0.0
        %2680 = vmatpush2.msra.mxu0 0.0
        %2681 = vmatprep.subr.mxu0 0.0
        %2682 = vmatpush2.msra.mxu0 0.0
        %2683 = vmatprep.mubr.f32.mxu0 0.0
        %v2684 = vand.u32 %v2302, 4294901760
        %2685 = vmatmul.mubr.f32.gmra.mxu0 %v2684
        %v2686 = vpop.f32.mrf.mxu0
        %v2687 = vadd.f32 %v2610, %v2686
        %v2688 = vpop.f32.mrf.mxu0
        %2689 = vdwg.mxu0
        %2690 = vmatprep.subr.mxu0 0.0
        %2691 = vmatpush1.msra.mxu0 0.0
        %2692 = vmatprep.subr.mxu0 0.0
        %2693 = vmatpush1.msra.mxu0 0.0
        %2694 = vmatprep.subr.mxu0 0.0
        %2695 = vmatpush1.msra.mxu0 0.0
        %2696 = vmatprep.subr.mxu0 0.0
        %2697 = vmatpush1.msra.mxu0 0.0
        %2698 = vmatprep.subr.mxu0 0.0
        %2699 = vmatpush1.msra.mxu0 0.0
        %2700 = vmatprep.subr.mxu0 0.0
        %2701 = vmatpush1.msra.mxu0 0.0
        %2702 = vmatprep.subr.mxu0 0.0
        %2703 = vmatpush1.msra.mxu0 0.0
        %2704 = vmatprep.subr.mxu0 0.0
        %2705 = vmatpush1.msra.mxu0 0.0
        %2706 = vmatprep.subr.mxu0 0.0
        %2707 = vmatpush1.msra.mxu0 0.0
        %2708 = vmatprep.subr.mxu0 0.0
        %2709 = vmatpush1.msra.mxu0 0.0
        %2710 = vmatprep.subr.mxu0 0.0
        %2711 = vmatpush1.msra.mxu0 0.0
        %2712 = vmatprep.subr.mxu0 0.0
        %2713 = vmatpush1.msra.mxu0 0.0
        %2714 = vmatprep.subr.mxu0 0.0
        %2715 = vmatpush1.msra.mxu0 0.0
        %2716 = vmatprep.subr.mxu0 0.0
        %2717 = vmatpush1.msra.mxu0 0.0
        %2718 = vmatprep.subr.mxu0 0.0
        %v2719 = vand.u32 %v348, 4294901760
        %2720 = vmatpush1.msra.mxu0 %v2719
        %2721 = vmatprep.subr.mxu0 0.0
        %v2722 = vand.u32 %v347, 4294901760
        %2723 = vmatpush1.msra.mxu0 %v2722
        %2724 = vmatprep.subr.mxu0 0.0
        %2725 = vmatpush2.msra.mxu0 0.0
        %2726 = vmatprep.subr.mxu0 0.0
        %2727 = vmatpush2.msra.mxu0 0.0
        %2728 = vmatprep.subr.mxu0 0.0
        %2729 = vmatpush2.msra.mxu0 0.0
        %2730 = vmatprep.subr.mxu0 0.0
        %2731 = vmatpush2.msra.mxu0 0.0
        %2732 = vmatprep.subr.mxu0 0.0
        %2733 = vmatpush2.msra.mxu0 0.0
        %2734 = vmatprep.subr.mxu0 0.0
        %2735 = vmatpush2.msra.mxu0 0.0
        %2736 = vmatprep.subr.mxu0 0.0
        %2737 = vmatpush2.msra.mxu0 0.0
        %2738 = vmatprep.subr.mxu0 0.0
        %2739 = vmatpush2.msra.mxu0 0.0
        %2740 = vmatprep.subr.mxu0 0.0
        %2741 = vmatpush2.msra.mxu0 0.0
        %2742 = vmatprep.subr.mxu0 0.0
        %2743 = vmatpush2.msra.mxu0 0.0
        %2744 = vmatprep.subr.mxu0 0.0
        %2745 = vmatpush2.msra.mxu0 0.0
        %2746 = vmatprep.subr.mxu0 0.0
        %2747 = vmatpush2.msra.mxu0 0.0
        %2748 = vmatprep.subr.mxu0 0.0
        %2749 = vmatpush2.msra.mxu0 0.0
        %2750 = vmatprep.subr.mxu0 0.0
        %2751 = vmatpush2.msra.mxu0 0.0
        %2752 = vmatprep.subr.mxu0 0.0
        %2753 = vmatpush2.msra.mxu0 0.0
        %2754 = vmatprep.subr.mxu0 0.0
        %2755 = vmatpush2.msra.mxu0 0.0
        %2756 = vmatprep.mubr.f32.mxu0 0.0
        %v2757 = vand.u32 %v2302, 4294901760
        %2758 = vmatmul.mubr.f32.gmra.mxu0 %v2757
        %v2759 = vpop.f32.mrf.mxu0
        %v2760 = vadd.f32 %v2687, %v2759
        %v2761 = vpop.f32.mrf.mxu0
        %2762 = vdwg.mxu0
        %v2763 = vld [vmem:[#allocation6] sm:$0x1]
        %vm2764 = vcmask 122880
        %v2765 = vsel %vm2764, %v2760, 0.0
        %2766 = vadd.xlane.f32.xlu0 %v2765
        %v2767 = vpop.xlane.xlu0 %2766
        %v2768 = vadd.f32 %v2763, %v2767
        %vm2769 = vcmask 0
        %2770 = vst.msk [vmem:[#allocation6] sm:$0x1] %vm2769, %v2768
        // Predicated region
        $region41: #{embedded_pool_forward.1} parent=35 // pred_check
          %p2771 = pneg %p333
        $region42: #{embedded_pool_forward.1} parent=35 // pred_check_branch
          %2773 = sbr.rel (%p2771) target = $region44
        $region43: #{embedded_pool_forward.1} parent=35 // pred_region
          %v2774 = vld [vmem:[#allocation3] sm:$0xf]
          %v2775 = vld [vmem:[#allocation2] sm:$0xf]
          %v2777 = vsel %vm915, %v2774, 0
          %v2780 = vsel %vm915, %v2775, 0
          %2782 = vmatprep.subr.mxu0 0.0
          %2783 = vmatpush1.xpose.msra.mxu0 0.0
          %2784 = vmatprep.subr.mxu0 0.0
          %2785 = vmatpush1.xpose.msra.mxu0 0.0
          %2786 = vmatprep.subr.mxu0 0.0
          %2787 = vmatpush1.xpose.msra.mxu0 0.0
          %2788 = vmatprep.subr.mxu0 0.0
          %2789 = vmatpush1.xpose.msra.mxu0 0.0
          %2790 = vmatprep.subr.mxu0 0.0
          %2791 = vmatpush1.xpose.msra.mxu0 0.0
          %2792 = vmatprep.subr.mxu0 0.0
          %2793 = vmatpush1.xpose.msra.mxu0 0.0
          %2794 = vmatprep.subr.mxu0 0.0
          %2795 = vmatpush1.xpose.msra.mxu0 0.0
          %2796 = vmatprep.subr.mxu0 0.0
          %2797 = vmatpush1.xpose.msra.mxu0 0.0
          %2798 = vmatprep.subr.mxu0 0.0
          %2799 = vmatpush1.xpose.msra.mxu0 0.0
          %2800 = vmatprep.subr.mxu0 0.0
          %2801 = vmatpush1.xpose.msra.mxu0 0.0
          %2802 = vmatprep.subr.mxu0 0.0
          %2803 = vmatpush1.xpose.msra.mxu0 0.0
          %2804 = vmatprep.subr.mxu0 0.0
          %2805 = vmatpush1.xpose.msra.mxu0 0.0
          %2806 = vmatprep.subr.mxu0 0.0
          %2807 = vmatpush1.xpose.msra.mxu0 0.0
          %2808 = vmatprep.subr.mxu0 0.0
          %2809 = vmatpush1.xpose.msra.mxu0 0.0
          %2810 = vmatprep.subr.mxu0 0.0
          %2811 = vmatpush1.xpose.msra.mxu0 0.0
          %2812 = vmatprep.subr.mxu0 0.0
          %v2813 = vand.u32 %v2780, 4294901760
          %2814 = vmatpush1.xpose.msra.mxu0 %v2813
          %2815 = vmatprep.subr.mxu0 0.0
          %2816 = vmatpush2.xpose.msra.mxu0 0.0
          %2817 = vmatprep.subr.mxu0 0.0
          %2818 = vmatpush2.xpose.msra.mxu0 0.0
          %2819 = vmatprep.subr.mxu0 0.0
          %2820 = vmatpush2.xpose.msra.mxu0 0.0
          %2821 = vmatprep.subr.mxu0 0.0
          %2822 = vmatpush2.xpose.msra.mxu0 0.0
          %2823 = vmatprep.subr.mxu0 0.0
          %2824 = vmatpush2.xpose.msra.mxu0 0.0
          %2825 = vmatprep.subr.mxu0 0.0
          %2826 = vmatpush2.xpose.msra.mxu0 0.0
          %2827 = vmatprep.subr.mxu0 0.0
          %2828 = vmatpush2.xpose.msra.mxu0 0.0
          %2829 = vmatprep.subr.mxu0 0.0
          %2830 = vmatpush2.xpose.msra.mxu0 0.0
          %2831 = vmatprep.subr.mxu0 0.0
          %2832 = vmatpush2.xpose.msra.mxu0 0.0
          %2833 = vmatprep.subr.mxu0 0.0
          %2834 = vmatpush2.xpose.msra.mxu0 0.0
          %2835 = vmatprep.subr.mxu0 0.0
          %2836 = vmatpush2.xpose.msra.mxu0 0.0
          %2837 = vmatprep.subr.mxu0 0.0
          %2838 = vmatpush2.xpose.msra.mxu0 0.0
          %2839 = vmatprep.subr.mxu0 0.0
          %2840 = vmatpush2.xpose.msra.mxu0 0.0
          %2841 = vmatprep.subr.mxu0 0.0
          %2842 = vmatpush2.xpose.msra.mxu0 0.0
          %2843 = vmatprep.subr.mxu0 0.0
          %2844 = vmatpush2.xpose.msra.mxu0 0.0
          %2845 = vmatprep.subr.mxu0 0.0
          %2846 = vmatpush2.xpose.msra.mxu0 0.0
          %2847 = vmatprep.mubr.f32.mxu0 0.0
          %v2848 = vand.u32 %v2777, 4294901760
          %v2849 = vsub.f32 %v2777, %v2848
          %v2850 = vand.u32 %v2849, 4294901760
          %v2851 = vsub.f32 %v2849, %v2850
          %v2852 = vand.u32 %v2851, 4294901760
          %2853 = vmatmul.mubr.f32.gmra.mxu0 %v2852
          %v2854 = vpop.f32.mrf.mxu0
          %v2855 = vadd.f32 0.0, %v2854
          %v2856 = vpop.f32.mrf.mxu0
          %2857 = vdwg.mxu0
          %2858 = vmatprep.subr.mxu0 0.0
          %2859 = vmatpush1.xpose.msra.mxu0 0.0
          %2860 = vmatprep.subr.mxu0 0.0
          %2861 = vmatpush1.xpose.msra.mxu0 0.0
          %2862 = vmatprep.subr.mxu0 0.0
          %2863 = vmatpush1.xpose.msra.mxu0 0.0
          %2864 = vmatprep.subr.mxu0 0.0
          %2865 = vmatpush1.xpose.msra.mxu0 0.0
          %2866 = vmatprep.subr.mxu0 0.0
          %2867 = vmatpush1.xpose.msra.mxu0 0.0
          %2868 = vmatprep.subr.mxu0 0.0
          %2869 = vmatpush1.xpose.msra.mxu0 0.0
          %2870 = vmatprep.subr.mxu0 0.0
          %2871 = vmatpush1.xpose.msra.mxu0 0.0
          %2872 = vmatprep.subr.mxu0 0.0
          %2873 = vmatpush1.xpose.msra.mxu0 0.0
          %2874 = vmatprep.subr.mxu0 0.0
          %2875 = vmatpush1.xpose.msra.mxu0 0.0
          %2876 = vmatprep.subr.mxu0 0.0
          %2877 = vmatpush1.xpose.msra.mxu0 0.0
          %2878 = vmatprep.subr.mxu0 0.0
          %2879 = vmatpush1.xpose.msra.mxu0 0.0
          %2880 = vmatprep.subr.mxu0 0.0
          %2881 = vmatpush1.xpose.msra.mxu0 0.0
          %2882 = vmatprep.subr.mxu0 0.0
          %2883 = vmatpush1.xpose.msra.mxu0 0.0
          %2884 = vmatprep.subr.mxu0 0.0
          %2885 = vmatpush1.xpose.msra.mxu0 0.0
          %2886 = vmatprep.subr.mxu0 0.0
          %2887 = vmatpush1.xpose.msra.mxu0 0.0
          %2888 = vmatprep.subr.mxu0 0.0
          %v2889 = vand.u32 %v2780, 4294901760
          %v2890 = vsub.f32 %v2780, %v2889
          %v2891 = vand.u32 %v2890, 4294901760
          %v2892 = vsub.f32 %v2890, %v2891
          %v2893 = vand.u32 %v2892, 4294901760
          %2894 = vmatpush1.xpose.msra.mxu0 %v2893
          %2895 = vmatprep.subr.mxu0 0.0
          %2896 = vmatpush2.xpose.msra.mxu0 0.0
          %2897 = vmatprep.subr.mxu0 0.0
          %2898 = vmatpush2.xpose.msra.mxu0 0.0
          %2899 = vmatprep.subr.mxu0 0.0
          %2900 = vmatpush2.xpose.msra.mxu0 0.0
          %2901 = vmatprep.subr.mxu0 0.0
          %2902 = vmatpush2.xpose.msra.mxu0 0.0
          %2903 = vmatprep.subr.mxu0 0.0
          %2904 = vmatpush2.xpose.msra.mxu0 0.0
          %2905 = vmatprep.subr.mxu0 0.0
          %2906 = vmatpush2.xpose.msra.mxu0 0.0
          %2907 = vmatprep.subr.mxu0 0.0
          %2908 = vmatpush2.xpose.msra.mxu0 0.0
          %2909 = vmatprep.subr.mxu0 0.0
          %2910 = vmatpush2.xpose.msra.mxu0 0.0
          %2911 = vmatprep.subr.mxu0 0.0
          %2912 = vmatpush2.xpose.msra.mxu0 0.0
          %2913 = vmatprep.subr.mxu0 0.0
          %2914 = vmatpush2.xpose.msra.mxu0 0.0
          %2915 = vmatprep.subr.mxu0 0.0
          %2916 = vmatpush2.xpose.msra.mxu0 0.0
          %2917 = vmatprep.subr.mxu0 0.0
          %2918 = vmatpush2.xpose.msra.mxu0 0.0
          %2919 = vmatprep.subr.mxu0 0.0
          %2920 = vmatpush2.xpose.msra.mxu0 0.0
          %2921 = vmatprep.subr.mxu0 0.0
          %2922 = vmatpush2.xpose.msra.mxu0 0.0
          %2923 = vmatprep.subr.mxu0 0.0
          %2924 = vmatpush2.xpose.msra.mxu0 0.0
          %2925 = vmatprep.subr.mxu0 0.0
          %2926 = vmatpush2.xpose.msra.mxu0 0.0
          %2927 = vmatprep.mubr.f32.mxu0 0.0
          %v2928 = vand.u32 %v2777, 4294901760
          %2929 = vmatmul.mubr.f32.gmra.mxu0 %v2928
          %v2930 = vpop.f32.mrf.mxu0
          %v2931 = vadd.f32 %v2855, %v2930
          %v2932 = vpop.f32.mrf.mxu0
          %2933 = vdwg.mxu0
          %2934 = vmatprep.subr.mxu0 0.0
          %2935 = vmatpush1.xpose.msra.mxu0 0.0
          %2936 = vmatprep.subr.mxu0 0.0
          %2937 = vmatpush1.xpose.msra.mxu0 0.0
          %2938 = vmatprep.subr.mxu0 0.0
          %2939 = vmatpush1.xpose.msra.mxu0 0.0
          %2940 = vmatprep.subr.mxu0 0.0
          %2941 = vmatpush1.xpose.msra.mxu0 0.0
          %2942 = vmatprep.subr.mxu0 0.0
          %2943 = vmatpush1.xpose.msra.mxu0 0.0
          %2944 = vmatprep.subr.mxu0 0.0
          %2945 = vmatpush1.xpose.msra.mxu0 0.0
          %2946 = vmatprep.subr.mxu0 0.0
          %2947 = vmatpush1.xpose.msra.mxu0 0.0
          %2948 = vmatprep.subr.mxu0 0.0
          %2949 = vmatpush1.xpose.msra.mxu0 0.0
          %2950 = vmatprep.subr.mxu0 0.0
          %2951 = vmatpush1.xpose.msra.mxu0 0.0
          %2952 = vmatprep.subr.mxu0 0.0
          %2953 = vmatpush1.xpose.msra.mxu0 0.0
          %2954 = vmatprep.subr.mxu0 0.0
          %2955 = vmatpush1.xpose.msra.mxu0 0.0
          %2956 = vmatprep.subr.mxu0 0.0
          %2957 = vmatpush1.xpose.msra.mxu0 0.0
          %2958 = vmatprep.subr.mxu0 0.0
          %2959 = vmatpush1.xpose.msra.mxu0 0.0
          %2960 = vmatprep.subr.mxu0 0.0
          %2961 = vmatpush1.xpose.msra.mxu0 0.0
          %2962 = vmatprep.subr.mxu0 0.0
          %2963 = vmatpush1.xpose.msra.mxu0 0.0
          %2964 = vmatprep.subr.mxu0 0.0
          %v2965 = vand.u32 %v2780, 4294901760
          %v2966 = vsub.f32 %v2780, %v2965
          %2967 = vmatpush1.xpose.msra.mxu0 %v2966
          %2968 = vmatprep.subr.mxu0 0.0
          %2969 = vmatpush2.xpose.msra.mxu0 0.0
          %2970 = vmatprep.subr.mxu0 0.0
          %2971 = vmatpush2.xpose.msra.mxu0 0.0
          %2972 = vmatprep.subr.mxu0 0.0
          %2973 = vmatpush2.xpose.msra.mxu0 0.0
          %2974 = vmatprep.subr.mxu0 0.0
          %2975 = vmatpush2.xpose.msra.mxu0 0.0
          %2976 = vmatprep.subr.mxu0 0.0
          %2977 = vmatpush2.xpose.msra.mxu0 0.0
          %2978 = vmatprep.subr.mxu0 0.0
          %2979 = vmatpush2.xpose.msra.mxu0 0.0
          %2980 = vmatprep.subr.mxu0 0.0
          %2981 = vmatpush2.xpose.msra.mxu0 0.0
          %2982 = vmatprep.subr.mxu0 0.0
          %2983 = vmatpush2.xpose.msra.mxu0 0.0
          %2984 = vmatprep.subr.mxu0 0.0
          %2985 = vmatpush2.xpose.msra.mxu0 0.0
          %2986 = vmatprep.subr.mxu0 0.0
          %2987 = vmatpush2.xpose.msra.mxu0 0.0
          %2988 = vmatprep.subr.mxu0 0.0
          %2989 = vmatpush2.xpose.msra.mxu0 0.0
          %2990 = vmatprep.subr.mxu0 0.0
          %2991 = vmatpush2.xpose.msra.mxu0 0.0
          %2992 = vmatprep.subr.mxu0 0.0
          %2993 = vmatpush2.xpose.msra.mxu0 0.0
          %2994 = vmatprep.subr.mxu0 0.0
          %2995 = vmatpush2.xpose.msra.mxu0 0.0
          %2996 = vmatprep.subr.mxu0 0.0
          %2997 = vmatpush2.xpose.msra.mxu0 0.0
          %2998 = vmatprep.subr.mxu0 0.0
          %2999 = vmatpush2.xpose.msra.mxu0 0.0
          %3000 = vmatprep.mubr.f32.mxu0 0.0
          %v3001 = vand.u32 %v2777, 4294901760
          %v3002 = vsub.f32 %v2777, %v3001
          %3003 = vmatmul.mubr.f32.gmra.mxu0 %v3002
          %v3004 = vpop.f32.mrf.mxu0
          %v3005 = vadd.f32 %v2931, %v3004
          %v3006 = vpop.f32.mrf.mxu0
          %3007 = vdwg.mxu0
          %3008 = vmatprep.subr.mxu0 0.0
          %3009 = vmatpush1.xpose.msra.mxu0 0.0
          %3010 = vmatprep.subr.mxu0 0.0
          %3011 = vmatpush1.xpose.msra.mxu0 0.0
          %3012 = vmatprep.subr.mxu0 0.0
          %3013 = vmatpush1.xpose.msra.mxu0 0.0
          %3014 = vmatprep.subr.mxu0 0.0
          %3015 = vmatpush1.xpose.msra.mxu0 0.0
          %3016 = vmatprep.subr.mxu0 0.0
          %3017 = vmatpush1.xpose.msra.mxu0 0.0
          %3018 = vmatprep.subr.mxu0 0.0
          %3019 = vmatpush1.xpose.msra.mxu0 0.0
          %3020 = vmatprep.subr.mxu0 0.0
          %3021 = vmatpush1.xpose.msra.mxu0 0.0
          %3022 = vmatprep.subr.mxu0 0.0
          %3023 = vmatpush1.xpose.msra.mxu0 0.0
          %3024 = vmatprep.subr.mxu0 0.0
          %3025 = vmatpush1.xpose.msra.mxu0 0.0
          %3026 = vmatprep.subr.mxu0 0.0
          %3027 = vmatpush1.xpose.msra.mxu0 0.0
          %3028 = vmatprep.subr.mxu0 0.0
          %3029 = vmatpush1.xpose.msra.mxu0 0.0
          %3030 = vmatprep.subr.mxu0 0.0
          %3031 = vmatpush1.xpose.msra.mxu0 0.0
          %3032 = vmatprep.subr.mxu0 0.0
          %3033 = vmatpush1.xpose.msra.mxu0 0.0
          %3034 = vmatprep.subr.mxu0 0.0
          %3035 = vmatpush1.xpose.msra.mxu0 0.0
          %3036 = vmatprep.subr.mxu0 0.0
          %3037 = vmatpush1.xpose.msra.mxu0 0.0
          %3038 = vmatprep.subr.mxu0 0.0
          %v3039 = vand.u32 %v2780, 4294901760
          %3040 = vmatpush1.xpose.msra.mxu0 %v3039
          %3041 = vmatprep.subr.mxu0 0.0
          %3042 = vmatpush2.xpose.msra.mxu0 0.0
          %3043 = vmatprep.subr.mxu0 0.0
          %3044 = vmatpush2.xpose.msra.mxu0 0.0
          %3045 = vmatprep.subr.mxu0 0.0
          %3046 = vmatpush2.xpose.msra.mxu0 0.0
          %3047 = vmatprep.subr.mxu0 0.0
          %3048 = vmatpush2.xpose.msra.mxu0 0.0
          %3049 = vmatprep.subr.mxu0 0.0
          %3050 = vmatpush2.xpose.msra.mxu0 0.0
          %3051 = vmatprep.subr.mxu0 0.0
          %3052 = vmatpush2.xpose.msra.mxu0 0.0
          %3053 = vmatprep.subr.mxu0 0.0
          %3054 = vmatpush2.xpose.msra.mxu0 0.0
          %3055 = vmatprep.subr.mxu0 0.0
          %3056 = vmatpush2.xpose.msra.mxu0 0.0
          %3057 = vmatprep.subr.mxu0 0.0
          %3058 = vmatpush2.xpose.msra.mxu0 0.0
          %3059 = vmatprep.subr.mxu0 0.0
          %3060 = vmatpush2.xpose.msra.mxu0 0.0
          %3061 = vmatprep.subr.mxu0 0.0
          %3062 = vmatpush2.xpose.msra.mxu0 0.0
          %3063 = vmatprep.subr.mxu0 0.0
          %3064 = vmatpush2.xpose.msra.mxu0 0.0
          %3065 = vmatprep.subr.mxu0 0.0
          %3066 = vmatpush2.xpose.msra.mxu0 0.0
          %3067 = vmatprep.subr.mxu0 0.0
          %3068 = vmatpush2.xpose.msra.mxu0 0.0
          %3069 = vmatprep.subr.mxu0 0.0
          %3070 = vmatpush2.xpose.msra.mxu0 0.0
          %3071 = vmatprep.subr.mxu0 0.0
          %3072 = vmatpush2.xpose.msra.mxu0 0.0
          %3073 = vmatprep.mubr.f32.mxu0 0.0
          %v3074 = vand.u32 %v2777, 4294901760
          %v3075 = vsub.f32 %v2777, %v3074
          %v3076 = vand.u32 %v3075, 4294901760
          %3077 = vmatmul.mubr.f32.gmra.mxu0 %v3076
          %v3078 = vpop.f32.mrf.mxu0
          %v3079 = vadd.f32 %v3005, %v3078
          %v3080 = vpop.f32.mrf.mxu0
          %3081 = vdwg.mxu0
          %3082 = vmatprep.subr.mxu0 0.0
          %3083 = vmatpush1.xpose.msra.mxu0 0.0
          %3084 = vmatprep.subr.mxu0 0.0
          %3085 = vmatpush1.xpose.msra.mxu0 0.0
          %3086 = vmatprep.subr.mxu0 0.0
          %3087 = vmatpush1.xpose.msra.mxu0 0.0
          %3088 = vmatprep.subr.mxu0 0.0
          %3089 = vmatpush1.xpose.msra.mxu0 0.0
          %3090 = vmatprep.subr.mxu0 0.0
          %3091 = vmatpush1.xpose.msra.mxu0 0.0
          %3092 = vmatprep.subr.mxu0 0.0
          %3093 = vmatpush1.xpose.msra.mxu0 0.0
          %3094 = vmatprep.subr.mxu0 0.0
          %3095 = vmatpush1.xpose.msra.mxu0 0.0
          %3096 = vmatprep.subr.mxu0 0.0
          %3097 = vmatpush1.xpose.msra.mxu0 0.0
          %3098 = vmatprep.subr.mxu0 0.0
          %3099 = vmatpush1.xpose.msra.mxu0 0.0
          %3100 = vmatprep.subr.mxu0 0.0
          %3101 = vmatpush1.xpose.msra.mxu0 0.0
          %3102 = vmatprep.subr.mxu0 0.0
          %3103 = vmatpush1.xpose.msra.mxu0 0.0
          %3104 = vmatprep.subr.mxu0 0.0
          %3105 = vmatpush1.xpose.msra.mxu0 0.0
          %3106 = vmatprep.subr.mxu0 0.0
          %3107 = vmatpush1.xpose.msra.mxu0 0.0
          %3108 = vmatprep.subr.mxu0 0.0
          %3109 = vmatpush1.xpose.msra.mxu0 0.0
          %3110 = vmatprep.subr.mxu0 0.0
          %3111 = vmatpush1.xpose.msra.mxu0 0.0
          %3112 = vmatprep.subr.mxu0 0.0
          %v3113 = vand.u32 %v2780, 4294901760
          %v3114 = vsub.f32 %v2780, %v3113
          %v3115 = vand.u32 %v3114, 4294901760
          %3116 = vmatpush1.xpose.msra.mxu0 %v3115
          %3117 = vmatprep.subr.mxu0 0.0
          %3118 = vmatpush2.xpose.msra.mxu0 0.0
          %3119 = vmatprep.subr.mxu0 0.0
          %3120 = vmatpush2.xpose.msra.mxu0 0.0
          %3121 = vmatprep.subr.mxu0 0.0
          %3122 = vmatpush2.xpose.msra.mxu0 0.0
          %3123 = vmatprep.subr.mxu0 0.0
          %3124 = vmatpush2.xpose.msra.mxu0 0.0
          %3125 = vmatprep.subr.mxu0 0.0
          %3126 = vmatpush2.xpose.msra.mxu0 0.0
          %3127 = vmatprep.subr.mxu0 0.0
          %3128 = vmatpush2.xpose.msra.mxu0 0.0
          %3129 = vmatprep.subr.mxu0 0.0
          %3130 = vmatpush2.xpose.msra.mxu0 0.0
          %3131 = vmatprep.subr.mxu0 0.0
          %3132 = vmatpush2.xpose.msra.mxu0 0.0
          %3133 = vmatprep.subr.mxu0 0.0
          %3134 = vmatpush2.xpose.msra.mxu0 0.0
          %3135 = vmatprep.subr.mxu0 0.0
          %3136 = vmatpush2.xpose.msra.mxu0 0.0
          %3137 = vmatprep.subr.mxu0 0.0
          %3138 = vmatpush2.xpose.msra.mxu0 0.0
          %3139 = vmatprep.subr.mxu0 0.0
          %3140 = vmatpush2.xpose.msra.mxu0 0.0
          %3141 = vmatprep.subr.mxu0 0.0
          %3142 = vmatpush2.xpose.msra.mxu0 0.0
          %3143 = vmatprep.subr.mxu0 0.0
          %3144 = vmatpush2.xpose.msra.mxu0 0.0
          %3145 = vmatprep.subr.mxu0 0.0
          %3146 = vmatpush2.xpose.msra.mxu0 0.0
          %3147 = vmatprep.subr.mxu0 0.0
          %3148 = vmatpush2.xpose.msra.mxu0 0.0
          %3149 = vmatprep.mubr.f32.mxu0 0.0
          %v3150 = vand.u32 %v2777, 4294901760
          %3151 = vmatmul.mubr.f32.gmra.mxu0 %v3150
          %v3152 = vpop.f32.mrf.mxu0
          %v3153 = vadd.f32 %v3079, %v3152
          %v3154 = vpop.f32.mrf.mxu0
          %3155 = vdwg.mxu0
          %3156 = vmatprep.subr.mxu0 0.0
          %3157 = vmatpush1.xpose.msra.mxu0 0.0
          %3158 = vmatprep.subr.mxu0 0.0
          %3159 = vmatpush1.xpose.msra.mxu0 0.0
          %3160 = vmatprep.subr.mxu0 0.0
          %3161 = vmatpush1.xpose.msra.mxu0 0.0
          %3162 = vmatprep.subr.mxu0 0.0
          %3163 = vmatpush1.xpose.msra.mxu0 0.0
          %3164 = vmatprep.subr.mxu0 0.0
          %3165 = vmatpush1.xpose.msra.mxu0 0.0
          %3166 = vmatprep.subr.mxu0 0.0
          %3167 = vmatpush1.xpose.msra.mxu0 0.0
          %3168 = vmatprep.subr.mxu0 0.0
          %3169 = vmatpush1.xpose.msra.mxu0 0.0
          %3170 = vmatprep.subr.mxu0 0.0
          %3171 = vmatpush1.xpose.msra.mxu0 0.0
          %3172 = vmatprep.subr.mxu0 0.0
          %3173 = vmatpush1.xpose.msra.mxu0 0.0
          %3174 = vmatprep.subr.mxu0 0.0
          %3175 = vmatpush1.xpose.msra.mxu0 0.0
          %3176 = vmatprep.subr.mxu0 0.0
          %3177 = vmatpush1.xpose.msra.mxu0 0.0
          %3178 = vmatprep.subr.mxu0 0.0
          %3179 = vmatpush1.xpose.msra.mxu0 0.0
          %3180 = vmatprep.subr.mxu0 0.0
          %3181 = vmatpush1.xpose.msra.mxu0 0.0
          %3182 = vmatprep.subr.mxu0 0.0
          %3183 = vmatpush1.xpose.msra.mxu0 0.0
          %3184 = vmatprep.subr.mxu0 0.0
          %3185 = vmatpush1.xpose.msra.mxu0 0.0
          %3186 = vmatprep.subr.mxu0 0.0
          %v3187 = vand.u32 %v2780, 4294901760
          %3188 = vmatpush1.xpose.msra.mxu0 %v3187
          %3189 = vmatprep.subr.mxu0 0.0
          %3190 = vmatpush2.xpose.msra.mxu0 0.0
          %3191 = vmatprep.subr.mxu0 0.0
          %3192 = vmatpush2.xpose.msra.mxu0 0.0
          %3193 = vmatprep.subr.mxu0 0.0
          %3194 = vmatpush2.xpose.msra.mxu0 0.0
          %3195 = vmatprep.subr.mxu0 0.0
          %3196 = vmatpush2.xpose.msra.mxu0 0.0
          %3197 = vmatprep.subr.mxu0 0.0
          %3198 = vmatpush2.xpose.msra.mxu0 0.0
          %3199 = vmatprep.subr.mxu0 0.0
          %3200 = vmatpush2.xpose.msra.mxu0 0.0
          %3201 = vmatprep.subr.mxu0 0.0
          %3202 = vmatpush2.xpose.msra.mxu0 0.0
          %3203 = vmatprep.subr.mxu0 0.0
          %3204 = vmatpush2.xpose.msra.mxu0 0.0
          %3205 = vmatprep.subr.mxu0 0.0
          %3206 = vmatpush2.xpose.msra.mxu0 0.0
          %3207 = vmatprep.subr.mxu0 0.0
          %3208 = vmatpush2.xpose.msra.mxu0 0.0
          %3209 = vmatprep.subr.mxu0 0.0
          %3210 = vmatpush2.xpose.msra.mxu0 0.0
          %3211 = vmatprep.subr.mxu0 0.0
          %3212 = vmatpush2.xpose.msra.mxu0 0.0
          %3213 = vmatprep.subr.mxu0 0.0
          %3214 = vmatpush2.xpose.msra.mxu0 0.0
          %3215 = vmatprep.subr.mxu0 0.0
          %3216 = vmatpush2.xpose.msra.mxu0 0.0
          %3217 = vmatprep.subr.mxu0 0.0
          %3218 = vmatpush2.xpose.msra.mxu0 0.0
          %3219 = vmatprep.subr.mxu0 0.0
          %3220 = vmatpush2.xpose.msra.mxu0 0.0
          %3221 = vmatprep.mubr.f32.mxu0 0.0
          %v3222 = vand.u32 %v2777, 4294901760
          %3223 = vmatmul.mubr.f32.gmra.mxu0 %v3222
          %v3224 = vpop.f32.mrf.mxu0
          %v3225 = vadd.f32 %v3153, %v3224
          %v3226 = vpop.f32.mrf.mxu0
          %3227 = vdwg.mxu0
          %v3228 = vlaneseq
          %v3229 = vshrl.u32 %v3228, 7
          %v3230 = vlaneseq
          %v3231 = vand.u32 %v3230, 127
          %vm3232 = vcmp.eq.s32.totalorder %v3229, %v3231
          %v3233 = vsel %vm3232, %v3225, 0.0
          %v3234 = vsel %vm2291, %v3233, 0.0
          %3235 = vadd.xlane.f32.xlu0 %v3234
          %v3236 = vpop.xlane.xlu0 %3235
          %v3237 = vrot.slane %v3236, 4
          %v3238 = vadd.f32 %v3236, %v3237
          %v3239 = vrot.slane %v3238, 2
          %v3240 = vadd.f32 %v3238, %v3239
          %v3241 = vrot.slane %v3240, 1
          %v3242 = vadd.f32 %v3240, %v3241
          %v3243 = vld [vmem:[#allocation6] sm:$0x1]
          %v3244 = vrcp.pop %v3243
          %v3245 = vmul.f32 %v3242, %v3244
          %v3246 = vsub.f32 0.0, %v3245
          %v3247 = vld [vmem:[#allocation5] sm:$0xf]
          %v3248 = vmul.f32 %v3247, %v3247
          %v3249 = vsel %vm2291, %v3248, 0.0
          %3250 = vadd.xlane.f32.xlu0 %v3249
          %v3251 = vpop.xlane.xlu0 %3250
          %v3252 = vrot.slane %v3251, 4
          %v3253 = vadd.f32 %v3251, %v3252
          %v3254 = vrot.slane %v3253, 2
          %v3255 = vadd.f32 %v3253, %v3254
          %v3256 = vrot.slane %v3255, 1
          %v3257 = vadd.f32 %v3255, %v3256
          %v3258 = vrsqrt.pop %v3257
          %v3259 = vmul.f32 %v3257, %v3258
          %vm3260 = vcmp.eq.f32.partialorder %v3257, inf
          %v3261 = vsel %vm3260, %v3257, %v3259
          %vm3262 = vcmp.eq.f32.partialorder %v3257, 0.0
          %v3263 = vand.u32 %v3257, 2147483648
          %v3264 = vsel %vm3262, %v3263, %v3261
          %v3265 = vsel %vm3232, 1.0, 0.0
          %v3266 = vrcp.pop %v3264
          %v3267 = vmul.f32 %v3247, %v3266
          %v3268 = vmul.f32 %v3265, 0.5
          %v3269 = vsub.f32 %v3267, %v3268
          %v3270 = vmul.f32 %v3269, %v3269
          %v3271 = vsel %vm2291, %v3270, 0.0
          %3272 = vadd.xlane.f32.xlu0 %v3271
          %v3273 = vpop.xlane.xlu0 %3272
          %v3274 = vrot.slane %v3273, 4
          %v3275 = vadd.f32 %v3273, %v3274
          %v3276 = vrot.slane %v3275, 2
          %v3277 = vadd.f32 %v3275, %v3276
          %v3278 = vrot.slane %v3277, 1
          %v3279 = vadd.f32 %v3277, %v3278
          %v3280 = vrsqrt.pop %v3279
          %v3281 = vmul.f32 %v3279, %v3280
          %vm3282 = vcmp.eq.f32.partialorder %v3279, inf
          %v3283 = vsel %vm3282, %v3279, %v3281
          %vm3284 = vcmp.eq.f32.partialorder %v3279, 0.0
          %v3285 = vand.u32 %v3279, 2147483648
          %v3286 = vsel %vm3284, %v3285, %v3283
          %vm3287 = vcmp.eq.s32.totalorder %v3231, 0
          %3289 = vset.pattern.permute.xlu0 0
          %3290 = vperm.xlu0 %3289, %v3246
          %v3291 = vpop.permute.xlu0 %3290
          %v3293 = vlaneseq
          %v3294 = vshrl.u32 %v3293, 7
          %v3295 = vsub.s32 0, %v3294
          %v3296 = vrot.slane %v3291, %v3295
          %v3297 = vsel %vm3287, %v3296, %v3286
          %vm3298 = vcmask 8192
          %3299 = vst.msk [vmem:[%s332] sm:$0x1] %vm3298, %v3297
          %v3300 = vsel %vm3232, 0.0, %v3225
          %v3301 = vsel %vm2291, %v3300, 0.0
          %3302 = vadd.xlane.f32.xlu0 %v3301
          %v3303 = vpop.xlane.xlu0 %3302
          %v3304 = vrsqrt.pop %v3303
          %v3305 = vmul.f32 %v3303, %v3304
          %vm3306 = vcmp.eq.f32.partialorder %v3303, inf
          %v3307 = vsel %vm3306, %v3303, %v3305
          %vm3308 = vcmp.eq.f32.partialorder %v3303, 0.0
          %v3309 = vand.u32 %v3303, 2147483648
          %v3310 = vsel %vm3308, %v3309, %v3307
          %v3311 = vadd.f32 %v3310, 1e-15
          %3312 = vxpose.xlu0.b32.start [1/16] %v3311, 128
          %3313 = vxpose.xlu0.b32.cont [2/16] 0.0, 128
          %3314 = vxpose.xlu0.b32.cont [3/16] 0.0, 128
          %3315 = vxpose.xlu0.b32.cont [4/16] 0.0, 128
          %3316 = vxpose.xlu0.b32.cont [5/16] 0.0, 128
          %3317 = vxpose.xlu0.b32.cont [6/16] 0.0, 128
          %3318 = vxpose.xlu0.b32.cont [7/16] 0.0, 128
          %3319 = vxpose.xlu0.b32.cont [8/16] 0.0, 128
          %3320 = vxpose.xlu0.b32.cont [9/16] 0.0, 128
          %3321 = vxpose.xlu0.b32.cont [10/16] 0.0, 128
          %3322 = vxpose.xlu0.b32.cont [11/16] 0.0, 128
          %3323 = vxpose.xlu0.b32.cont [12/16] 0.0, 128
          %3324 = vxpose.xlu0.b32.cont [13/16] 0.0, 128
          %3325 = vxpose.xlu0.b32.cont [14/16] 0.0, 128
          %3326 = vxpose.xlu0.b32.cont [15/16] 0.0, 128
          %3327 = vxpose.xlu0.b32.end [16/16] 0.0, 128
          %v3328 = vpop.trf.xlu0
          %v3329 = vpop.trf.xlu0
          %v3330 = vpop.trf.xlu0
          %v3331 = vpop.trf.xlu0
          %v3332 = vpop.trf.xlu0
          %v3333 = vpop.trf.xlu0
          %v3334 = vpop.trf.xlu0
          %v3335 = vpop.trf.xlu0
          %v3336 = vpop.trf.xlu0
          %v3337 = vpop.trf.xlu0
          %v3338 = vpop.trf.xlu0
          %v3339 = vpop.trf.xlu0
          %v3340 = vpop.trf.xlu0
          %v3341 = vpop.trf.xlu0
          %v3342 = vpop.trf.xlu0
          %v3343 = vpop.trf.xlu0
          %v3344 = vld [vmem:[#allocation4] sm:$0xf]
          %3345 = vst.msk [vmem:[%s297] sm:$0xf] %vm1379, %v3344
          %v3346 = vrcp.pop %v3311
          %v3347 = vmul.f32 %v3300, %v3346
          %v3348 = vlaneseq
          %v3349 = vshrl.u32 %v3348, 7
          %v3350 = vsub.s32 0, %v3349
          %v3351 = vrot.slane %v3328, %v3350
          %v3352 = vrcp.pop %v3351
          %v3353 = vmul.f32 %v3347, %v3352
          %3354 = vst.msk [vmem:[%s304] sm:$0xf] %vm2291, %v3353
        $region44: #{embedded_pool_forward.1} parent=35 // pred_fallthru
          _
        %s3355 = sand.u32 %s142, 1
        %s3356 = scalar_lea.sflag [#allocation8], %s3355
        %s3357 = sand.u32 %s142, 1
        %s3358 = smul.addr %s3357, 4
        %s3359 = scalar_lea.vmem [#allocation7], %s3358
        %s3360 = sand.u32 %s168, 1
        %s3361 = scalar_lea.sflag [#allocation10], %s3360
        %s3362 = sand.u32 %s168, 1
        %s3363 = smul.addr %s3362, 4
        %s3364 = scalar_lea.vmem [#allocation9], %s3363
        %p3365 = scmp.lt.s32.totalorder %s28, 1
        %s3366 = scalar_select %p3365, %s28, 1
        %s3367 = scalar_lea.vmem %s6, %s3366
        // Predicated region
        $region45: #{embedded_pool_forward.1} parent=35 // pred_check
          %p3368 = pneg %p152
        $region46: #{embedded_pool_forward.1} parent=35 // pred_check_branch
          %3370 = sbr.rel (%p3368) target = $region48
        $region47: #{embedded_pool_forward.1} parent=35 // pred_region
          %s3372 = ssub.s32 64, 64
          %3373 = vsyncadd %s3356, %s3372
          %s3374 = smul.addr %s28, 64
          %s3375 = scalar_lea.hbm %s4, %s3374
          %s3377 = sshll.u32 %s3359, 4
          %s3378 = int_to_ptr.vmem [resolvable:$true] %s3377
          %3380 = dma.vmem_to_hbm [thread:$0]  %s3378, 64, %s3375, %s3356
        $region48: #{embedded_pool_forward.1} parent=35 // pred_fallthru
          _
        // Predicated region
        $region49: #{embedded_pool_forward.1} parent=35 // pred_check
          %p3381 = pneg %p178
        $region50: #{embedded_pool_forward.1} parent=35 // pred_check_branch
          %3383 = sbr.rel (%p3381) target = $region52
        $region51: #{embedded_pool_forward.1} parent=35 // pred_region
          %s3385 = ssub.s32 64, 64
          %3386 = vsyncadd %s3361, %s3385
          %s3387 = smul.addr %s28, 64
          %s3388 = scalar_lea.hbm %s5, %s3387
          %s3390 = sshll.u32 %s3364, 4
          %s3391 = int_to_ptr.vmem [resolvable:$true] %s3390
          %3393 = dma.vmem_to_hbm [thread:$0]  %s3391, 64, %s3388, %s3361
        $region52: #{embedded_pool_forward.1} parent=35 // pred_fallthru
          _
        // Predicated region
        $region53: #{embedded_pool_forward.1} parent=35 // pred_check
          %p3394 = pneg %p204
        $region54: #{embedded_pool_forward.1} parent=35 // pred_check_branch
          %3396 = sbr.rel (%p3394) target = $region56
        $region55: #{embedded_pool_forward.1} parent=35 // pred_region
          _
        $region56: #{embedded_pool_forward.1} parent=35 // pred_fallthru
          _
      $region36: #{embedded_pool_forward.1} parent=5 // pred_fallthru
        _
      %p3397 = scmp.le.s32.totalorder 2, %s19
      // Predicated region
      $region57: #{embedded_pool_forward.1} parent=5 // pred_check
        %p3398 = pneg %p3397
      $region58: #{embedded_pool_forward.1} parent=5 // pred_check_branch
        %3400 = sbr.rel (%p3398) target = $region60
      $region59: #{embedded_pool_forward.1} parent=5 // pred_region
        %s3401 = ssub.s32 %s19, 2
        // Predicated region
        $region61: #{embedded_pool_forward.1} parent=59 // pred_check
          %p3402 = pneg %p158
        $region62: #{embedded_pool_forward.1} parent=59 // pred_check_branch
          %3404 = sbr.rel (%p3402) target = $region64
        $region63: #{embedded_pool_forward.1} parent=59 // pred_region
          %s3405 = sand.u32 %s143, 1
          %s3406 = scalar_lea.sflag [#allocation8], %s3405
          %s3407 = sand.u32 %s143, 1
          %s3408 = smul.addr %s3407, 4
          %s3409 = scalar_lea.vmem [#allocation7], %s3408
          %3410 = dma.done %s3406, 64
        $region64: #{embedded_pool_forward.1} parent=59 // pred_fallthru
          _
        // Predicated region
        $region65: #{embedded_pool_forward.1} parent=59 // pred_check
          %p3411 = pneg %p184
        $region66: #{embedded_pool_forward.1} parent=59 // pred_check_branch
          %3413 = sbr.rel (%p3411) target = $region68
        $region67: #{embedded_pool_forward.1} parent=59 // pred_region
          %s3414 = sand.u32 %s169, 1
          %s3415 = scalar_lea.sflag [#allocation10], %s3414
          %s3416 = sand.u32 %s169, 1
          %s3417 = smul.addr %s3416, 4
          %s3418 = scalar_lea.vmem [#allocation9], %s3417
          %3419 = dma.done %s3415, 64
        $region68: #{embedded_pool_forward.1} parent=59 // pred_fallthru
          _
        // Predicated region
        $region69: #{embedded_pool_forward.1} parent=59 // pred_check
          %p3420 = pneg %p210
        $region70: #{embedded_pool_forward.1} parent=59 // pred_check_branch
          %3422 = sbr.rel (%p3420) target = $region72
        $region71: #{embedded_pool_forward.1} parent=59 // pred_region
          %p3423 = scmp.lt.s32.totalorder %s30, 1
          %s3424 = scalar_select %p3423, %s30, 1
          %s3425 = scalar_lea.vmem %s6, %s3424
        $region72: #{embedded_pool_forward.1} parent=59 // pred_fallthru
          _
      $region60: #{embedded_pool_forward.1} parent=5 // pred_fallthru
        _
    $region6: #{embedded_pool_forward.1} parent=1 // loop_footer
      %s23 = sadd.s32 1, %s19
    $region7: #{embedded_pool_forward.1} parent=1 // loop_footer_branch
      %18 = sbr.rel target = $region3
    $region8: #{embedded_pool_forward.1} parent=1 // loop_exit
      _
    %3426 = vsyncpa [#allocation8], 1
    %s3427 = scalar_lea.sflag [#allocation8], 1
    %3428 = vsyncpa %s3427, 1
    %3429 = vsyncpa [#allocation10], 1
    %s3430 = scalar_lea.sflag [#allocation10], 1
    %3431 = vsyncpa %s3430, 1

</llo_original>
